<compile_context>
chip_gen: v6e
topology: v6e:2x2x1
jax: 0.10.0
libtpu: 0.0.40
codegen_flags: <defaults>
</compile_context>

<pallas_src>
import numpy as np
import jax
import jax.numpy as jnp
from jax import lax
from jax.experimental import pallas as pl
from jax.experimental.pallas import tpu as pltpu

_EPS = 1e-5


def _round_up(x, m):
    return (x + m - 1) // m * m


def _const_index_map(ndim):
    return lambda n, r: (0,) * ndim


# ----------------------------------------------------------------------------
# Pallas kernel: one ResidualBlock (+ fused max-pool / upsample+add) per call,
# computed one (batch, row-tile) grid step at a time.
# ----------------------------------------------------------------------------
def make_res_kernel(mode, has_skip):
    def kernel(*refs):
        nd = 2 if mode == "add" else 1
        data_refs = refs[:nd]
        o_ref = refs[-2]
        h1pad_ref = refs[-1]
        prefs = list(refs[nd:-2])
        if has_skip:
            wskip_ref, bskip_ref = prefs[:2]
            prefs = prefs[2:]
        (w1_ref, s1_ref, t1_ref, w2f_ref, s2_ref, t2_ref,
         w3_ref, s3_ref, t3_ref) = prefs

        _, T, W, Cout = o_ref.shape
        Cmid = h1pad_ref.shape[-1]
        r = pl.program_id(1)
        n_r = pl.num_programs(1)
        j0 = pl.multiple_of(r * T, T)          # first output row of this tile

        # ------- mode-specific block-input rows at OUTPUT resolution -------
        if mode == "plain":
            x_ref, = data_refs
            Cin = x_ref.shape[-1]

            def derive(j, n):
                return x_ref[0, pl.ds(j, n), :, :]

        elif mode == "pool":                   # fused MaxPool2d(2, 2)
            x_ref, = data_refs
            Cin = x_ref.shape[-1]

            def derive(j, n):
                f = x_ref[0, pl.ds(2 * j, 2 * n), :, :]        # (2n, 2W, C)
                f = f.reshape(n, 2, 2 * W, Cin)
                f = jnp.maximum(f[:, 0, :, :], f[:, 1, :, :])  # rows pooled
                f = f.reshape(n * W, 2, Cin)
                f = jnp.maximum(f[:, 0, :], f[:, 1, :])        # cols pooled
                return f.reshape(n, W, Cin)

        else:                                  # fused 2x nearest upsample + add
            xm_ref, sk_ref = data_refs
            Cin = xm_ref.shape[-1]
            Wh = W // 2

            def derive(j, n):
                m = 1 if n == 1 else n // 2
                lo = xm_ref[0, pl.ds(j // 2, m), :, :]         # (m, Wh, C)
                lo = jnp.broadcast_to(lo[:, :, None, :], (m, Wh, 2, Cin))
                lo = lo.reshape(m, W, Cin)                     # upsample W
                if n != 1:
                    lo = jnp.broadcast_to(lo[:, None, :, :], (m, 2, W, Cin))
                    lo = lo.reshape(n, W, Cin)                 # upsample H
                return lo + sk_ref[0, pl.ds(j, n), :, :]

        # ------- conv1 (1x1) + folded BN + ReLU -------
        def conv1(xt):                          # xt: (rows, W, Cin) f32
            rows = xt.shape[0]
            xf = xt.reshape(rows * W, Cin).astype(jnp.bfloat16)
            h = jnp.dot(xf, w1_ref[...], preferred_element_type=jnp.float32)
            h = jnp.maximum(h * s1_ref[...] + t1_ref[...], 0.0)
            return h.reshape(rows, W, Cmid)

        # zero-padded h1 scratch: untouched borders stay 0 => conv2 padding=1
        h1pad_ref[...] = jnp.zeros_like(h1pad_ref)

        xt = derive(j0, T)                                     # (T, W, Cin)
        h1pad_ref[1:T + 1, 1:W + 1, :] = conv1(xt)

        @pl.when(r > 0)                                        # top halo row
        def _():
            h1pad_ref[0:1, 1:W + 1, :] = conv1(derive(j0 - 1, 1))

        @pl.when(r < n_r - 1)                                  # bottom halo row
        def _():
            h1pad_ref[T + 1:T + 2, 1:W + 1, :] = conv1(derive(j0 + T, 1))

        # ------- conv2 (3x3) as ONE deep-K im2col matmul + BN + ReLU -------
        h1p = h1pad_ref[...]
        taps = [h1p[dy:dy + T, dx:dx + W, :]
                for dy in range(3) for dx in range(3)]
        slab = jnp.concatenate(taps, axis=-1)                  # (T, W, 9*Cmid)
        slab = slab.reshape(T * W, 9 * Cmid).astype(jnp.bfloat16)
        h2 = jnp.dot(slab, w2f_ref[...], preferred_element_type=jnp.float32)
        h2 = jnp.maximum(h2 * s2_ref[...] + t2_ref[...], 0.0)

        # ------- conv3 (1x1) + BN, residual, final ReLU -------
        h3 = jnp.dot(h2.astype(jnp.bfloat16), w3_ref[...],
                     preferred_element_type=jnp.float32)
        h3 = h3 * s3_ref[...] + t3_ref[...]

        xtf = xt.reshape(T * W, Cin)
        if has_skip:                           # 1x1 conv skip (cin != cout)
            residual = jnp.dot(xtf.astype(jnp.bfloat16), wskip_ref[...],
                               preferred_element_type=jnp.float32)
            residual = residual + bskip_ref[...]
        else:                                  # nn.Identity: no eye matmul
            residual = xtf

        out = jnp.maximum(h3 + residual, 0.0)
        o_ref[...] = out.reshape(1, T, W, Cout)

    return kernel


def apply_res_block(p, x, mode="plain", x_skip=None):
    """Run one ResidualBlock kernel.
       plain: x is the block input (N, H, W, Cin)
       pool : x is the FULL-resolution input (N, 2H, 2W, Cin); pool is fused
       add  : x is the LOW-resolution input (N, H/2, W/2, Cin), x_skip is
              (N, H, W, Cin); 2x nearest upsample + add is fused."""
    if mode == "plain":
        N, H, W, Cin = x.shape
        data = (x,)
        data_specs = [pl.BlockSpec((1, H, W, Cin), lambda n, r: (n, 0, 0, 0))]
    elif mode == "pool":
        N, Hf, Wf, Cin = x.shape
        H, W = Hf // 2, Wf // 2
        data = (x,)
        data_specs = [pl.BlockSpec((1, Hf, Wf, Cin), lambda n, r: (n, 0, 0, 0))]
    elif mode == "add":
        N, H, W, Cin = x_skip.shape
        assert x.shape == (N, H // 2, W // 2, Cin), (x.shape, x_skip.shape)
        data = (x, x_skip)
        data_specs = [
            pl.BlockSpec((1, H // 2, W // 2, Cin), lambda n, r: (n, 0, 0, 0)),
            pl.BlockSpec((1, H, W, Cin), lambda n, r: (n, 0, 0, 0)),
        ]
    else:
        raise ValueError(mode)

    T = min(8, H)                               # row tile (output resolution)
    assert H % T == 0 and T % 2 == 0 and W % 2 == 0
    n_r = H // T
    Cmid = p["w1"].shape[1]
    Cout = p["w3"].shape[1]
    Wp = _round_up(W + 2, 8)
    has_skip = p["has_skip"]

    names = (["wskip", "bskip"] if has_skip else []) + \
            ["w1", "s1", "t1", "w2f", "s2", "t2", "w3", "s3", "t3"]
    params = [p[k] for k in names]
    param_specs = [pl.BlockSpec(a.shape, _const_index_map(a.ndim)) for a in params]

    flops = 2 * N * H * W * Cmid * (Cin + 9 * Cmid + Cout)
    if has_skip:
        flops += 2 * N * H * W * Cin * Cout
    bytes_accessed = (sum(int(np.prod(a.shape)) * a.dtype.itemsize
                          for a in (*data, *params)) + N * H * W * Cout * 4)

    return pl.pallas_call(
        make_res_kernel(mode, has_skip),
        out_shape=jax.ShapeDtypeStruct((N, H, W, Cout), jnp.float32),
        grid_spec=pltpu.PrefetchScalarGridSpec(
            num_scalar_prefetch=0,
            grid=(N, n_r),
            in_specs=data_specs + param_specs,
            out_specs=pl.BlockSpec((1, T, W, Cout), lambda n, r: (n, r, 0, 0)),
            scratch_shapes=[pltpu.VMEM((T + 2, Wp, Cmid), jnp.float32)],
        ),
        compiler_params=pltpu.CompilerParams(
            dimension_semantics=("parallel", "parallel"),
            vmem_limit_bytes=32 * 1024 * 1024),
        cost_estimate=pl.CostEstimate(flops=flops, transcendentals=0,
                                      bytes_accessed=bytes_accessed),
    )(*data, *params)


# ----------------------------------------------------------------------------
# Parameter construction (deterministic, in-script).
# ----------------------------------------------------------------------------
def init_res_block(key, cin, cout):
    cmid = cout // 2
    ks = jax.random.split(key, 12)

    def conv_w(k, shape, fan_in):
        return jax.random.normal(k, shape, jnp.float32) / np.sqrt(fan_in)

    def bn_params(k, c):
        k1, k2, k3, k4 = jax.random.split(k, 4)
        return dict(gamma=jax.random.uniform(k1, (c,), jnp.float32, 0.5, 1.5),
                    beta=0.1 * jax.random.normal(k2, (c,), jnp.float32),
                    mean=0.1 * jax.random.normal(k3, (c,), jnp.float32),
                    var=jax.random.uniform(k4, (c,), jnp.float32, 0.5, 1.5))

    raw = dict(
        w1=conv_w(ks[0], (cin, cmid), cin),
        b1=0.1 * jax.random.normal(ks[1], (cmid,), jnp.float32),
        bn1=bn_params(ks[2], cmid),
        w2=conv_w(ks[3], (3, 3, cmid, cmid), 9 * cmid),        # HWIO
        b2=0.1 * jax.random.normal(ks[4], (cmid,), jnp.float32),
        bn2=bn_params(ks[5], cmid),
        w3=conv_w(ks[6], (cmid, cout), cmid),
        b3=0.1 * jax.random.normal(ks[7], (cout,), jnp.float32),
        bn3=bn_params(ks[8], cout),
    )
    if cin != cout:                                            # conv skip
        raw["wskip"] = conv_w(ks[9], (cin, cout), cin)
        raw["bskip"] = 0.1 * jax.random.normal(ks[10], (cout,), jnp.float32)
    return raw


def fold_res_block(raw):
    """Fold conv bias + inference BatchNorm into per-channel scale/shift and
    cast matmul weights to bf16 (accumulation stays f32 on the MXU)."""
    def fold(b, bn):
        scale = bn["gamma"] / jnp.sqrt(bn["var"] + _EPS)
        shift = bn["beta"] + scale * (b - bn["mean"])
        return scale.reshape(1, -1), shift.reshape(1, -1)

    s1, t1 = fold(raw["b1"], raw["bn1"])
    s2, t2 = fold(raw["b2"], raw["bn2"])
    s3, t3 = fold(raw["b3"], raw["bn3"])
    cmid = raw["w1"].shape[1]
    p = dict(
        w1=raw["w1"].astype(jnp.bfloat16), s1=s1, t1=t1,
        w2f=raw["w2"].reshape(9 * cmid, cmid).astype(jnp.bfloat16), s2=s2, t2=t2,
        w3=raw["w3"].astype(jnp.bfloat16), s3=s3, t3=t3,
        has_skip="wskip" in raw,
    )
    if p["has_skip"]:
        p["wskip"] = raw["wskip"].astype(jnp.bfloat16)
        p["bskip"] = raw["bskip"].reshape(1, -1)
    return p


# ----------------------------------------------------------------------------
# Hourglass forward (Pallas) and pure-JAX reference.
# ----------------------------------------------------------------------------
def hourglass_pallas(folds, x):                                # x: NHWC
    x1 = apply_res_block(folds["res1"], x, mode="plain")
    x2 = apply_res_block(folds["res2"], x1, mode="pool")       # pool fused
    xm = apply_res_block(folds["resMid"], x2, mode="pool")     # pool fused
    x1b = apply_res_block(folds["resMid1"], x1, mode="plain")
    x2b = apply_res_block(folds["resMid2"], x2, mode="plain")
    y = apply_res_block(folds["res3"], xm, mode="add", x_skip=x2b)   # upsample fused
    y = apply_res_block(folds["res4"], y, mode="add", x_skip=x1b)    # upsample fused
    return y


def _upsample2(a):                                             # nearest, 2x
    return jnp.repeat(jnp.repeat(a, 2, axis=1), 2, axis=2)


def res_block_ref(raw, x):
    """Pure-JAX reference; matmul/conv operands rounded to bf16 exactly like
    the kernel (f32 accumulation), so the comparison is tight."""
    bf = jnp.bfloat16

    def bn(y, p):
        return p["gamma"] * (y - p["mean"]) / jnp.sqrt(p["var"] + _EPS) + p["beta"]

    if "wskip" in raw:
        residual = jnp.einsum("nhwc,cd->nhwd", x.astype(bf), raw["wskip"].astype(bf),
                              preferred_element_type=jnp.float32) + raw["bskip"]
    else:
        residual = x
    h = jnp.einsum("nhwc,cd->nhwd", x.astype(bf), raw["w1"].astype(bf),
                   preferred_element_type=jnp.float32) + raw["b1"]
    h = jax.nn.relu(bn(h, raw["bn1"]))
    h = lax.conv_general_dilated(h.astype(bf), raw["w2"].astype(bf), (1, 1),
                                 ((1, 1), (1, 1)),
                                 dimension_numbers=("NHWC", "HWIO", "NHWC"),
                                 preferred_element_type=jnp.float32)
    h = jax.nn.relu(bn(h + raw["b2"], raw["bn2"]))
    h = jnp.einsum("nhwc,cd->nhwd", h.astype(bf), raw["w3"].astype(bf),
                   preferred_element_type=jnp.float32) + raw["b3"]
    h = bn(h, raw["bn3"])
    return jax.nn.relu(h + residual)


def hourglass_ref(raws, x):
    def pool(a):
        return jnp.maximum(jnp.maximum(a[:, 0::2, 0::2], a[:, 0::2, 1::2]),
                           jnp.maximum(a[:, 1::2, 0::2], a[:, 1::2, 1::2]))

    x1 = res_block_ref(raws["res1"], x)
    x2 = res_block_ref(raws["res2"], pool(x1))
    xm = res_block_ref(raws["resMid"], pool(x2))
    x1b = res_block_ref(raws["resMid1"], x1)
    x2b = res_block_ref(raws["resMid2"], x2)
    y = res_block_ref(raws["res3"], _upsample2(xm) + x2b)
    y = res_block_ref(raws["res4"], _upsample2(y) + x1b)
    return y


# ----------------------------------------------------------------------------
if __name__ == "__main__":
    key = jax.random.PRNGKey(0)
    kx, kp = jax.random.split(key)

    N, CIN, NF, S = 2, 5, 8, 32          # batch, in_feautres, num_features, spatial
    x_nchw = jax.random.normal(kx, (N, CIN, S, S), jnp.float32)

    block_names = ["res1", "res2", "res3", "res4", "resMid", "resMid1", "resMid2"]
    bkeys = jax.random.split(kp, len(block_names))
    raws, folds = {}, {}
    for name, bk in zip(block_names, bkeys):
        cin = CIN if name == "res1" else NF
        raws[name] = init_res_block(bk, cin, NF)
        folds[name] = fold_res_block(raws[name])

    # NCHW (PyTorch) -> NHWC (kernel layout)
    x_nhwc = jnp.transpose(x_nchw, (0, 2, 3, 1))

    out_nhwc = hourglass_pallas(folds, x_nhwc)
    out = jnp.transpose(out_nhwc, (0, 3, 1, 2))               # back to NCHW
    jax.block_until_ready(out)

    ref = jnp.transpose(hourglass_ref(raws, x_nhwc), (0, 3, 1, 2))
    assert out.shape == (N, NF, S, S), out.shape
    np.testing.assert_allclose(np.asarray(out, dtype=np.float32),
                               np.asarray(ref, dtype=np.float32),
                               rtol=2e-2, atol=2e-2)
    print("KERNEL_OK")
</pallas_src>

<mosaic_0001>
module attributes {stable_mosaic.version = 11 : i64} {
  func.func @kernel(%arg0: i32, %arg1: i32, %arg2: memref<1x32x32x5xf32, #tpu.memory_space<vmem>>, %arg3: memref<5x8xbf16, #tpu.memory_space<vmem>>, %arg4: memref<1x8xf32, #tpu.memory_space<vmem>>, %arg5: memref<5x4xbf16, #tpu.memory_space<vmem>>, %arg6: memref<1x4xf32, #tpu.memory_space<vmem>>, %arg7: memref<1x4xf32, #tpu.memory_space<vmem>>, %arg8: memref<36x4xbf16, #tpu.memory_space<vmem>>, %arg9: memref<1x4xf32, #tpu.memory_space<vmem>>, %arg10: memref<1x4xf32, #tpu.memory_space<vmem>>, %arg11: memref<4x8xbf16, #tpu.memory_space<vmem>>, %arg12: memref<1x8xf32, #tpu.memory_space<vmem>>, %arg13: memref<1x8xf32, #tpu.memory_space<vmem>>, %arg14: memref<1x8x32x8xf32, #tpu.memory_space<vmem>>, %arg15: memref<10x40x4xf32, #tpu.memory_space<vmem>>) attributes {dimension_semantics = [#tpu.dimension_semantics<parallel>, #tpu.dimension_semantics<parallel>], iteration_bounds = array<i64: 2, 4>, scalar_prefetch = 0 : i64, scratch_operands = 1 : i64, tpu.core_type = #tpu.core_type<tc>, window_params = [{transform_indices = @transform_0, window_bounds = array<i64: 1, 32, 32, 5>}, {pipeline_mode = #tpu.pipeline_mode<synchronous>, transform_indices = @transform_1, window_bounds = array<i64: 5, 8>}, {pipeline_mode = #tpu.pipeline_mode<synchronous>, transform_indices = @transform_2, window_bounds = array<i64: 1, 8>}, {pipeline_mode = #tpu.pipeline_mode<synchronous>, transform_indices = @transform_3, window_bounds = array<i64: 5, 4>}, {pipeline_mode = #tpu.pipeline_mode<synchronous>, transform_indices = @transform_4, window_bounds = array<i64: 1, 4>}, {pipeline_mode = #tpu.pipeline_mode<synchronous>, transform_indices = @transform_5, window_bounds = array<i64: 1, 4>}, {pipeline_mode = #tpu.pipeline_mode<synchronous>, transform_indices = @transform_6, window_bounds = array<i64: 36, 4>}, {pipeline_mode = #tpu.pipeline_mode<synchronous>, transform_indices = @transform_7, window_bounds = array<i64: 1, 4>}, {pipeline_mode = #tpu.pipeline_mode<synchronous>, transform_indices = @transform_8, window_bounds = array<i64: 1, 4>}, {pipeline_mode = #tpu.pipeline_mode<synchronous>, transform_indices = @transform_9, window_bounds = array<i64: 4, 8>}, {pipeline_mode = #tpu.pipeline_mode<synchronous>, transform_indices = @transform_10, window_bounds = array<i64: 1, 8>}, {pipeline_mode = #tpu.pipeline_mode<synchronous>, transform_indices = @transform_11, window_bounds = array<i64: 1, 8>}, {transform_indices = @transform_12, window_bounds = array<i64: 1, 8, 32, 8>}]} {
    %c8_i32 = arith.constant 8 : i32
    %0 = arith.muli %arg1, %c8_i32 : i32
    %1 = tpu.assume_multiple %0, 8 : i32
    %cst = arith.constant 0.000000e+00 : f32
    %2 = vector.broadcast %cst : f32 to vector<10x40x4xf32>
    %c0 = arith.constant 0 : index
    %c0_0 = arith.constant 0 : index
    %c0_1 = arith.constant 0 : index
    %3 = vector.load %arg15[%c0, %c0_0, %c0_1] : memref<10x40x4xf32, #tpu.memory_space<vmem>>, vector<10x40x4xf32>
    tpu.vector_store %arg15[%c0, %c0_0, %c0_1], %2 {strides = array<i32>} : memref<10x40x4xf32, #tpu.memory_space<vmem>>, vector<10x40x4xf32>,
    %c0_2 = arith.constant 0 : index
    %4 = arith.index_cast %1 : i32 to index
    %c0_3 = arith.constant 0 : index
    %c0_4 = arith.constant 0 : index
    %5 = vector.load %arg2[%c0_2, %4, %c0_3, %c0_4] : memref<1x32x32x5xf32, #tpu.memory_space<vmem>>, vector<1x8x32x5xf32>
    %6 = vector.shape_cast %5 : vector<1x8x32x5xf32> to vector<8x32x5xf32>
    %7 = vector.shape_cast %6 : vector<8x32x5xf32> to vector<256x5xf32>
    %8 = arith.truncf %7 : vector<256x5xf32> to vector<256x5xbf16>
    %c0_5 = arith.constant 0 : index
    %c0_6 = arith.constant 0 : index
    %9 = vector.load %arg5[%c0_5, %c0_6] : memref<5x4xbf16, #tpu.memory_space<vmem>>, vector<5x4xbf16>
    %cst_7 = arith.constant dense<0.000000e+00> : vector<256x4xf32>
    %10 = tpu.matmul %8, %9, %cst_7 {dimension_numbers = #tpu.dot_dimension_numbers<[1], [0], [0], [1], [0, 0, 1, 1], [], []>} : vector<256x5xbf16>, vector<5x4xbf16>, vector<256x4xf32> -> vector<256x4xf32>
    %c0_8 = arith.constant 0 : index
    %c0_9 = arith.constant 0 : index
    %11 = vector.load %arg6[%c0_8, %c0_9] : memref<1x4xf32, #tpu.memory_space<vmem>>, vector<1x4xf32>
    %12 = vector.broadcast %11 : vector<1x4xf32> to vector<256x4xf32>
    %13 = arith.mulf %10, %12 : vector<256x4xf32>
    %c0_10 = arith.constant 0 : index
    %c0_11 = arith.constant 0 : index
    %14 = vector.load %arg7[%c0_10, %c0_11] : memref<1x4xf32, #tpu.memory_space<vmem>>, vector<1x4xf32>
    %15 = vector.broadcast %14 : vector<1x4xf32> to vector<256x4xf32>
    %16 = arith.addf %13, %15 : vector<256x4xf32>
    %cst_12 = arith.constant 0.000000e+00 : f32
    %17 = vector.broadcast %cst_12 : f32 to vector<256x4xf32>
    %18 = arith.maximumf %16, %17 : vector<256x4xf32>
    %19 = vector.shape_cast %18 : vector<256x4xf32> to vector<8x32x4xf32>
    %c1 = arith.constant 1 : index
    %c1_13 = arith.constant 1 : index
    %c0_14 = arith.constant 0 : index
    %20 = vector.load %arg15[%c1, %c1_13, %c0_14] : memref<10x40x4xf32, #tpu.memory_space<vmem>>, vector<8x32x4xf32>
    tpu.vector_store %arg15[%c1, %c1_13, %c0_14], %19 {strides = array<i32>} : memref<10x40x4xf32, #tpu.memory_space<vmem>>, vector<8x32x4xf32>,
    %c0_i32 = arith.constant 0 : i32
    %21 = arith.cmpi sgt, %arg1, %c0_i32 : i32
    %22 = arith.extui %21 : i1 to i32
    %c0_i32_15 = arith.constant 0 : i32
    %23 = arith.cmpi ne, %22, %c0_i32_15 : i32
    scf.if %23 {
      %c1_i32 = arith.constant 1 : i32
      %71 = arith.subi %1, %c1_i32 : i32
      %c0_45 = arith.constant 0 : index
      %72 = arith.index_cast %71 : i32 to index
      %c0_46 = arith.constant 0 : index
      %c0_47 = arith.constant 0 : index
      %73 = vector.load %arg2[%c0_45, %72, %c0_46, %c0_47] : memref<1x32x32x5xf32, #tpu.memory_space<vmem>>, vector<1x1x32x5xf32>
      %74 = vector.shape_cast %73 : vector<1x1x32x5xf32> to vector<1x32x5xf32>
      %75 = vector.shape_cast %74 : vector<1x32x5xf32> to vector<32x5xf32>
      %76 = arith.truncf %75 : vector<32x5xf32> to vector<32x5xbf16>
      %c0_48 = arith.constant 0 : index
      %c0_49 = arith.constant 0 : index
      %77 = vector.load %arg5[%c0_48, %c0_49] : memref<5x4xbf16, #tpu.memory_space<vmem>>, vector<5x4xbf16>
      %cst_50 = arith.constant dense<0.000000e+00> : vector<32x4xf32>
      %78 = tpu.matmul %76, %77, %cst_50 {dimension_numbers = #tpu.dot_dimension_numbers<[1], [0], [0], [1], [0, 0, 1, 1], [], []>} : vector<32x5xbf16>, vector<5x4xbf16>, vector<32x4xf32> -> vector<32x4xf32>
      %c0_51 = arith.constant 0 : index
      %c0_52 = arith.constant 0 : index
      %79 = vector.load %arg6[%c0_51, %c0_52] : memref<1x4xf32, #tpu.memory_space<vmem>>, vector<1x4xf32>
      %80 = vector.broadcast %79 : vector<1x4xf32> to vector<32x4xf32>
      %81 = arith.mulf %78, %80 : vector<32x4xf32>
      %c0_53 = arith.constant 0 : index
      %c0_54 = arith.constant 0 : index
      %82 = vector.load %arg7[%c0_53, %c0_54] : memref<1x4xf32, #tpu.memory_space<vmem>>, vector<1x4xf32>
      %83 = vector.broadcast %82 : vector<1x4xf32> to vector<32x4xf32>
      %84 = arith.addf %81, %83 : vector<32x4xf32>
      %cst_55 = arith.constant 0.000000e+00 : f32
      %85 = vector.broadcast %cst_55 : f32 to vector<32x4xf32>
      %86 = arith.maximumf %84, %85 : vector<32x4xf32>
      %87 = vector.shape_cast %86 : vector<32x4xf32> to vector<1x32x4xf32>
      %c0_56 = arith.constant 0 : index
      %c1_57 = arith.constant 1 : index
      %c0_58 = arith.constant 0 : index
      %88 = vector.load %arg15[%c0_56, %c1_57, %c0_58] : memref<10x40x4xf32, #tpu.memory_space<vmem>>, vector<1x32x4xf32>
      tpu.vector_store %arg15[%c0_56, %c1_57, %c0_58], %87 {strides = array<i32>} : memref<10x40x4xf32, #tpu.memory_space<vmem>>, vector<1x32x4xf32>,
    } else {
    }
    %c3_i32 = arith.constant 3 : i32
    %24 = arith.cmpi slt, %arg1, %c3_i32 : i32
    %25 = arith.extui %24 : i1 to i32
    %c0_i32_16 = arith.constant 0 : i32
    %26 = arith.cmpi ne, %25, %c0_i32_16 : i32
    scf.if %26 {
      %c8_i32_45 = arith.constant 8 : i32
      %71 = arith.addi %1, %c8_i32_45 : i32
      %c0_46 = arith.constant 0 : index
      %72 = arith.index_cast %71 : i32 to index
      %c0_47 = arith.constant 0 : index
      %c0_48 = arith.constant 0 : index
      %73 = vector.load %arg2[%c0_46, %72, %c0_47, %c0_48] : memref<1x32x32x5xf32, #tpu.memory_space<vmem>>, vector<1x1x32x5xf32>
      %74 = vector.shape_cast %73 : vector<1x1x32x5xf32> to vector<1x32x5xf32>
      %75 = vector.shape_cast %74 : vector<1x32x5xf32> to vector<32x5xf32>
      %76 = arith.truncf %75 : vector<32x5xf32> to vector<32x5xbf16>
      %c0_49 = arith.constant 0 : index
      %c0_50 = arith.constant 0 : index
      %77 = vector.load %arg5[%c0_49, %c0_50] : memref<5x4xbf16, #tpu.memory_space<vmem>>, vector<5x4xbf16>
      %cst_51 = arith.constant dense<0.000000e+00> : vector<32x4xf32>
      %78 = tpu.matmul %76, %77, %cst_51 {dimension_numbers = #tpu.dot_dimension_numbers<[1], [0], [0], [1], [0, 0, 1, 1], [], []>} : vector<32x5xbf16>, vector<5x4xbf16>, vector<32x4xf32> -> vector<32x4xf32>
      %c0_52 = arith.constant 0 : index
      %c0_53 = arith.constant 0 : index
      %79 = vector.load %arg6[%c0_52, %c0_53] : memref<1x4xf32, #tpu.memory_space<vmem>>, vector<1x4xf32>
      %80 = vector.broadcast %79 : vector<1x4xf32> to vector<32x4xf32>
      %81 = arith.mulf %78, %80 : vector<32x4xf32>
      %c0_54 = arith.constant 0 : index
      %c0_55 = arith.constant 0 : index
      %82 = vector.load %arg7[%c0_54, %c0_55] : memref<1x4xf32, #tpu.memory_space<vmem>>, vector<1x4xf32>
      %83 = vector.broadcast %82 : vector<1x4xf32> to vector<32x4xf32>
      %84 = arith.addf %81, %83 : vector<32x4xf32>
      %cst_56 = arith.constant 0.000000e+00 : f32
      %85 = vector.broadcast %cst_56 : f32 to vector<32x4xf32>
      %86 = arith.maximumf %84, %85 : vector<32x4xf32>
      %87 = vector.shape_cast %86 : vector<32x4xf32> to vector<1x32x4xf32>
      %c9 = arith.constant 9 : index
      %c1_57 = arith.constant 1 : index
      %c0_58 = arith.constant 0 : index
      %88 = vector.load %arg15[%c9, %c1_57, %c0_58] : memref<10x40x4xf32, #tpu.memory_space<vmem>>, vector<1x32x4xf32>
      tpu.vector_store %arg15[%c9, %c1_57, %c0_58], %87 {strides = array<i32>} : memref<10x40x4xf32, #tpu.memory_space<vmem>>, vector<1x32x4xf32>,
    } else {
    }
    %c0_17 = arith.constant 0 : index
    %c0_18 = arith.constant 0 : index
    %c0_19 = arith.constant 0 : index
    %27 = vector.load %arg15[%c0_17, %c0_18, %c0_19] : memref<10x40x4xf32, #tpu.memory_space<vmem>>, vector<10x40x4xf32>
    %28 = vector.extract_strided_slice %27 {offsets = [0, 0, 0], sizes = [8, 32, 4], strides = [1, 1, 1]} : vector<10x40x4xf32> to vector<8x32x4xf32>
    %29 = vector.extract_strided_slice %27 {offsets = [0, 1, 0], sizes = [8, 32, 4], strides = [1, 1, 1]} : vector<10x40x4xf32> to vector<8x32x4xf32>
    %30 = vector.extract_strided_slice %27 {offsets = [0, 2, 0], sizes = [8, 32, 4], strides = [1, 1, 1]} : vector<10x40x4xf32> to vector<8x32x4xf32>
    %31 = vector.extract_strided_slice %27 {offsets = [1, 0, 0], sizes = [8, 32, 4], strides = [1, 1, 1]} : vector<10x40x4xf32> to vector<8x32x4xf32>
    %32 = vector.extract_strided_slice %27 {offsets = [1, 1, 0], sizes = [8, 32, 4], strides = [1, 1, 1]} : vector<10x40x4xf32> to vector<8x32x4xf32>
    %33 = vector.extract_strided_slice %27 {offsets = [1, 2, 0], sizes = [8, 32, 4], strides = [1, 1, 1]} : vector<10x40x4xf32> to vector<8x32x4xf32>
    %34 = vector.extract_strided_slice %27 {offsets = [2, 0, 0], sizes = [8, 32, 4], strides = [1, 1, 1]} : vector<10x40x4xf32> to vector<8x32x4xf32>
    %35 = vector.extract_strided_slice %27 {offsets = [2, 1, 0], sizes = [8, 32, 4], strides = [1, 1, 1]} : vector<10x40x4xf32> to vector<8x32x4xf32>
    %36 = vector.extract_strided_slice %27 {offsets = [2, 2, 0], sizes = [8, 32, 4], strides = [1, 1, 1]} : vector<10x40x4xf32> to vector<8x32x4xf32>
    %37 = tpu.concatenate %28, %29, %30, %31, %32, %33, %34, %35, %36 in 2 : vector<8x32x4xf32>, vector<8x32x4xf32>, vector<8x32x4xf32>, vector<8x32x4xf32>, vector<8x32x4xf32>, vector<8x32x4xf32>, vector<8x32x4xf32>, vector<8x32x4xf32>, vector<8x32x4xf32> -> vector<8x32x36xf32>
    %38 = vector.shape_cast %37 : vector<8x32x36xf32> to vector<256x36xf32>
    %39 = arith.truncf %38 : vector<256x36xf32> to vector<256x36xbf16>
    %c0_20 = arith.constant 0 : index
    %c0_21 = arith.constant 0 : index
    %40 = vector.load %arg8[%c0_20, %c0_21] : memref<36x4xbf16, #tpu.memory_space<vmem>>, vector<36x4xbf16>
    %cst_22 = arith.constant dense<0.000000e+00> : vector<256x4xf32>
    %41 = tpu.matmul %39, %40, %cst_22 {dimension_numbers = #tpu.dot_dimension_numbers<[1], [0], [0], [1], [0, 0, 1, 1], [], []>} : vector<256x36xbf16>, vector<36x4xbf16>, vector<256x4xf32> -> vector<256x4xf32>
    %c0_23 = arith.constant 0 : index
    %c0_24 = arith.constant 0 : index
    %42 = vector.load %arg9[%c0_23, %c0_24] : memref<1x4xf32, #tpu.memory_space<vmem>>, vector<1x4xf32>
    %43 = vector.broadcast %42 : vector<1x4xf32> to vector<256x4xf32>
    %44 = arith.mulf %41, %43 : vector<256x4xf32>
    %c0_25 = arith.constant 0 : index
    %c0_26 = arith.constant 0 : index
    %45 = vector.load %arg10[%c0_25, %c0_26] : memref<1x4xf32, #tpu.memory_space<vmem>>, vector<1x4xf32>
    %46 = vector.broadcast %45 : vector<1x4xf32> to vector<256x4xf32>
    %47 = arith.addf %44, %46 : vector<256x4xf32>
    %cst_27 = arith.constant 0.000000e+00 : f32
    %48 = vector.broadcast %cst_27 : f32 to vector<256x4xf32>
    %49 = arith.maximumf %47, %48 : vector<256x4xf32>
    %50 = arith.truncf %49 : vector<256x4xf32> to vector<256x4xbf16>
    %c0_28 = arith.constant 0 : index
    %c0_29 = arith.constant 0 : index
    %51 = vector.load %arg11[%c0_28, %c0_29] : memref<4x8xbf16, #tpu.memory_space<vmem>>, vector<4x8xbf16>
    %cst_30 = arith.constant dense<0.000000e+00> : vector<256x8xf32>
    %52 = tpu.matmul %50, %51, %cst_30 {dimension_numbers = #tpu.dot_dimension_numbers<[1], [0], [0], [1], [0, 0, 1, 1], [], []>} : vector<256x4xbf16>, vector<4x8xbf16>, vector<256x8xf32> -> vector<256x8xf32>
    %c0_31 = arith.constant 0 : index
    %c0_32 = arith.constant 0 : index
    %53 = vector.load %arg12[%c0_31, %c0_32] : memref<1x8xf32, #tpu.memory_space<vmem>>, vector<1x8xf32>
    %54 = vector.broadcast %53 : vector<1x8xf32> to vector<256x8xf32>
    %55 = arith.mulf %52, %54 : vector<256x8xf32>
    %c0_33 = arith.constant 0 : index
    %c0_34 = arith.constant 0 : index
    %56 = vector.load %arg13[%c0_33, %c0_34] : memref<1x8xf32, #tpu.memory_space<vmem>>, vector<1x8xf32>
    %57 = vector.broadcast %56 : vector<1x8xf32> to vector<256x8xf32>
    %58 = arith.addf %55, %57 : vector<256x8xf32>
    %59 = vector.shape_cast %6 : vector<8x32x5xf32> to vector<256x5xf32>
    %60 = arith.truncf %59 : vector<256x5xf32> to vector<256x5xbf16>
    %c0_35 = arith.constant 0 : index
    %c0_36 = arith.constant 0 : index
    %61 = vector.load %arg3[%c0_35, %c0_36] : memref<5x8xbf16, #tpu.memory_space<vmem>>, vector<5x8xbf16>
    %cst_37 = arith.constant dense<0.000000e+00> : vector<256x8xf32>
    %62 = tpu.matmul %60, %61, %cst_37 {dimension_numbers = #tpu.dot_dimension_numbers<[1], [0], [0], [1], [0, 0, 1, 1], [], []>} : vector<256x5xbf16>, vector<5x8xbf16>, vector<256x8xf32> -> vector<256x8xf32>
    %c0_38 = arith.constant 0 : index
    %c0_39 = arith.constant 0 : index
    %63 = vector.load %arg4[%c0_38, %c0_39] : memref<1x8xf32, #tpu.memory_space<vmem>>, vector<1x8xf32>
    %64 = vector.broadcast %63 : vector<1x8xf32> to vector<256x8xf32>
    %65 = arith.addf %62, %64 : vector<256x8xf32>
    %66 = arith.addf %58, %65 : vector<256x8xf32>
    %cst_40 = arith.constant 0.000000e+00 : f32
    %67 = vector.broadcast %cst_40 : f32 to vector<256x8xf32>
    %68 = arith.maximumf %66, %67 : vector<256x8xf32>
    %69 = vector.shape_cast %68 : vector<256x8xf32> to vector<1x8x32x8xf32>
    %c0_41 = arith.constant 0 : index
    %c0_42 = arith.constant 0 : index
    %c0_43 = arith.constant 0 : index
    %c0_44 = arith.constant 0 : index
    %70 = vector.load %arg14[%c0_41, %c0_42, %c0_43, %c0_44] : memref<1x8x32x8xf32, #tpu.memory_space<vmem>>, vector<1x8x32x8xf32>
    tpu.vector_store %arg14[%c0_41, %c0_42, %c0_43, %c0_44], %69 {strides = array<i32>} : memref<1x8x32x8xf32, #tpu.memory_space<vmem>>, vector<1x8x32x8xf32>,
    return
  }
  func.func @transform_0(%arg0: i32, %arg1: i32) -> (i32, i32, i32, i32) {
    %c0_i32 = arith.constant 0 : i32
    %c0_i32_0 = arith.constant 0 : i32
    %c0_i32_1 = arith.constant 0 : i32
    %c0_i32_2 = arith.constant 0 : i32
    return %arg0, %c0_i32, %c0_i32_0, %c0_i32_1 : i32, i32, i32, i32
  }
  func.func @transform_1(%arg0: i32, %arg1: i32) -> (i32, i32) {
    %c0_i32 = arith.constant 0 : i32
    %c0_i32_0 = arith.constant 0 : i32
    %c0_i32_1 = arith.constant 0 : i32
    return %c0_i32, %c0_i32_0 : i32, i32
  }
  func.func @transform_2(%arg0: i32, %arg1: i32) -> (i32, i32) {
    %c0_i32 = arith.constant 0 : i32
    %c0_i32_0 = arith.constant 0 : i32
    %c0_i32_1 = arith.constant 0 : i32
    return %c0_i32, %c0_i32_0 : i32, i32
  }
  func.func @transform_3(%arg0: i32, %arg1: i32) -> (i32, i32) {
    %c0_i32 = arith.constant 0 : i32
    %c0_i32_0 = arith.constant 0 : i32
    %c0_i32_1 = arith.constant 0 : i32
    return %c0_i32, %c0_i32_0 : i32, i32
  }
  func.func @transform_4(%arg0: i32, %arg1: i32) -> (i32, i32) {
    %c0_i32 = arith.constant 0 : i32
    %c0_i32_0 = arith.constant 0 : i32
    %c0_i32_1 = arith.constant 0 : i32
    return %c0_i32, %c0_i32_0 : i32, i32
  }
  func.func @transform_5(%arg0: i32, %arg1: i32) -> (i32, i32) {
    %c0_i32 = arith.constant 0 : i32
    %c0_i32_0 = arith.constant 0 : i32
    %c0_i32_1 = arith.constant 0 : i32
    return %c0_i32, %c0_i32_0 : i32, i32
  }
  func.func @transform_6(%arg0: i32, %arg1: i32) -> (i32, i32) {
    %c0_i32 = arith.constant 0 : i32
    %c0_i32_0 = arith.constant 0 : i32
    %c0_i32_1 = arith.constant 0 : i32
    return %c0_i32, %c0_i32_0 : i32, i32
  }
  func.func @transform_7(%arg0: i32, %arg1: i32) -> (i32, i32) {
    %c0_i32 = arith.constant 0 : i32
    %c0_i32_0 = arith.constant 0 : i32
    %c0_i32_1 = arith.constant 0 : i32
    return %c0_i32, %c0_i32_0 : i32, i32
  }
  func.func @transform_8(%arg0: i32, %arg1: i32) -> (i32, i32) {
    %c0_i32 = arith.constant 0 : i32
    %c0_i32_0 = arith.constant 0 : i32
    %c0_i32_1 = arith.constant 0 : i32
    return %c0_i32, %c0_i32_0 : i32, i32
  }
  func.func @transform_9(%arg0: i32, %arg1: i32) -> (i32, i32) {
    %c0_i32 = arith.constant 0 : i32
    %c0_i32_0 = arith.constant 0 : i32
    %c0_i32_1 = arith.constant 0 : i32
    return %c0_i32, %c0_i32_0 : i32, i32
  }
  func.func @transform_10(%arg0: i32, %arg1: i32) -> (i32, i32) {
    %c0_i32 = arith.constant 0 : i32
    %c0_i32_0 = arith.constant 0 : i32
    %c0_i32_1 = arith.constant 0 : i32
    return %c0_i32, %c0_i32_0 : i32, i32
  }
  func.func @transform_11(%arg0: i32, %arg1: i32) -> (i32, i32) {
    %c0_i32 = arith.constant 0 : i32
    %c0_i32_0 = arith.constant 0 : i32
    %c0_i32_1 = arith.constant 0 : i32
    return %c0_i32, %c0_i32_0 : i32, i32
  }
  func.func @transform_12(%arg0: i32, %arg1: i32) -> (i32, i32, i32, i32) {
    %c0_i32 = arith.constant 0 : i32
    %c0_i32_0 = arith.constant 0 : i32
    %c0_i32_1 = arith.constant 0 : i32
    return %arg0, %arg1, %c0_i32, %c0_i32_0 : i32, i32, i32, i32
  }
}

</mosaic_0001>

<llo_original>
// kernel: tpu_custom_call.1
$region0: #{tpu_custom_call.1}
  #allocation0 [shape = 'u32[]', space=smem, size = 0x4, offset = 0x4, fixed_abs, tag = 'smem constant byte address 0x4 - core index']
  #allocation1 [shape = 'u32[144,128]{1,0:T(1,128)}', space=vmem, size = 0x12000, scoped, tag = 'internal scratch']
  #allocation2 [shape = 'f32[10,40,4]{2,1,0:T(8,128)}', space=vmem, size = 0x32000, scoped, tag = 'scratch operand']
  %s0 = inlined_call_operand.vmem [shape: f32[2,32,32,5], index: 0, kind: input, shape index: {}]
  %s1 = inlined_call_operand.vmem [shape: bf16[5,8], index: 1, kind: input, shape index: {}]
  %s2 = inlined_call_operand.vmem [shape: f32[1,8], index: 2, kind: input, shape index: {}]
  %s3 = inlined_call_operand.vmem [shape: bf16[5,4], index: 3, kind: input, shape index: {}]
  %s4 = inlined_call_operand.vmem [shape: f32[1,4], index: 4, kind: input, shape index: {}]
  %s5 = inlined_call_operand.vmem [shape: f32[1,4], index: 5, kind: input, shape index: {}]
  %s6 = inlined_call_operand.vmem [shape: bf16[36,4], index: 6, kind: input, shape index: {}]
  %s7 = inlined_call_operand.vmem [shape: f32[1,4], index: 7, kind: input, shape index: {}]
  %s8 = inlined_call_operand.vmem [shape: f32[1,4], index: 8, kind: input, shape index: {}]
  %s9 = inlined_call_operand.vmem [shape: bf16[4,8], index: 9, kind: input, shape index: {}]
  %s10 = inlined_call_operand.vmem [shape: f32[1,8], index: 10, kind: input, shape index: {}]
  %s11 = inlined_call_operand.vmem [shape: f32[1,8], index: 11, kind: input, shape index: {}]
  %s12 = inlined_call_operand.vmem [shape: f32[2,32,32,8], index: 12, kind: output, shape index: {}]
  %s13 = sld [smem:[#allocation0]]
  $region89: #{tpu_custom_call.1} parent=0
    _
  %s15 = ssub.s32 1, %s13
  %s16 = scalar_select 0, %s15, %s13
  loop: start=0, step=1, limit=10
  $region2: #{tpu_custom_call.1} parent=0 // loop_pre_header
    _
  $region3: #{tpu_custom_call.1} parent=0 // loop_header
    %s18 = sphi 0, %s22
    %p19 = scmp.ge.s32.totalorder %s18, 10
    %s25 = sphi 0, %s37
    %s26 = sphi 0, %s33
    %s27 = sphi 0, %s25
    %s28 = sphi 0, %s26
    %s29 = sphi 0, %s27
    %s30 = sphi 0, %s28
    %s40 = sphi 0, %s42
    %s43 = sphi 0, %s40
    %s44 = sphi 0, %s43
    %s60 = sphi 0, %s44
    %s64 = sphi 0, %s64
    %s66 = sphi 0, %s64
    %s67 = sphi 0, %s66
    %s81 = sphi 0, %s67
    %s85 = sphi 0, %s85
    %s87 = sphi 0, %s85
    %s88 = sphi 0, %s87
    %s102 = sphi 0, %s88
    %s106 = sphi 0, %s106
    %s108 = sphi 0, %s106
    %s109 = sphi 0, %s108
    %s123 = sphi 0, %s109
    %s127 = sphi 0, %s127
    %s129 = sphi 0, %s127
    %s130 = sphi 0, %s129
    %s144 = sphi 0, %s130
    %s148 = sphi 0, %s148
    %s150 = sphi 0, %s148
    %s151 = sphi 0, %s150
    %s165 = sphi 0, %s151
    %s169 = sphi 0, %s169
    %s171 = sphi 0, %s169
    %s172 = sphi 0, %s171
    %s186 = sphi 0, %s172
    %s190 = sphi 0, %s190
    %s192 = sphi 0, %s190
    %s193 = sphi 0, %s192
    %s207 = sphi 0, %s193
    %s211 = sphi 0, %s211
    %s213 = sphi 0, %s211
    %s214 = sphi 0, %s213
    %s228 = sphi 0, %s214
    %s232 = sphi 0, %s232
    %s234 = sphi 0, %s232
    %s235 = sphi 0, %s234
    %s249 = sphi 0, %s235
    %s253 = sphi 0, %s253
    %s255 = sphi 0, %s253
    %s256 = sphi 0, %s255
    %s270 = sphi 0, %s256
    %s274 = sphi 0, %s274
    %s276 = sphi 0, %s274
    %s277 = sphi 0, %s276
    %s291 = sphi 0, %s277
    %s299 = sphi 0, %s301
    %s302 = sphi 0, %s299
    %s303 = sphi 0, %s302
    %s319 = sphi 0, %s303
  $region4: #{tpu_custom_call.1} parent=0 // loop_header_branch
    %21 = sbr.rel (%p19) target = $region8
  $region5: #{tpu_custom_call.1} parent=0 // loop_body
    %s23 = ssub.s32 %s18, 1
    %s24 = ssub.s32 %s18, 2
    %s31 = sadd.s32 1, %s26
    %p32 = scmp.ge.s32.totalorder %s31, 4
    %s33 = scalar_select %p32, 0, %s31
    %s34 = sadd.s32 1, %s25
    %s35 = scalar_select %p32, %s34, %s25
    %p36 = scmp.ge.s32.totalorder %s35, 2
    %s37 = scalar_select %p36, 0, %s35
    %s38 = ssub.s32 %s25, %s37
    %p39 = scmp.eq.s32.totalorder %s38, 0
    %s41 = sadd.s32 %s40, 1
    %s42 = scalar_select %p39, %s40, %s41
    %p45 = pneg %p39
    %p46 = scmp.eq.s32.totalorder %s18, 7
    %p47 = por %p45, %p46
    %p48 = scmp.ne.s32.totalorder %s40, %s43
    %p49 = scmp.eq.s32.totalorder %s18, 0
    %p50 = por %p48, %p49
    %p51 = scmp.ne.s32.totalorder %s40, %s43
    %p52 = scmp.eq.s32.totalorder %s23, 7
    %p53 = por %p51, %p52
    %p54 = scmp.ne.s32.totalorder %s43, %s44
    %p55 = scmp.eq.s32.totalorder %s23, 0
    %p56 = por %p54, %p55
    %p57 = scmp.ne.s32.totalorder %s43, %s44
    %p58 = scmp.eq.s32.totalorder %s24, 7
    %p59 = por %p57, %p58
    %p61 = scmp.ne.s32.totalorder %s44, %s60
    %p62 = scmp.eq.s32.totalorder %s24, 0
    %p63 = por %p61, %p62
    %s65 = sadd.s32 %s64, 1
    %p68 = scmp.eq.s32.totalorder %s18, 7
    %p69 = scmp.ne.s32.totalorder %s64, %s66
    %p70 = scmp.eq.s32.totalorder %s18, 0
    %p71 = por %p69, %p70
    %p72 = scmp.ne.s32.totalorder %s64, %s66
    %p73 = scmp.eq.s32.totalorder %s23, 7
    %p74 = por %p72, %p73
    %p75 = scmp.ne.s32.totalorder %s66, %s67
    %p76 = scmp.eq.s32.totalorder %s23, 0
    %p77 = por %p75, %p76
    %p78 = scmp.ne.s32.totalorder %s66, %s67
    %p79 = scmp.eq.s32.totalorder %s24, 7
    %p80 = por %p78, %p79
    %p82 = scmp.ne.s32.totalorder %s67, %s81
    %p83 = scmp.eq.s32.totalorder %s24, 0
    %p84 = por %p82, %p83
    %s86 = sadd.s32 %s85, 1
    %p89 = scmp.eq.s32.totalorder %s18, 7
    %p90 = scmp.ne.s32.totalorder %s85, %s87
    %p91 = scmp.eq.s32.totalorder %s18, 0
    %p92 = por %p90, %p91
    %p93 = scmp.ne.s32.totalorder %s85, %s87
    %p94 = scmp.eq.s32.totalorder %s23, 7
    %p95 = por %p93, %p94
    %p96 = scmp.ne.s32.totalorder %s87, %s88
    %p97 = scmp.eq.s32.totalorder %s23, 0
    %p98 = por %p96, %p97
    %p99 = scmp.ne.s32.totalorder %s87, %s88
    %p100 = scmp.eq.s32.totalorder %s24, 7
    %p101 = por %p99, %p100
    %p103 = scmp.ne.s32.totalorder %s88, %s102
    %p104 = scmp.eq.s32.totalorder %s24, 0
    %p105 = por %p103, %p104
    %s107 = sadd.s32 %s106, 1
    %p110 = scmp.eq.s32.totalorder %s18, 7
    %p111 = scmp.ne.s32.totalorder %s106, %s108
    %p112 = scmp.eq.s32.totalorder %s18, 0
    %p113 = por %p111, %p112
    %p114 = scmp.ne.s32.totalorder %s106, %s108
    %p115 = scmp.eq.s32.totalorder %s23, 7
    %p116 = por %p114, %p115
    %p117 = scmp.ne.s32.totalorder %s108, %s109
    %p118 = scmp.eq.s32.totalorder %s23, 0
    %p119 = por %p117, %p118
    %p120 = scmp.ne.s32.totalorder %s108, %s109
    %p121 = scmp.eq.s32.totalorder %s24, 7
    %p122 = por %p120, %p121
    %p124 = scmp.ne.s32.totalorder %s109, %s123
    %p125 = scmp.eq.s32.totalorder %s24, 0
    %p126 = por %p124, %p125
    %s128 = sadd.s32 %s127, 1
    %p131 = scmp.eq.s32.totalorder %s18, 7
    %p132 = scmp.ne.s32.totalorder %s127, %s129
    %p133 = scmp.eq.s32.totalorder %s18, 0
    %p134 = por %p132, %p133
    %p135 = scmp.ne.s32.totalorder %s127, %s129
    %p136 = scmp.eq.s32.totalorder %s23, 7
    %p137 = por %p135, %p136
    %p138 = scmp.ne.s32.totalorder %s129, %s130
    %p139 = scmp.eq.s32.totalorder %s23, 0
    %p140 = por %p138, %p139
    %p141 = scmp.ne.s32.totalorder %s129, %s130
    %p142 = scmp.eq.s32.totalorder %s24, 7
    %p143 = por %p141, %p142
    %p145 = scmp.ne.s32.totalorder %s130, %s144
    %p146 = scmp.eq.s32.totalorder %s24, 0
    %p147 = por %p145, %p146
    %s149 = sadd.s32 %s148, 1
    %p152 = scmp.eq.s32.totalorder %s18, 7
    %p153 = scmp.ne.s32.totalorder %s148, %s150
    %p154 = scmp.eq.s32.totalorder %s18, 0
    %p155 = por %p153, %p154
    %p156 = scmp.ne.s32.totalorder %s148, %s150
    %p157 = scmp.eq.s32.totalorder %s23, 7
    %p158 = por %p156, %p157
    %p159 = scmp.ne.s32.totalorder %s150, %s151
    %p160 = scmp.eq.s32.totalorder %s23, 0
    %p161 = por %p159, %p160
    %p162 = scmp.ne.s32.totalorder %s150, %s151
    %p163 = scmp.eq.s32.totalorder %s24, 7
    %p164 = por %p162, %p163
    %p166 = scmp.ne.s32.totalorder %s151, %s165
    %p167 = scmp.eq.s32.totalorder %s24, 0
    %p168 = por %p166, %p167
    %s170 = sadd.s32 %s169, 1
    %p173 = scmp.eq.s32.totalorder %s18, 7
    %p174 = scmp.ne.s32.totalorder %s169, %s171
    %p175 = scmp.eq.s32.totalorder %s18, 0
    %p176 = por %p174, %p175
    %p177 = scmp.ne.s32.totalorder %s169, %s171
    %p178 = scmp.eq.s32.totalorder %s23, 7
    %p179 = por %p177, %p178
    %p180 = scmp.ne.s32.totalorder %s171, %s172
    %p181 = scmp.eq.s32.totalorder %s23, 0
    %p182 = por %p180, %p181
    %p183 = scmp.ne.s32.totalorder %s171, %s172
    %p184 = scmp.eq.s32.totalorder %s24, 7
    %p185 = por %p183, %p184
    %p187 = scmp.ne.s32.totalorder %s172, %s186
    %p188 = scmp.eq.s32.totalorder %s24, 0
    %p189 = por %p187, %p188
    %s191 = sadd.s32 %s190, 1
    %p194 = scmp.eq.s32.totalorder %s18, 7
    %p195 = scmp.ne.s32.totalorder %s190, %s192
    %p196 = scmp.eq.s32.totalorder %s18, 0
    %p197 = por %p195, %p196
    %p198 = scmp.ne.s32.totalorder %s190, %s192
    %p199 = scmp.eq.s32.totalorder %s23, 7
    %p200 = por %p198, %p199
    %p201 = scmp.ne.s32.totalorder %s192, %s193
    %p202 = scmp.eq.s32.totalorder %s23, 0
    %p203 = por %p201, %p202
    %p204 = scmp.ne.s32.totalorder %s192, %s193
    %p205 = scmp.eq.s32.totalorder %s24, 7
    %p206 = por %p204, %p205
    %p208 = scmp.ne.s32.totalorder %s193, %s207
    %p209 = scmp.eq.s32.totalorder %s24, 0
    %p210 = por %p208, %p209
    %s212 = sadd.s32 %s211, 1
    %p215 = scmp.eq.s32.totalorder %s18, 7
    %p216 = scmp.ne.s32.totalorder %s211, %s213
    %p217 = scmp.eq.s32.totalorder %s18, 0
    %p218 = por %p216, %p217
    %p219 = scmp.ne.s32.totalorder %s211, %s213
    %p220 = scmp.eq.s32.totalorder %s23, 7
    %p221 = por %p219, %p220
    %p222 = scmp.ne.s32.totalorder %s213, %s214
    %p223 = scmp.eq.s32.totalorder %s23, 0
    %p224 = por %p222, %p223
    %p225 = scmp.ne.s32.totalorder %s213, %s214
    %p226 = scmp.eq.s32.totalorder %s24, 7
    %p227 = por %p225, %p226
    %p229 = scmp.ne.s32.totalorder %s214, %s228
    %p230 = scmp.eq.s32.totalorder %s24, 0
    %p231 = por %p229, %p230
    %s233 = sadd.s32 %s232, 1
    %p236 = scmp.eq.s32.totalorder %s18, 7
    %p237 = scmp.ne.s32.totalorder %s232, %s234
    %p238 = scmp.eq.s32.totalorder %s18, 0
    %p239 = por %p237, %p238
    %p240 = scmp.ne.s32.totalorder %s232, %s234
    %p241 = scmp.eq.s32.totalorder %s23, 7
    %p242 = por %p240, %p241
    %p243 = scmp.ne.s32.totalorder %s234, %s235
    %p244 = scmp.eq.s32.totalorder %s23, 0
    %p245 = por %p243, %p244
    %p246 = scmp.ne.s32.totalorder %s234, %s235
    %p247 = scmp.eq.s32.totalorder %s24, 7
    %p248 = por %p246, %p247
    %p250 = scmp.ne.s32.totalorder %s235, %s249
    %p251 = scmp.eq.s32.totalorder %s24, 0
    %p252 = por %p250, %p251
    %s254 = sadd.s32 %s253, 1
    %p257 = scmp.eq.s32.totalorder %s18, 7
    %p258 = scmp.ne.s32.totalorder %s253, %s255
    %p259 = scmp.eq.s32.totalorder %s18, 0
    %p260 = por %p258, %p259
    %p261 = scmp.ne.s32.totalorder %s253, %s255
    %p262 = scmp.eq.s32.totalorder %s23, 7
    %p263 = por %p261, %p262
    %p264 = scmp.ne.s32.totalorder %s255, %s256
    %p265 = scmp.eq.s32.totalorder %s23, 0
    %p266 = por %p264, %p265
    %p267 = scmp.ne.s32.totalorder %s255, %s256
    %p268 = scmp.eq.s32.totalorder %s24, 7
    %p269 = por %p267, %p268
    %p271 = scmp.ne.s32.totalorder %s256, %s270
    %p272 = scmp.eq.s32.totalorder %s24, 0
    %p273 = por %p271, %p272
    %s275 = sadd.s32 %s274, 1
    %p278 = scmp.eq.s32.totalorder %s18, 7
    %p279 = scmp.ne.s32.totalorder %s274, %s276
    %p280 = scmp.eq.s32.totalorder %s18, 0
    %p281 = por %p279, %p280
    %p282 = scmp.ne.s32.totalorder %s274, %s276
    %p283 = scmp.eq.s32.totalorder %s23, 7
    %p284 = por %p282, %p283
    %p285 = scmp.ne.s32.totalorder %s276, %s277
    %p286 = scmp.eq.s32.totalorder %s23, 0
    %p287 = por %p285, %p286
    %p288 = scmp.ne.s32.totalorder %s276, %s277
    %p289 = scmp.eq.s32.totalorder %s24, 7
    %p290 = por %p288, %p289
    %p292 = scmp.ne.s32.totalorder %s277, %s291
    %p293 = scmp.eq.s32.totalorder %s24, 0
    %p294 = por %p292, %p293
    %s295 = ssub.s32 %s25, %s37
    %s296 = ssub.s32 %s26, %s33
    %s297 = sor.u32 %s295, %s296
    %p298 = scmp.eq.s32.totalorder %s297, 0
    %s300 = sadd.s32 %s299, 1
    %s301 = scalar_select %p298, %s299, %s300
    %p304 = pneg %p298
    %p305 = scmp.eq.s32.totalorder %s18, 7
    %p306 = por %p304, %p305
    %p307 = scmp.ne.s32.totalorder %s299, %s302
    %p308 = scmp.eq.s32.totalorder %s18, 0
    %p309 = por %p307, %p308
    %p310 = scmp.ne.s32.totalorder %s299, %s302
    %p311 = scmp.eq.s32.totalorder %s23, 7
    %p312 = por %p310, %p311
    %p313 = scmp.ne.s32.totalorder %s302, %s303
    %p314 = scmp.eq.s32.totalorder %s23, 0
    %p315 = por %p313, %p314
    %p316 = scmp.ne.s32.totalorder %s302, %s303
    %p317 = scmp.eq.s32.totalorder %s24, 7
    %p318 = por %p316, %p317
    %p320 = scmp.ne.s32.totalorder %s303, %s319
    %p321 = scmp.eq.s32.totalorder %s24, 0
    %p322 = por %p320, %p321
    %p323 = scmp.le.s32.totalorder 1, %s18
    %p324 = scmp.lt.s32.totalorder %s18, 9
    %p325 = pnand %p323, %p324
    %p326 = pneg %p325
    // Predicated region
    $region9: #{tpu_custom_call.1} parent=5 // pred_check
      _
    $region10: #{tpu_custom_call.1} parent=5 // pred_check_branch
      %328 = sbr.rel (%p325) target = $region12
    $region11: #{tpu_custom_call.1} parent=5 // pred_region
      %s329 = ssub.s32 %s18, 1
      // Predicated region
      $region13: #{tpu_custom_call.1} parent=11 // pred_check
        %p330 = pneg %p77
      $region14: #{tpu_custom_call.1} parent=11 // pred_check_branch
        %332 = sbr.rel (%p330) target = $region16
      $region15: #{tpu_custom_call.1} parent=11 // pred_region
        _
      $region16: #{tpu_custom_call.1} parent=11 // pred_fallthru
        _
      // Predicated region
      $region17: #{tpu_custom_call.1} parent=11 // pred_check
        %p333 = pneg %p98
      $region18: #{tpu_custom_call.1} parent=11 // pred_check_branch
        %335 = sbr.rel (%p333) target = $region20
      $region19: #{tpu_custom_call.1} parent=11 // pred_region
        _
      $region20: #{tpu_custom_call.1} parent=11 // pred_fallthru
        _
      // Predicated region
      $region21: #{tpu_custom_call.1} parent=11 // pred_check
        %p336 = pneg %p119
      $region22: #{tpu_custom_call.1} parent=11 // pred_check_branch
        %338 = sbr.rel (%p336) target = $region24
      $region23: #{tpu_custom_call.1} parent=11 // pred_region
        _
      $region24: #{tpu_custom_call.1} parent=11 // pred_fallthru
        _
      // Predicated region
      $region25: #{tpu_custom_call.1} parent=11 // pred_check
        %p339 = pneg %p140
      $region26: #{tpu_custom_call.1} parent=11 // pred_check_branch
        %341 = sbr.rel (%p339) target = $region28
      $region27: #{tpu_custom_call.1} parent=11 // pred_region
        _
      $region28: #{tpu_custom_call.1} parent=11 // pred_fallthru
        _
      // Predicated region
      $region29: #{tpu_custom_call.1} parent=11 // pred_check
        %p342 = pneg %p161
      $region30: #{tpu_custom_call.1} parent=11 // pred_check_branch
        %344 = sbr.rel (%p342) target = $region32
      $region31: #{tpu_custom_call.1} parent=11 // pred_region
        _
      $region32: #{tpu_custom_call.1} parent=11 // pred_fallthru
        _
      // Predicated region
      $region33: #{tpu_custom_call.1} parent=11 // pred_check
        %p345 = pneg %p182
      $region34: #{tpu_custom_call.1} parent=11 // pred_check_branch
        %347 = sbr.rel (%p345) target = $region36
      $region35: #{tpu_custom_call.1} parent=11 // pred_region
        _
      $region36: #{tpu_custom_call.1} parent=11 // pred_fallthru
        _
      // Predicated region
      $region37: #{tpu_custom_call.1} parent=11 // pred_check
        %p348 = pneg %p203
      $region38: #{tpu_custom_call.1} parent=11 // pred_check_branch
        %350 = sbr.rel (%p348) target = $region40
      $region39: #{tpu_custom_call.1} parent=11 // pred_region
        _
      $region40: #{tpu_custom_call.1} parent=11 // pred_fallthru
        _
      // Predicated region
      $region41: #{tpu_custom_call.1} parent=11 // pred_check
        %p351 = pneg %p224
      $region42: #{tpu_custom_call.1} parent=11 // pred_check_branch
        %353 = sbr.rel (%p351) target = $region44
      $region43: #{tpu_custom_call.1} parent=11 // pred_region
        _
      $region44: #{tpu_custom_call.1} parent=11 // pred_fallthru
        _
      // Predicated region
      $region45: #{tpu_custom_call.1} parent=11 // pred_check
        %p354 = pneg %p245
      $region46: #{tpu_custom_call.1} parent=11 // pred_check_branch
        %356 = sbr.rel (%p354) target = $region48
      $region47: #{tpu_custom_call.1} parent=11 // pred_region
        _
      $region48: #{tpu_custom_call.1} parent=11 // pred_fallthru
        _
      // Predicated region
      $region49: #{tpu_custom_call.1} parent=11 // pred_check
        %p357 = pneg %p266
      $region50: #{tpu_custom_call.1} parent=11 // pred_check_branch
        %359 = sbr.rel (%p357) target = $region52
      $region51: #{tpu_custom_call.1} parent=11 // pred_region
        _
      $region52: #{tpu_custom_call.1} parent=11 // pred_fallthru
        _
      // Predicated region
      $region53: #{tpu_custom_call.1} parent=11 // pred_check
        %p360 = pneg %p287
      $region54: #{tpu_custom_call.1} parent=11 // pred_check_branch
        %362 = sbr.rel (%p360) target = $region56
      $region55: #{tpu_custom_call.1} parent=11 // pred_region
        _
      $region56: #{tpu_custom_call.1} parent=11 // pred_fallthru
        _
    $region12: #{tpu_custom_call.1} parent=5 // pred_fallthru
      _
    %p363 = scmp.lt.s32.totalorder %s18, 8
    // Predicated region
    $region57: #{tpu_custom_call.1} parent=5 // pred_check
      %p364 = pneg %p363
    $region58: #{tpu_custom_call.1} parent=5 // pred_check_branch
      %366 = sbr.rel (%p364) target = $region60
    $region59: #{tpu_custom_call.1} parent=5 // pred_region
      // Predicated region
      $region61: #{tpu_custom_call.1} parent=59 // pred_check
        %p367 = pneg %p50
      $region62: #{tpu_custom_call.1} parent=59 // pred_check_branch
        %369 = sbr.rel (%p367) target = $region64
      $region63: #{tpu_custom_call.1} parent=59 // pred_region
        %p370 = scmp.lt.s32.totalorder %s25, 1
        %s371 = scalar_select %p370, %s25, 1
        %s372 = smul.addr %s371, 128
        %s373 = smul.addr %s372, 8
        %s374 = scalar_lea.vmem %s0, %s373
      $region64: #{tpu_custom_call.1} parent=59 // pred_fallthru
        _
    $region60: #{tpu_custom_call.1} parent=5 // pred_fallthru
      _
    %p375 = scmp.le.s32.totalorder 1, %s18
    %p376 = scmp.lt.s32.totalorder %s18, 9
    %p377 = pnand %p375, %p376
    %p378 = pneg %p377
    // Predicated region
    $region65: #{tpu_custom_call.1} parent=5 // pred_check
      _
    $region66: #{tpu_custom_call.1} parent=5 // pred_check_branch
      %380 = sbr.rel (%p377) target = $region68
    $region67: #{tpu_custom_call.1} parent=5 // pred_region
      %s381 = ssub.s32 %s18, 1
      %p382 = scmp.lt.s32.totalorder %s27, 1
      %s383 = scalar_select %p382, %s27, 1
      %s384 = smul.addr %s383, 128
      %s385 = smul.addr %s384, 8
      %s386 = scalar_lea.vmem %s0, %s385
      %p387 = pneg %p56
      %p388 = pneg %p53
      %p389 = pneg %p77
      %p390 = pneg %p74
      %p391 = pneg %p98
      %p392 = pneg %p95
      %p393 = pneg %p119
      %p394 = pneg %p116
      %p395 = pneg %p140
      %p396 = pneg %p137
      %p397 = pneg %p161
      %p398 = pneg %p158
      %p399 = pneg %p182
      %p400 = pneg %p179
      %p401 = pneg %p203
      %p402 = pneg %p200
      %p403 = pneg %p224
      %p404 = pneg %p221
      %p405 = pneg %p245
      %p406 = pneg %p242
      %p407 = pneg %p266
      %p408 = pneg %p263
      %p409 = pneg %p287
      %p410 = pneg %p284
      %p411 = pneg %p315
      %p412 = pneg %p312
      %s413 = smul.u32 8, %s28
      %p414 = scmp.lt.s32.totalorder %s27, 1
      %s415 = scalar_select %p414, %s27, 1
      %p416 = scmp.lt.s32.totalorder %s413, 31
      %s417 = scalar_select %p416, %s413, 31
      %s418 = smul.addr %s417, 4
      %s419 = smul.addr %s415, 128
      %s420 = sadd.s32 %s418, %s419
      %s421 = smul.addr %s420, 8
      %s422 = scalar_lea.vmem %s12, %s421
      %p423 = scmp.lt.s32.totalorder %s27, 1
      %s424 = scalar_select %p423, %s27, 1
      %s425 = smul.addr %s424, 128
      %s426 = smul.addr %s425, 8
      %s427 = scalar_lea.vmem %s0, %s426
      %s428 = smul.u32 8, %s28
      %p429 = scmp.lt.s32.totalorder %s27, 1
      %s430 = scalar_select %p429, %s27, 1
      %p431 = scmp.lt.s32.totalorder %s428, 31
      %s432 = scalar_select %p431, %s428, 31
      %s433 = smul.addr %s432, 4
      %s434 = smul.addr %s430, 128
      %s435 = sadd.s32 %s433, %s434
      %s436 = smul.addr %s435, 8
      %s437 = scalar_lea.vmem %s12, %s436
      %s438 = smul.u32 8, %s28
      %s440 = smul.u32 %s28, 8
      %vm441 = vcmask 31744
      %442 = vst.msk [vmem:[#allocation2] sm:$0xff] %vm441, 0.0
      %443 = vst.msk [vmem:[#allocation2 + $0x8] sm:$0xff] %vm441, 0.0
      %444 = vst.msk [vmem:[#allocation2 + $0x10] sm:$0xff] %vm441, 0.0
      %445 = vst.msk [vmem:[#allocation2 + $0x18] sm:$0xff] %vm441, 0.0
      %446 = vst.msk [vmem:[#allocation2 + $0x20] sm:$0xff] %vm441, 0.0
      %447 = vst.msk [vmem:[#allocation2 + $0x28] sm:$0xff] %vm441, 0.0
      %448 = vst.msk [vmem:[#allocation2 + $0x30] sm:$0xff] %vm441, 0.0
      %449 = vst.msk [vmem:[#allocation2 + $0x38] sm:$0xff] %vm441, 0.0
      %450 = vst.msk [vmem:[#allocation2 + $0x40] sm:$0xff] %vm441, 0.0
      %451 = vst.msk [vmem:[#allocation2 + $0x48] sm:$0xff] %vm441, 0.0
      %452 = vst.msk [vmem:[#allocation2 + $0x50] sm:$0xff] %vm441, 0.0
      %453 = vst.msk [vmem:[#allocation2 + $0x58] sm:$0xff] %vm441, 0.0
      %454 = vst.msk [vmem:[#allocation2 + $0x60] sm:$0xff] %vm441, 0.0
      %455 = vst.msk [vmem:[#allocation2 + $0x68] sm:$0xff] %vm441, 0.0
      %456 = vst.msk [vmem:[#allocation2 + $0x70] sm:$0xff] %vm441, 0.0
      %457 = vst.msk [vmem:[#allocation2 + $0x78] sm:$0xff] %vm441, 0.0
      %458 = vst.msk [vmem:[#allocation2 + $0x80] sm:$0xff] %vm441, 0.0
      %459 = vst.msk [vmem:[#allocation2 + $0x88] sm:$0xff] %vm441, 0.0
      %460 = vst.msk [vmem:[#allocation2 + $0x90] sm:$0xff] %vm441, 0.0
      %461 = vst.msk [vmem:[#allocation2 + $0x98] sm:$0xff] %vm441, 0.0
      %462 = vst.msk [vmem:[#allocation2 + $0xa0] sm:$0xff] %vm441, 0.0
      %463 = vst.msk [vmem:[#allocation2 + $0xa8] sm:$0xff] %vm441, 0.0
      %464 = vst.msk [vmem:[#allocation2 + $0xb0] sm:$0xff] %vm441, 0.0
      %465 = vst.msk [vmem:[#allocation2 + $0xb8] sm:$0xff] %vm441, 0.0
      %466 = vst.msk [vmem:[#allocation2 + $0xc0] sm:$0xff] %vm441, 0.0
      %467 = vst.msk [vmem:[#allocation2 + $0xc8] sm:$0xff] %vm441, 0.0
      %468 = vst.msk [vmem:[#allocation2 + $0xd0] sm:$0xff] %vm441, 0.0
      %469 = vst.msk [vmem:[#allocation2 + $0xd8] sm:$0xff] %vm441, 0.0
      %470 = vst.msk [vmem:[#allocation2 + $0xe0] sm:$0xff] %vm441, 0.0
      %471 = vst.msk [vmem:[#allocation2 + $0xe8] sm:$0xff] %vm441, 0.0
      %472 = vst.msk [vmem:[#allocation2 + $0xf0] sm:$0xff] %vm441, 0.0
      %473 = vst.msk [vmem:[#allocation2 + $0xf8] sm:$0xff] %vm441, 0.0
      %474 = vst.msk [vmem:[#allocation2 + $0x100] sm:$0xff] %vm441, 0.0
      %475 = vst.msk [vmem:[#allocation2 + $0x108] sm:$0xff] %vm441, 0.0
      %476 = vst.msk [vmem:[#allocation2 + $0x110] sm:$0xff] %vm441, 0.0
      %477 = vst.msk [vmem:[#allocation2 + $0x118] sm:$0xff] %vm441, 0.0
      %478 = vst.msk [vmem:[#allocation2 + $0x120] sm:$0xff] %vm441, 0.0
      %479 = vst.msk [vmem:[#allocation2 + $0x128] sm:$0xff] %vm441, 0.0
      %480 = vst.msk [vmem:[#allocation2 + $0x130] sm:$0xff] %vm441, 0.0
      %481 = vst.msk [vmem:[#allocation2 + $0x138] sm:$0xff] %vm441, 0.0
      %482 = vst.msk [vmem:[#allocation2 + $0x140] sm:$0xff] %vm441, 0.0
      %483 = vst.msk [vmem:[#allocation2 + $0x148] sm:$0xff] %vm441, 0.0
      %484 = vst.msk [vmem:[#allocation2 + $0x150] sm:$0xff] %vm441, 0.0
      %485 = vst.msk [vmem:[#allocation2 + $0x158] sm:$0xff] %vm441, 0.0
      %486 = vst.msk [vmem:[#allocation2 + $0x160] sm:$0xff] %vm441, 0.0
      %487 = vst.msk [vmem:[#allocation2 + $0x168] sm:$0xff] %vm441, 0.0
      %488 = vst.msk [vmem:[#allocation2 + $0x170] sm:$0xff] %vm441, 0.0
      %489 = vst.msk [vmem:[#allocation2 + $0x178] sm:$0xff] %vm441, 0.0
      %490 = vst.msk [vmem:[#allocation2 + $0x180] sm:$0xff] %vm441, 0.0
      %491 = vst.msk [vmem:[#allocation2 + $0x188] sm:$0xff] %vm441, 0.0
      %s492 = smul.u32 %s440, 32
      %s493 = scalar_lea.vmem %s427, %s492
      %v494 = vld [vmem:[%s493] sm:$0xff]
      %v495 = vld [vmem:[%s493 + $0x8] sm:$0xff]
      %v496 = vld [vmem:[%s493 + $0x10] sm:$0xff]
      %v497 = vld [vmem:[%s493 + $0x18] sm:$0xff]
      %v498 = vld [vmem:[%s493 + $0x20] sm:$0xff]
      %v499 = vld [vmem:[%s493 + $0x28] sm:$0xff]
      %v500 = vld [vmem:[%s493 + $0x30] sm:$0xff]
      %v501 = vld [vmem:[%s493 + $0x38] sm:$0xff]
      %v502 = vld [vmem:[%s493 + $0x40] sm:$0xff]
      %v503 = vld [vmem:[%s493 + $0x48] sm:$0xff]
      %v504 = vld [vmem:[%s493 + $0x50] sm:$0xff]
      %v505 = vld [vmem:[%s493 + $0x58] sm:$0xff]
      %v506 = vld [vmem:[%s493 + $0x60] sm:$0xff]
      %v507 = vld [vmem:[%s493 + $0x68] sm:$0xff]
      %v508 = vld [vmem:[%s493 + $0x70] sm:$0xff]
      %v509 = vld [vmem:[%s493 + $0x78] sm:$0xff]
      %v510 = vld [vmem:[%s493 + $0x80] sm:$0xff]
      %v511 = vld [vmem:[%s493 + $0x88] sm:$0xff]
      %v512 = vld [vmem:[%s493 + $0x90] sm:$0xff]
      %v513 = vld [vmem:[%s493 + $0x98] sm:$0xff]
      %v514 = vld [vmem:[%s493 + $0xa0] sm:$0xff]
      %v515 = vld [vmem:[%s493 + $0xa8] sm:$0xff]
      %v516 = vld [vmem:[%s493 + $0xb0] sm:$0xff]
      %v517 = vld [vmem:[%s493 + $0xb8] sm:$0xff]
      %v518 = vld [vmem:[%s493 + $0xc0] sm:$0xff]
      %v519 = vld [vmem:[%s493 + $0xc8] sm:$0xff]
      %v520 = vld [vmem:[%s493 + $0xd0] sm:$0xff]
      %v521 = vld [vmem:[%s493 + $0xd8] sm:$0xff]
      %v522 = vld [vmem:[%s493 + $0xe0] sm:$0xff]
      %v523 = vld [vmem:[%s493 + $0xe8] sm:$0xff]
      %v524 = vld [vmem:[%s493 + $0xf0] sm:$0xff]
      %v525 = vld [vmem:[%s493 + $0xf8] sm:$0xff]
      %v526 = vpack.c.bf16 %v495, %v494
      %v527 = vpack.c.bf16 %v497, %v496
      %v528 = vpack.c.bf16 %v499, %v498
      %v529 = vpack.c.bf16 %v501, %v500
      %v530 = vpack.c.bf16 %v503, %v502
      %v531 = vpack.c.bf16 %v505, %v504
      %v532 = vpack.c.bf16 %v507, %v506
      %v533 = vpack.c.bf16 %v509, %v508
      %v534 = vpack.c.bf16 %v511, %v510
      %v535 = vpack.c.bf16 %v513, %v512
      %v536 = vpack.c.bf16 %v515, %v514
      %v537 = vpack.c.bf16 %v517, %v516
      %v538 = vpack.c.bf16 %v519, %v518
      %v539 = vpack.c.bf16 %v521, %v520
      %v540 = vpack.c.bf16 %v523, %v522
      %v541 = vpack.c.bf16 %v525, %v524
      %v542 = vld [vmem:[%s3] sm:$0x7]
      %vm543 = vcmask 39936
      %v545 = vsel %vm543, %v526, 0
      %v548 = vsel %vm543, %v527, 0
      %v551 = vsel %vm543, %v528, 0
      %v554 = vsel %vm543, %v529, 0
      %v557 = vsel %vm543, %v530, 0
      %v560 = vsel %vm543, %v531, 0
      %v563 = vsel %vm543, %v532, 0
      %v566 = vsel %vm543, %v533, 0
      %v569 = vsel %vm543, %v534, 0
      %v572 = vsel %vm543, %v535, 0
      %v575 = vsel %vm543, %v536, 0
      %v578 = vsel %vm543, %v537, 0
      %v581 = vsel %vm543, %v538, 0
      %v584 = vsel %vm543, %v539, 0
      %v587 = vsel %vm543, %v540, 0
      %v590 = vsel %vm543, %v541, 0
      %vm592 = vcmask 1041408
      %vm593 = vcmask 1042432
      %v594 = vsel %vm592, 4294967295, 65535
      %v595 = vsel %vm593, %v594, 0
      %v597 = vand.u32 %v542, %v595
      %599 = vmatprep.subr.bf16.mxu0 0
      %600 = vmatpush1.bf16.msra.mxu0 0
      %601 = vmatprep.subr.bf16.mxu0 0
      %602 = vmatpush1.bf16.msra.mxu0 0
      %603 = vmatprep.subr.bf16.mxu0 0
      %604 = vmatpush1.bf16.msra.mxu0 0
      %605 = vmatprep.subr.bf16.mxu0 0
      %606 = vmatpush1.bf16.msra.mxu0 0
      %607 = vmatprep.subr.bf16.mxu0 0
      %608 = vmatpush1.bf16.msra.mxu0 0
      %609 = vmatprep.subr.bf16.mxu0 0
      %610 = vmatpush1.bf16.msra.mxu0 0
      %611 = vmatprep.subr.bf16.mxu0 0
      %612 = vmatpush1.bf16.msra.mxu0 0
      %613 = vmatprep.subr.bf16.mxu0 0
      %614 = vmatpush1.bf16.msra.mxu0 %v597
      %615 = vmatprep.subr.bf16.mxu0 0
      %616 = vmatpush2.bf16.msra.mxu0 0
      %617 = vmatprep.subr.bf16.mxu0 0
      %618 = vmatpush2.bf16.msra.mxu0 0
      %619 = vmatprep.subr.bf16.mxu0 0
      %620 = vmatpush2.bf16.msra.mxu0 0
      %621 = vmatprep.subr.bf16.mxu0 0
      %622 = vmatpush2.bf16.msra.mxu0 0
      %623 = vmatprep.subr.bf16.mxu0 0
      %624 = vmatpush2.bf16.msra.mxu0 0
      %625 = vmatprep.subr.bf16.mxu0 0
      %626 = vmatpush2.bf16.msra.mxu0 0
      %627 = vmatprep.subr.bf16.mxu0 0
      %628 = vmatpush2.bf16.msra.mxu0 0
      %629 = vmatprep.subr.bf16.mxu0 0
      %630 = vmatpush2.bf16.msra.mxu0 0
      %631 = vmatprep.mubr.bf16.mxu0 0
      %632 = vmatmul.mubr.bf16.gmra.mxu0 %v545
      %v633 = vpop.f32.mrf.mxu0
      %v634 = vadd.f32 0.0, %v633
      %v635 = vpop.f32.mrf.mxu0
      %v636 = vpop.f32.mrf.mxu0
      %v637 = vadd.f32 0.0, %v636
      %v638 = vpop.f32.mrf.mxu0
      %639 = vmatprep.mubr.bf16.mxu0 0
      %640 = vmatmul.mubr.bf16.gmra.mxu0 %v548
      %v641 = vpop.f32.mrf.mxu0
      %v642 = vadd.f32 0.0, %v641
      %v643 = vpop.f32.mrf.mxu0
      %v644 = vpop.f32.mrf.mxu0
      %v645 = vadd.f32 0.0, %v644
      %v646 = vpop.f32.mrf.mxu0
      %647 = vmatprep.mubr.bf16.mxu0 0
      %648 = vmatmul.mubr.bf16.gmra.mxu0 %v551
      %v649 = vpop.f32.mrf.mxu0
      %v650 = vadd.f32 0.0, %v649
      %v651 = vpop.f32.mrf.mxu0
      %v652 = vpop.f32.mrf.mxu0
      %v653 = vadd.f32 0.0, %v652
      %v654 = vpop.f32.mrf.mxu0
      %655 = vmatprep.mubr.bf16.mxu0 0
      %656 = vmatmul.mubr.bf16.gmra.mxu0 %v554
      %v657 = vpop.f32.mrf.mxu0
      %v658 = vadd.f32 0.0, %v657
      %v659 = vpop.f32.mrf.mxu0
      %v660 = vpop.f32.mrf.mxu0
      %v661 = vadd.f32 0.0, %v660
      %v662 = vpop.f32.mrf.mxu0
      %663 = vmatprep.mubr.bf16.mxu0 0
      %664 = vmatmul.mubr.bf16.gmra.mxu0 %v557
      %v665 = vpop.f32.mrf.mxu0
      %v666 = vadd.f32 0.0, %v665
      %v667 = vpop.f32.mrf.mxu0
      %v668 = vpop.f32.mrf.mxu0
      %v669 = vadd.f32 0.0, %v668
      %v670 = vpop.f32.mrf.mxu0
      %671 = vmatprep.mubr.bf16.mxu0 0
      %672 = vmatmul.mubr.bf16.gmra.mxu0 %v560
      %v673 = vpop.f32.mrf.mxu0
      %v674 = vadd.f32 0.0, %v673
      %v675 = vpop.f32.mrf.mxu0
      %v676 = vpop.f32.mrf.mxu0
      %v677 = vadd.f32 0.0, %v676
      %v678 = vpop.f32.mrf.mxu0
      %679 = vmatprep.mubr.bf16.mxu0 0
      %680 = vmatmul.mubr.bf16.gmra.mxu0 %v563
      %v681 = vpop.f32.mrf.mxu0
      %v682 = vadd.f32 0.0, %v681
      %v683 = vpop.f32.mrf.mxu0
      %v684 = vpop.f32.mrf.mxu0
      %v685 = vadd.f32 0.0, %v684
      %v686 = vpop.f32.mrf.mxu0
      %687 = vmatprep.mubr.bf16.mxu0 0
      %688 = vmatmul.mubr.bf16.gmra.mxu0 %v566
      %v689 = vpop.f32.mrf.mxu0
      %v690 = vadd.f32 0.0, %v689
      %v691 = vpop.f32.mrf.mxu0
      %v692 = vpop.f32.mrf.mxu0
      %v693 = vadd.f32 0.0, %v692
      %v694 = vpop.f32.mrf.mxu0
      %695 = vmatprep.mubr.bf16.mxu0 0
      %696 = vmatmul.mubr.bf16.gmra.mxu0 %v569
      %v697 = vpop.f32.mrf.mxu0
      %v698 = vadd.f32 0.0, %v697
      %v699 = vpop.f32.mrf.mxu0
      %v700 = vpop.f32.mrf.mxu0
      %v701 = vadd.f32 0.0, %v700
      %v702 = vpop.f32.mrf.mxu0
      %703 = vmatprep.mubr.bf16.mxu0 0
      %704 = vmatmul.mubr.bf16.gmra.mxu0 %v572
      %v705 = vpop.f32.mrf.mxu0
      %v706 = vadd.f32 0.0, %v705
      %v707 = vpop.f32.mrf.mxu0
      %v708 = vpop.f32.mrf.mxu0
      %v709 = vadd.f32 0.0, %v708
      %v710 = vpop.f32.mrf.mxu0
      %711 = vmatprep.mubr.bf16.mxu0 0
      %712 = vmatmul.mubr.bf16.gmra.mxu0 %v575
      %v713 = vpop.f32.mrf.mxu0
      %v714 = vadd.f32 0.0, %v713
      %v715 = vpop.f32.mrf.mxu0
      %v716 = vpop.f32.mrf.mxu0
      %v717 = vadd.f32 0.0, %v716
      %v718 = vpop.f32.mrf.mxu0
      %719 = vmatprep.mubr.bf16.mxu0 0
      %720 = vmatmul.mubr.bf16.gmra.mxu0 %v578
      %v721 = vpop.f32.mrf.mxu0
      %v722 = vadd.f32 0.0, %v721
      %v723 = vpop.f32.mrf.mxu0
      %v724 = vpop.f32.mrf.mxu0
      %v725 = vadd.f32 0.0, %v724
      %v726 = vpop.f32.mrf.mxu0
      %727 = vmatprep.mubr.bf16.mxu0 0
      %728 = vmatmul.mubr.bf16.gmra.mxu0 %v581
      %v729 = vpop.f32.mrf.mxu0
      %v730 = vadd.f32 0.0, %v729
      %v731 = vpop.f32.mrf.mxu0
      %v732 = vpop.f32.mrf.mxu0
      %v733 = vadd.f32 0.0, %v732
      %v734 = vpop.f32.mrf.mxu0
      %735 = vmatprep.mubr.bf16.mxu0 0
      %736 = vmatmul.mubr.bf16.gmra.mxu0 %v584
      %v737 = vpop.f32.mrf.mxu0
      %v738 = vadd.f32 0.0, %v737
      %v739 = vpop.f32.mrf.mxu0
      %v740 = vpop.f32.mrf.mxu0
      %v741 = vadd.f32 0.0, %v740
      %v742 = vpop.f32.mrf.mxu0
      %743 = vmatprep.mubr.bf16.mxu0 0
      %744 = vmatmul.mubr.bf16.gmra.mxu0 %v587
      %v745 = vpop.f32.mrf.mxu0
      %v746 = vadd.f32 0.0, %v745
      %v747 = vpop.f32.mrf.mxu0
      %v748 = vpop.f32.mrf.mxu0
      %v749 = vadd.f32 0.0, %v748
      %v750 = vpop.f32.mrf.mxu0
      %751 = vmatprep.mubr.bf16.mxu0 0
      %752 = vmatmul.mubr.bf16.gmra.mxu0 %v590
      %v753 = vpop.f32.mrf.mxu0
      %v754 = vadd.f32 0.0, %v753
      %v755 = vpop.f32.mrf.mxu0
      %v756 = vpop.f32.mrf.mxu0
      %v757 = vadd.f32 0.0, %v756
      %v758 = vpop.f32.mrf.mxu0
      %759 = vdwg.mxu0
      %v760 = vld [vmem:[%s4] sm:$0x1]
      %v762 = vlaneseq
      %v763 = vshrl.u32 %v762, 7
      %v764 = vsub.s32 0, %v763
      %v765 = vrot.slane %v760, %v764
      %v767 = vmul.f32 %v634, %v765
      %v768 = vmul.f32 %v637, %v765
      %v769 = vmul.f32 %v642, %v765
      %v770 = vmul.f32 %v645, %v765
      %v771 = vmul.f32 %v650, %v765
      %v772 = vmul.f32 %v653, %v765
      %v773 = vmul.f32 %v658, %v765
      %v774 = vmul.f32 %v661, %v765
      %v775 = vmul.f32 %v666, %v765
      %v776 = vmul.f32 %v669, %v765
      %v777 = vmul.f32 %v674, %v765
      %v778 = vmul.f32 %v677, %v765
      %v779 = vmul.f32 %v682, %v765
      %v780 = vmul.f32 %v685, %v765
      %v781 = vmul.f32 %v690, %v765
      %v782 = vmul.f32 %v693, %v765
      %v783 = vmul.f32 %v698, %v765
      %v784 = vmul.f32 %v701, %v765
      %v785 = vmul.f32 %v706, %v765
      %v786 = vmul.f32 %v709, %v765
      %v787 = vmul.f32 %v714, %v765
      %v788 = vmul.f32 %v717, %v765
      %v789 = vmul.f32 %v722, %v765
      %v790 = vmul.f32 %v725, %v765
      %v791 = vmul.f32 %v730, %v765
      %v792 = vmul.f32 %v733, %v765
      %v793 = vmul.f32 %v738, %v765
      %v794 = vmul.f32 %v741, %v765
      %v795 = vmul.f32 %v746, %v765
      %v796 = vmul.f32 %v749, %v765
      %v797 = vmul.f32 %v754, %v765
      %v798 = vmul.f32 %v757, %v765
      %v799 = vld [vmem:[%s5] sm:$0x1]
      %v801 = vlaneseq
      %v802 = vshrl.u32 %v801, 7
      %v803 = vsub.s32 0, %v802
      %v804 = vrot.slane %v799, %v803
      %v806 = vadd.f32 %v767, %v804
      %v807 = vadd.f32 %v768, %v804
      %v808 = vadd.f32 %v769, %v804
      %v809 = vadd.f32 %v770, %v804
      %v810 = vadd.f32 %v771, %v804
      %v811 = vadd.f32 %v772, %v804
      %v812 = vadd.f32 %v773, %v804
      %v813 = vadd.f32 %v774, %v804
      %v814 = vadd.f32 %v775, %v804
      %v815 = vadd.f32 %v776, %v804
      %v816 = vadd.f32 %v777, %v804
      %v817 = vadd.f32 %v778, %v804
      %v818 = vadd.f32 %v779, %v804
      %v819 = vadd.f32 %v780, %v804
      %v820 = vadd.f32 %v781, %v804
      %v821 = vadd.f32 %v782, %v804
      %v822 = vadd.f32 %v783, %v804
      %v823 = vadd.f32 %v784, %v804
      %v824 = vadd.f32 %v785, %v804
      %v825 = vadd.f32 %v786, %v804
      %v826 = vadd.f32 %v787, %v804
      %v827 = vadd.f32 %v788, %v804
      %v828 = vadd.f32 %v789, %v804
      %v829 = vadd.f32 %v790, %v804
      %v830 = vadd.f32 %v791, %v804
      %v831 = vadd.f32 %v792, %v804
      %v832 = vadd.f32 %v793, %v804
      %v833 = vadd.f32 %v794, %v804
      %v834 = vadd.f32 %v795, %v804
      %v835 = vadd.f32 %v796, %v804
      %v836 = vadd.f32 %v797, %v804
      %v837 = vadd.f32 %v798, %v804
      %v838 = vmax.f32 %v806, 0.0
      %v839 = vmax.f32 %v807, 0.0
      %v840 = vmax.f32 %v808, 0.0
      %v841 = vmax.f32 %v809, 0.0
      %v842 = vmax.f32 %v810, 0.0
      %v843 = vmax.f32 %v811, 0.0
      %v844 = vmax.f32 %v812, 0.0
      %v845 = vmax.f32 %v813, 0.0
      %v846 = vmax.f32 %v814, 0.0
      %v847 = vmax.f32 %v815, 0.0
      %v848 = vmax.f32 %v816, 0.0
      %v849 = vmax.f32 %v817, 0.0
      %v850 = vmax.f32 %v818, 0.0
      %v851 = vmax.f32 %v819, 0.0
      %v852 = vmax.f32 %v820, 0.0
      %v853 = vmax.f32 %v821, 0.0
      %v854 = vmax.f32 %v822, 0.0
      %v855 = vmax.f32 %v823, 0.0
      %v856 = vmax.f32 %v824, 0.0
      %v857 = vmax.f32 %v825, 0.0
      %v858 = vmax.f32 %v826, 0.0
      %v859 = vmax.f32 %v827, 0.0
      %v860 = vmax.f32 %v828, 0.0
      %v861 = vmax.f32 %v829, 0.0
      %v862 = vmax.f32 %v830, 0.0
      %v863 = vmax.f32 %v831, 0.0
      %v864 = vmax.f32 %v832, 0.0
      %v865 = vmax.f32 %v833, 0.0
      %v866 = vmax.f32 %v834, 0.0
      %v867 = vmax.f32 %v835, 0.0
      %v868 = vmax.f32 %v836, 0.0
      %v869 = vmax.f32 %v837, 0.0
      %s870 = scalar_lea.vmem [#allocation2], 40
      %871 = vst.msk [vmem:[%s870 + $0x1] sm:$0xff] %vm441, %v838
      %872 = vst.msk [vmem:[%s870 + $0x9] sm:$0xff] %vm441, %v839
      %873 = vst.msk [vmem:[%s870 + $0x11] sm:$0xff] %vm441, %v840
      %874 = vst.msk [vmem:[%s870 + $0x19] sm:$0xff] %vm441, %v841
      %875 = vst.msk [vmem:[%s870 + $0x29] sm:$0xff] %vm441, %v842
      %876 = vst.msk [vmem:[%s870 + $0x31] sm:$0xff] %vm441, %v843
      %877 = vst.msk [vmem:[%s870 + $0x39] sm:$0xff] %vm441, %v844
      %878 = vst.msk [vmem:[%s870 + $0x41] sm:$0xff] %vm441, %v845
      %879 = vst.msk [vmem:[%s870 + $0x51] sm:$0xff] %vm441, %v846
      %880 = vst.msk [vmem:[%s870 + $0x59] sm:$0xff] %vm441, %v847
      %881 = vst.msk [vmem:[%s870 + $0x61] sm:$0xff] %vm441, %v848
      %882 = vst.msk [vmem:[%s870 + $0x69] sm:$0xff] %vm441, %v849
      %883 = vst.msk [vmem:[%s870 + $0x79] sm:$0xff] %vm441, %v850
      %884 = vst.msk [vmem:[%s870 + $0x81] sm:$0xff] %vm441, %v851
      %885 = vst.msk [vmem:[%s870 + $0x89] sm:$0xff] %vm441, %v852
      %886 = vst.msk [vmem:[%s870 + $0x91] sm:$0xff] %vm441, %v853
      %887 = vst.msk [vmem:[%s870 + $0xa1] sm:$0xff] %vm441, %v854
      %888 = vst.msk [vmem:[%s870 + $0xa9] sm:$0xff] %vm441, %v855
      %889 = vst.msk [vmem:[%s870 + $0xb1] sm:$0xff] %vm441, %v856
      %890 = vst.msk [vmem:[%s870 + $0xb9] sm:$0xff] %vm441, %v857
      %891 = vst.msk [vmem:[%s870 + $0xc9] sm:$0xff] %vm441, %v858
      %892 = vst.msk [vmem:[%s870 + $0xd1] sm:$0xff] %vm441, %v859
      %893 = vst.msk [vmem:[%s870 + $0xd9] sm:$0xff] %vm441, %v860
      %894 = vst.msk [vmem:[%s870 + $0xe1] sm:$0xff] %vm441, %v861
      %895 = vst.msk [vmem:[%s870 + $0xf1] sm:$0xff] %vm441, %v862
      %896 = vst.msk [vmem:[%s870 + $0xf9] sm:$0xff] %vm441, %v863
      %897 = vst.msk [vmem:[%s870 + $0x101] sm:$0xff] %vm441, %v864
      %898 = vst.msk [vmem:[%s870 + $0x109] sm:$0xff] %vm441, %v865
      %899 = vst.msk [vmem:[%s870 + $0x119] sm:$0xff] %vm441, %v866
      %900 = vst.msk [vmem:[%s870 + $0x121] sm:$0xff] %vm441, %v867
      %901 = vst.msk [vmem:[%s870 + $0x129] sm:$0xff] %vm441, %v868
      %902 = vst.msk [vmem:[%s870 + $0x131] sm:$0xff] %vm441, %v869
      %p903 = scmp.gt.s32.totalorder %s28, 0
      // Predicated region
      $region69: #{tpu_custom_call.1} parent=67 // pred_check
        %p904 = pneg %p903
      $region70: #{tpu_custom_call.1} parent=67 // pred_check_branch
        %906 = sbr.rel (%p904) target = $region72
      $region71: #{tpu_custom_call.1} parent=67 // pred_region
        %s907 = ssub.s32 %s440, 1
        %s908 = smul.u32 %s907, 32
        %s909 = scalar_lea.vmem %s427, %s908
        %v910 = vld [vmem:[%s909] sm:$0xff]
        %v911 = vld [vmem:[%s909 + $0x8] sm:$0xff]
        %v912 = vld [vmem:[%s909 + $0x10] sm:$0xff]
        %v913 = vld [vmem:[%s909 + $0x18] sm:$0xff]
        %v914 = vpack.c.bf16 %v911, %v910
        %v915 = vpack.c.bf16 %v913, %v912
        %v916 = vld [vmem:[%s3] sm:$0x7]
        %v918 = vsel %vm543, %v914, 0
        %v921 = vsel %vm543, %v915, 0
        %v924 = vand.u32 %v916, %v595
        %926 = vmatprep.subr.bf16.mxu0 0
        %927 = vmatpush1.bf16.msra.mxu0 0
        %928 = vmatprep.subr.bf16.mxu0 0
        %929 = vmatpush1.bf16.msra.mxu0 0
        %930 = vmatprep.subr.bf16.mxu0 0
        %931 = vmatpush1.bf16.msra.mxu0 0
        %932 = vmatprep.subr.bf16.mxu0 0
        %933 = vmatpush1.bf16.msra.mxu0 0
        %934 = vmatprep.subr.bf16.mxu0 0
        %935 = vmatpush1.bf16.msra.mxu0 0
        %936 = vmatprep.subr.bf16.mxu0 0
        %937 = vmatpush1.bf16.msra.mxu0 0
        %938 = vmatprep.subr.bf16.mxu0 0
        %939 = vmatpush1.bf16.msra.mxu0 0
        %940 = vmatprep.subr.bf16.mxu0 0
        %941 = vmatpush1.bf16.msra.mxu0 %v924
        %942 = vmatprep.subr.bf16.mxu0 0
        %943 = vmatpush2.bf16.msra.mxu0 0
        %944 = vmatprep.subr.bf16.mxu0 0
        %945 = vmatpush2.bf16.msra.mxu0 0
        %946 = vmatprep.subr.bf16.mxu0 0
        %947 = vmatpush2.bf16.msra.mxu0 0
        %948 = vmatprep.subr.bf16.mxu0 0
        %949 = vmatpush2.bf16.msra.mxu0 0
        %950 = vmatprep.subr.bf16.mxu0 0
        %951 = vmatpush2.bf16.msra.mxu0 0
        %952 = vmatprep.subr.bf16.mxu0 0
        %953 = vmatpush2.bf16.msra.mxu0 0
        %954 = vmatprep.subr.bf16.mxu0 0
        %955 = vmatpush2.bf16.msra.mxu0 0
        %956 = vmatprep.subr.bf16.mxu0 0
        %957 = vmatpush2.bf16.msra.mxu0 0
        %958 = vmatprep.mubr.bf16.mxu0 0
        %959 = vmatmul.mubr.bf16.gmra.mxu0 %v918
        %v960 = vpop.f32.mrf.mxu0
        %v961 = vadd.f32 0.0, %v960
        %v962 = vpop.f32.mrf.mxu0
        %v963 = vpop.f32.mrf.mxu0
        %v964 = vadd.f32 0.0, %v963
        %v965 = vpop.f32.mrf.mxu0
        %966 = vmatprep.mubr.bf16.mxu0 0
        %967 = vmatmul.mubr.bf16.gmra.mxu0 %v921
        %v968 = vpop.f32.mrf.mxu0
        %v969 = vadd.f32 0.0, %v968
        %v970 = vpop.f32.mrf.mxu0
        %v971 = vpop.f32.mrf.mxu0
        %v972 = vadd.f32 0.0, %v971
        %v973 = vpop.f32.mrf.mxu0
        %974 = vdwg.mxu0
        %v975 = vld [vmem:[%s4] sm:$0x1]
        %v977 = vlaneseq
        %v978 = vshrl.u32 %v977, 7
        %v979 = vsub.s32 0, %v978
        %v980 = vrot.slane %v975, %v979
        %v982 = vmul.f32 %v961, %v980
        %v983 = vmul.f32 %v964, %v980
        %v984 = vmul.f32 %v969, %v980
        %v985 = vmul.f32 %v972, %v980
        %v986 = vld [vmem:[%s5] sm:$0x1]
        %v988 = vlaneseq
        %v989 = vshrl.u32 %v988, 7
        %v990 = vsub.s32 0, %v989
        %v991 = vrot.slane %v986, %v990
        %v993 = vadd.f32 %v982, %v991
        %v994 = vadd.f32 %v983, %v991
        %v995 = vadd.f32 %v984, %v991
        %v996 = vadd.f32 %v985, %v991
        %v997 = vmax.f32 %v993, 0.0
        %v998 = vmax.f32 %v994, 0.0
        %v999 = vmax.f32 %v995, 0.0
        %v1000 = vmax.f32 %v996, 0.0
        %1001 = vst.msk [vmem:[#allocation2 + $0x1] sm:$0xff] %vm441, %v997
        %1002 = vst.msk [vmem:[#allocation2 + $0x9] sm:$0xff] %vm441, %v998
        %1003 = vst.msk [vmem:[#allocation2 + $0x11] sm:$0xff] %vm441, %v999
        %1004 = vst.msk [vmem:[#allocation2 + $0x19] sm:$0xff] %vm441, %v1000
      $region72: #{tpu_custom_call.1} parent=67 // pred_fallthru
        _
      %p1005 = scmp.lt.s32.totalorder %s28, 3
      // Predicated region
      $region73: #{tpu_custom_call.1} parent=67 // pred_check
        %p1006 = pneg %p1005
      $region74: #{tpu_custom_call.1} parent=67 // pred_check_branch
        %1008 = sbr.rel (%p1006) target = $region76
      $region75: #{tpu_custom_call.1} parent=67 // pred_region
        %s1009 = sadd.s32 %s440, 8
        %s1010 = smul.u32 %s1009, 32
        %s1011 = scalar_lea.vmem %s427, %s1010
        %v1012 = vld [vmem:[%s1011] sm:$0xff]
        %v1013 = vld [vmem:[%s1011 + $0x8] sm:$0xff]
        %v1014 = vld [vmem:[%s1011 + $0x10] sm:$0xff]
        %v1015 = vld [vmem:[%s1011 + $0x18] sm:$0xff]
        %v1016 = vpack.c.bf16 %v1013, %v1012
        %v1017 = vpack.c.bf16 %v1015, %v1014
        %v1018 = vld [vmem:[%s3] sm:$0x7]
        %v1020 = vsel %vm543, %v1016, 0
        %v1023 = vsel %vm543, %v1017, 0
        %v1026 = vand.u32 %v1018, %v595
        %1028 = vmatprep.subr.bf16.mxu0 0
        %1029 = vmatpush1.bf16.msra.mxu0 0
        %1030 = vmatprep.subr.bf16.mxu0 0
        %1031 = vmatpush1.bf16.msra.mxu0 0
        %1032 = vmatprep.subr.bf16.mxu0 0
        %1033 = vmatpush1.bf16.msra.mxu0 0
        %1034 = vmatprep.subr.bf16.mxu0 0
        %1035 = vmatpush1.bf16.msra.mxu0 0
        %1036 = vmatprep.subr.bf16.mxu0 0
        %1037 = vmatpush1.bf16.msra.mxu0 0
        %1038 = vmatprep.subr.bf16.mxu0 0
        %1039 = vmatpush1.bf16.msra.mxu0 0
        %1040 = vmatprep.subr.bf16.mxu0 0
        %1041 = vmatpush1.bf16.msra.mxu0 0
        %1042 = vmatprep.subr.bf16.mxu0 0
        %1043 = vmatpush1.bf16.msra.mxu0 %v1026
        %1044 = vmatprep.subr.bf16.mxu0 0
        %1045 = vmatpush2.bf16.msra.mxu0 0
        %1046 = vmatprep.subr.bf16.mxu0 0
        %1047 = vmatpush2.bf16.msra.mxu0 0
        %1048 = vmatprep.subr.bf16.mxu0 0
        %1049 = vmatpush2.bf16.msra.mxu0 0
        %1050 = vmatprep.subr.bf16.mxu0 0
        %1051 = vmatpush2.bf16.msra.mxu0 0
        %1052 = vmatprep.subr.bf16.mxu0 0
        %1053 = vmatpush2.bf16.msra.mxu0 0
        %1054 = vmatprep.subr.bf16.mxu0 0
        %1055 = vmatpush2.bf16.msra.mxu0 0
        %1056 = vmatprep.subr.bf16.mxu0 0
        %1057 = vmatpush2.bf16.msra.mxu0 0
        %1058 = vmatprep.subr.bf16.mxu0 0
        %1059 = vmatpush2.bf16.msra.mxu0 0
        %1060 = vmatprep.mubr.bf16.mxu0 0
        %1061 = vmatmul.mubr.bf16.gmra.mxu0 %v1020
        %v1062 = vpop.f32.mrf.mxu0
        %v1063 = vadd.f32 0.0, %v1062
        %v1064 = vpop.f32.mrf.mxu0
        %v1065 = vpop.f32.mrf.mxu0
        %v1066 = vadd.f32 0.0, %v1065
        %v1067 = vpop.f32.mrf.mxu0
        %1068 = vmatprep.mubr.bf16.mxu0 0
        %1069 = vmatmul.mubr.bf16.gmra.mxu0 %v1023
        %v1070 = vpop.f32.mrf.mxu0
        %v1071 = vadd.f32 0.0, %v1070
        %v1072 = vpop.f32.mrf.mxu0
        %v1073 = vpop.f32.mrf.mxu0
        %v1074 = vadd.f32 0.0, %v1073
        %v1075 = vpop.f32.mrf.mxu0
        %1076 = vdwg.mxu0
        %v1077 = vld [vmem:[%s4] sm:$0x1]
        %v1079 = vlaneseq
        %v1080 = vshrl.u32 %v1079, 7
        %v1081 = vsub.s32 0, %v1080
        %v1082 = vrot.slane %v1077, %v1081
        %v1084 = vmul.f32 %v1063, %v1082
        %v1085 = vmul.f32 %v1066, %v1082
        %v1086 = vmul.f32 %v1071, %v1082
        %v1087 = vmul.f32 %v1074, %v1082
        %v1088 = vld [vmem:[%s5] sm:$0x1]
        %v1090 = vlaneseq
        %v1091 = vshrl.u32 %v1090, 7
        %v1092 = vsub.s32 0, %v1091
        %v1093 = vrot.slane %v1088, %v1092
        %v1095 = vadd.f32 %v1084, %v1093
        %v1096 = vadd.f32 %v1085, %v1093
        %v1097 = vadd.f32 %v1086, %v1093
        %v1098 = vadd.f32 %v1087, %v1093
        %v1099 = vmax.f32 %v1095, 0.0
        %v1100 = vmax.f32 %v1096, 0.0
        %v1101 = vmax.f32 %v1097, 0.0
        %v1102 = vmax.f32 %v1098, 0.0
        %s1103 = scalar_lea.vmem [#allocation2], 360
        %1104 = vst.msk [vmem:[%s1103 + $0x1] sm:$0xff] %vm441, %v1099
        %1105 = vst.msk [vmem:[%s1103 + $0x9] sm:$0xff] %vm441, %v1100
        %1106 = vst.msk [vmem:[%s1103 + $0x11] sm:$0xff] %vm441, %v1101
        %1107 = vst.msk [vmem:[%s1103 + $0x19] sm:$0xff] %vm441, %v1102
      $region76: #{tpu_custom_call.1} parent=67 // pred_fallthru
        _
      %v1108 = vld [vmem:[#allocation2] sm:$0xff]
      %v1109 = vld [vmem:[#allocation2 + $0x8] sm:$0xff]
      %v1110 = vld [vmem:[#allocation2 + $0x10] sm:$0xff]
      %v1111 = vld [vmem:[#allocation2 + $0x18] sm:$0xff]
      %v1112 = vld [vmem:[#allocation2 + $0x20] sm:$0xff]
      %v1113 = vld [vmem:[#allocation2 + $0x28] sm:$0xff]
      %v1114 = vld [vmem:[#allocation2 + $0x30] sm:$0xff]
      %v1115 = vld [vmem:[#allocation2 + $0x38] sm:$0xff]
      %v1116 = vld [vmem:[#allocation2 + $0x40] sm:$0xff]
      %v1117 = vld [vmem:[#allocation2 + $0x48] sm:$0xff]
      %v1118 = vld [vmem:[#allocation2 + $0x50] sm:$0xff]
      %v1119 = vld [vmem:[#allocation2 + $0x58] sm:$0xff]
      %v1120 = vld [vmem:[#allocation2 + $0x60] sm:$0xff]
      %v1121 = vld [vmem:[#allocation2 + $0x68] sm:$0xff]
      %v1122 = vld [vmem:[#allocation2 + $0x70] sm:$0xff]
      %v1123 = vld [vmem:[#allocation2 + $0x78] sm:$0xff]
      %v1124 = vld [vmem:[#allocation2 + $0x80] sm:$0xff]
      %v1125 = vld [vmem:[#allocation2 + $0x88] sm:$0xff]
      %v1126 = vld [vmem:[#allocation2 + $0x90] sm:$0xff]
      %v1127 = vld [vmem:[#allocation2 + $0x98] sm:$0xff]
      %v1128 = vld [vmem:[#allocation2 + $0xa0] sm:$0xff]
      %v1129 = vld [vmem:[#allocation2 + $0xa8] sm:$0xff]
      %v1130 = vld [vmem:[#allocation2 + $0xb0] sm:$0xff]
      %v1131 = vld [vmem:[#allocation2 + $0xb8] sm:$0xff]
      %v1132 = vld [vmem:[#allocation2 + $0xc0] sm:$0xff]
      %v1133 = vld [vmem:[#allocation2 + $0xc8] sm:$0xff]
      %v1134 = vld [vmem:[#allocation2 + $0xd0] sm:$0xff]
      %v1135 = vld [vmem:[#allocation2 + $0xd8] sm:$0xff]
      %v1136 = vld [vmem:[#allocation2 + $0xe0] sm:$0xff]
      %v1137 = vld [vmem:[#allocation2 + $0xe8] sm:$0xff]
      %v1138 = vld [vmem:[#allocation2 + $0xf0] sm:$0xff]
      %v1139 = vld [vmem:[#allocation2 + $0xf8] sm:$0xff]
      %v1140 = vld [vmem:[#allocation2 + $0x100] sm:$0xff]
      %v1141 = vld [vmem:[#allocation2 + $0x108] sm:$0xff]
      %v1142 = vld [vmem:[#allocation2 + $0x110] sm:$0xff]
      %v1143 = vld [vmem:[#allocation2 + $0x118] sm:$0xff]
      %v1144 = vld [vmem:[#allocation2 + $0x120] sm:$0xff]
      %v1145 = vld [vmem:[#allocation2 + $0x128] sm:$0xff]
      %v1146 = vld [vmem:[#allocation2 + $0x130] sm:$0xff]
      %v1147 = vld [vmem:[#allocation2 + $0x138] sm:$0xff]
      %v1148 = vld [vmem:[#allocation2 + $0x140] sm:$0xff]
      %v1149 = vld [vmem:[#allocation2 + $0x148] sm:$0xff]
      %v1150 = vld [vmem:[#allocation2 + $0x150] sm:$0xff]
      %v1151 = vld [vmem:[#allocation2 + $0x158] sm:$0xff]
      %v1152 = vld [vmem:[#allocation2 + $0x160] sm:$0xff]
      %v1153 = vld [vmem:[#allocation2 + $0x168] sm:$0xff]
      %v1154 = vld [vmem:[#allocation2 + $0x170] sm:$0xff]
      %v1155 = vld [vmem:[#allocation2 + $0x178] sm:$0xff]
      %v1156 = vld [vmem:[#allocation2 + $0x180] sm:$0xff]
      %v1157 = vld [vmem:[#allocation2 + $0x188] sm:$0xff]
      %vm1198 = vcmask 1046528
      %v1199 = vrot.slane %v1108, 1
      %v1200 = vrot.slane %v1109, 1
      %v1201 = vsel %vm1198, %v1199, %v1200
      %v1202 = vrot.slane %v1110, 1
      %v1203 = vsel %vm1198, %v1200, %v1202
      %v1204 = vrot.slane %v1111, 1
      %v1205 = vsel %vm1198, %v1202, %v1204
      %v1206 = vrot.slane %v1112, 1
      %v1207 = vsel %vm1198, %v1204, %v1206
      %v1208 = vrot.slane %v1113, 1
      %v1209 = vrot.slane %v1114, 1
      %v1210 = vsel %vm1198, %v1208, %v1209
      %v1211 = vrot.slane %v1115, 1
      %v1212 = vsel %vm1198, %v1209, %v1211
      %v1213 = vrot.slane %v1116, 1
      %v1214 = vsel %vm1198, %v1211, %v1213
      %v1215 = vrot.slane %v1117, 1
      %v1216 = vsel %vm1198, %v1213, %v1215
      %v1217 = vrot.slane %v1118, 1
      %v1218 = vrot.slane %v1119, 1
      %v1219 = vsel %vm1198, %v1217, %v1218
      %v1220 = vrot.slane %v1120, 1
      %v1221 = vsel %vm1198, %v1218, %v1220
      %v1222 = vrot.slane %v1121, 1
      %v1223 = vsel %vm1198, %v1220, %v1222
      %v1224 = vrot.slane %v1122, 1
      %v1225 = vsel %vm1198, %v1222, %v1224
      %v1226 = vrot.slane %v1123, 1
      %v1227 = vrot.slane %v1124, 1
      %v1228 = vsel %vm1198, %v1226, %v1227
      %v1229 = vrot.slane %v1125, 1
      %v1230 = vsel %vm1198, %v1227, %v1229
      %v1231 = vrot.slane %v1126, 1
      %v1232 = vsel %vm1198, %v1229, %v1231
      %v1233 = vrot.slane %v1127, 1
      %v1234 = vsel %vm1198, %v1231, %v1233
      %v1235 = vrot.slane %v1128, 1
      %v1236 = vrot.slane %v1129, 1
      %v1237 = vsel %vm1198, %v1235, %v1236
      %v1238 = vrot.slane %v1130, 1
      %v1239 = vsel %vm1198, %v1236, %v1238
      %v1240 = vrot.slane %v1131, 1
      %v1241 = vsel %vm1198, %v1238, %v1240
      %v1242 = vrot.slane %v1132, 1
      %v1243 = vsel %vm1198, %v1240, %v1242
      %v1244 = vrot.slane %v1133, 1
      %v1245 = vrot.slane %v1134, 1
      %v1246 = vsel %vm1198, %v1244, %v1245
      %v1247 = vrot.slane %v1135, 1
      %v1248 = vsel %vm1198, %v1245, %v1247
      %v1249 = vrot.slane %v1136, 1
      %v1250 = vsel %vm1198, %v1247, %v1249
      %v1251 = vrot.slane %v1137, 1
      %v1252 = vsel %vm1198, %v1249, %v1251
      %v1253 = vrot.slane %v1138, 1
      %v1254 = vrot.slane %v1139, 1
      %v1255 = vsel %vm1198, %v1253, %v1254
      %v1256 = vrot.slane %v1140, 1
      %v1257 = vsel %vm1198, %v1254, %v1256
      %v1258 = vrot.slane %v1141, 1
      %v1259 = vsel %vm1198, %v1256, %v1258
      %v1260 = vrot.slane %v1142, 1
      %v1261 = vsel %vm1198, %v1258, %v1260
      %v1262 = vrot.slane %v1143, 1
      %v1263 = vrot.slane %v1144, 1
      %v1264 = vsel %vm1198, %v1262, %v1263
      %v1265 = vrot.slane %v1145, 1
      %v1266 = vsel %vm1198, %v1263, %v1265
      %v1267 = vrot.slane %v1146, 1
      %v1268 = vsel %vm1198, %v1265, %v1267
      %v1269 = vrot.slane %v1147, 1
      %v1270 = vsel %vm1198, %v1267, %v1269
      %1271 = vrot.lane.b32.xlu0 %v1201, 4
      %v1272 = vpop.permute.xlu0 %1271
      %1273 = vrot.lane.b32.xlu0 %v1203, 4
      %v1274 = vpop.permute.xlu0 %1273
      %1275 = vrot.lane.b32.xlu0 %v1205, 4
      %v1276 = vpop.permute.xlu0 %1275
      %1277 = vrot.lane.b32.xlu0 %v1207, 4
      %v1278 = vpop.permute.xlu0 %1277
      %1279 = vrot.lane.b32.xlu0 %v1210, 4
      %v1280 = vpop.permute.xlu0 %1279
      %1281 = vrot.lane.b32.xlu0 %v1212, 4
      %v1282 = vpop.permute.xlu0 %1281
      %1283 = vrot.lane.b32.xlu0 %v1214, 4
      %v1284 = vpop.permute.xlu0 %1283
      %1285 = vrot.lane.b32.xlu0 %v1216, 4
      %v1286 = vpop.permute.xlu0 %1285
      %1287 = vrot.lane.b32.xlu0 %v1219, 4
      %v1288 = vpop.permute.xlu0 %1287
      %1289 = vrot.lane.b32.xlu0 %v1221, 4
      %v1290 = vpop.permute.xlu0 %1289
      %1291 = vrot.lane.b32.xlu0 %v1223, 4
      %v1292 = vpop.permute.xlu0 %1291
      %1293 = vrot.lane.b32.xlu0 %v1225, 4
      %v1294 = vpop.permute.xlu0 %1293
      %1295 = vrot.lane.b32.xlu0 %v1228, 4
      %v1296 = vpop.permute.xlu0 %1295
      %1297 = vrot.lane.b32.xlu0 %v1230, 4
      %v1298 = vpop.permute.xlu0 %1297
      %1299 = vrot.lane.b32.xlu0 %v1232, 4
      %v1300 = vpop.permute.xlu0 %1299
      %1301 = vrot.lane.b32.xlu0 %v1234, 4
      %v1302 = vpop.permute.xlu0 %1301
      %1303 = vrot.lane.b32.xlu0 %v1237, 4
      %v1304 = vpop.permute.xlu0 %1303
      %1305 = vrot.lane.b32.xlu0 %v1239, 4
      %v1306 = vpop.permute.xlu0 %1305
      %1307 = vrot.lane.b32.xlu0 %v1241, 4
      %v1308 = vpop.permute.xlu0 %1307
      %1309 = vrot.lane.b32.xlu0 %v1243, 4
      %v1310 = vpop.permute.xlu0 %1309
      %1311 = vrot.lane.b32.xlu0 %v1246, 4
      %v1312 = vpop.permute.xlu0 %1311
      %1313 = vrot.lane.b32.xlu0 %v1248, 4
      %v1314 = vpop.permute.xlu0 %1313
      %1315 = vrot.lane.b32.xlu0 %v1250, 4
      %v1316 = vpop.permute.xlu0 %1315
      %1317 = vrot.lane.b32.xlu0 %v1252, 4
      %v1318 = vpop.permute.xlu0 %1317
      %1319 = vrot.lane.b32.xlu0 %v1255, 4
      %v1320 = vpop.permute.xlu0 %1319
      %1321 = vrot.lane.b32.xlu0 %v1257, 4
      %v1322 = vpop.permute.xlu0 %1321
      %1323 = vrot.lane.b32.xlu0 %v1259, 4
      %v1324 = vpop.permute.xlu0 %1323
      %1325 = vrot.lane.b32.xlu0 %v1261, 4
      %v1326 = vpop.permute.xlu0 %1325
      %1327 = vrot.lane.b32.xlu0 %v1264, 4
      %v1328 = vpop.permute.xlu0 %1327
      %1329 = vrot.lane.b32.xlu0 %v1266, 4
      %v1330 = vpop.permute.xlu0 %1329
      %1331 = vrot.lane.b32.xlu0 %v1268, 4
      %v1332 = vpop.permute.xlu0 %1331
      %1333 = vrot.lane.b32.xlu0 %v1270, 4
      %v1334 = vpop.permute.xlu0 %1333
      %vm1367 = vcmask 1045504
      %v1368 = vrot.slane %v1108, 2
      %v1369 = vrot.slane %v1109, 2
      %v1370 = vsel %vm1367, %v1368, %v1369
      %v1371 = vrot.slane %v1110, 2
      %v1372 = vsel %vm1367, %v1369, %v1371
      %v1373 = vrot.slane %v1111, 2
      %v1374 = vsel %vm1367, %v1371, %v1373
      %v1375 = vrot.slane %v1112, 2
      %v1376 = vsel %vm1367, %v1373, %v1375
      %v1377 = vrot.slane %v1113, 2
      %v1378 = vrot.slane %v1114, 2
      %v1379 = vsel %vm1367, %v1377, %v1378
      %v1380 = vrot.slane %v1115, 2
      %v1381 = vsel %vm1367, %v1378, %v1380
      %v1382 = vrot.slane %v1116, 2
      %v1383 = vsel %vm1367, %v1380, %v1382
      %v1384 = vrot.slane %v1117, 2
      %v1385 = vsel %vm1367, %v1382, %v1384
      %v1386 = vrot.slane %v1118, 2
      %v1387 = vrot.slane %v1119, 2
      %v1388 = vsel %vm1367, %v1386, %v1387
      %v1389 = vrot.slane %v1120, 2
      %v1390 = vsel %vm1367, %v1387, %v1389
      %v1391 = vrot.slane %v1121, 2
      %v1392 = vsel %vm1367, %v1389, %v1391
      %v1393 = vrot.slane %v1122, 2
      %v1394 = vsel %vm1367, %v1391, %v1393
      %v1395 = vrot.slane %v1123, 2
      %v1396 = vrot.slane %v1124, 2
      %v1397 = vsel %vm1367, %v1395, %v1396
      %v1398 = vrot.slane %v1125, 2
      %v1399 = vsel %vm1367, %v1396, %v1398
      %v1400 = vrot.slane %v1126, 2
      %v1401 = vsel %vm1367, %v1398, %v1400
      %v1402 = vrot.slane %v1127, 2
      %v1403 = vsel %vm1367, %v1400, %v1402
      %v1404 = vrot.slane %v1128, 2
      %v1405 = vrot.slane %v1129, 2
      %v1406 = vsel %vm1367, %v1404, %v1405
      %v1407 = vrot.slane %v1130, 2
      %v1408 = vsel %vm1367, %v1405, %v1407
      %v1409 = vrot.slane %v1131, 2
      %v1410 = vsel %vm1367, %v1407, %v1409
      %v1411 = vrot.slane %v1132, 2
      %v1412 = vsel %vm1367, %v1409, %v1411
      %v1413 = vrot.slane %v1133, 2
      %v1414 = vrot.slane %v1134, 2
      %v1415 = vsel %vm1367, %v1413, %v1414
      %v1416 = vrot.slane %v1135, 2
      %v1417 = vsel %vm1367, %v1414, %v1416
      %v1418 = vrot.slane %v1136, 2
      %v1419 = vsel %vm1367, %v1416, %v1418
      %v1420 = vrot.slane %v1137, 2
      %v1421 = vsel %vm1367, %v1418, %v1420
      %v1422 = vrot.slane %v1138, 2
      %v1423 = vrot.slane %v1139, 2
      %v1424 = vsel %vm1367, %v1422, %v1423
      %v1425 = vrot.slane %v1140, 2
      %v1426 = vsel %vm1367, %v1423, %v1425
      %v1427 = vrot.slane %v1141, 2
      %v1428 = vsel %vm1367, %v1425, %v1427
      %v1429 = vrot.slane %v1142, 2
      %v1430 = vsel %vm1367, %v1427, %v1429
      %v1431 = vrot.slane %v1143, 2
      %v1432 = vrot.slane %v1144, 2
      %v1433 = vsel %vm1367, %v1431, %v1432
      %v1434 = vrot.slane %v1145, 2
      %v1435 = vsel %vm1367, %v1432, %v1434
      %v1436 = vrot.slane %v1146, 2
      %v1437 = vsel %vm1367, %v1434, %v1436
      %v1438 = vrot.slane %v1147, 2
      %v1439 = vsel %vm1367, %v1436, %v1438
      %1440 = vrot.lane.b32.xlu0 %v1370, 8
      %v1441 = vpop.permute.xlu0 %1440
      %1442 = vrot.lane.b32.xlu0 %v1372, 8
      %v1443 = vpop.permute.xlu0 %1442
      %1444 = vrot.lane.b32.xlu0 %v1374, 8
      %v1445 = vpop.permute.xlu0 %1444
      %1446 = vrot.lane.b32.xlu0 %v1376, 8
      %v1447 = vpop.permute.xlu0 %1446
      %1448 = vrot.lane.b32.xlu0 %v1379, 8
      %v1449 = vpop.permute.xlu0 %1448
      %1450 = vrot.lane.b32.xlu0 %v1381, 8
      %v1451 = vpop.permute.xlu0 %1450
      %1452 = vrot.lane.b32.xlu0 %v1383, 8
      %v1453 = vpop.permute.xlu0 %1452
      %1454 = vrot.lane.b32.xlu0 %v1385, 8
      %v1455 = vpop.permute.xlu0 %1454
      %1456 = vrot.lane.b32.xlu0 %v1388, 8
      %v1457 = vpop.permute.xlu0 %1456
      %1458 = vrot.lane.b32.xlu0 %v1390, 8
      %v1459 = vpop.permute.xlu0 %1458
      %1460 = vrot.lane.b32.xlu0 %v1392, 8
      %v1461 = vpop.permute.xlu0 %1460
      %1462 = vrot.lane.b32.xlu0 %v1394, 8
      %v1463 = vpop.permute.xlu0 %1462
      %1464 = vrot.lane.b32.xlu0 %v1397, 8
      %v1465 = vpop.permute.xlu0 %1464
      %1466 = vrot.lane.b32.xlu0 %v1399, 8
      %v1467 = vpop.permute.xlu0 %1466
      %1468 = vrot.lane.b32.xlu0 %v1401, 8
      %v1469 = vpop.permute.xlu0 %1468
      %1470 = vrot.lane.b32.xlu0 %v1403, 8
      %v1471 = vpop.permute.xlu0 %1470
      %1472 = vrot.lane.b32.xlu0 %v1406, 8
      %v1473 = vpop.permute.xlu0 %1472
      %1474 = vrot.lane.b32.xlu0 %v1408, 8
      %v1475 = vpop.permute.xlu0 %1474
      %1476 = vrot.lane.b32.xlu0 %v1410, 8
      %v1477 = vpop.permute.xlu0 %1476
      %1478 = vrot.lane.b32.xlu0 %v1412, 8
      %v1479 = vpop.permute.xlu0 %1478
      %1480 = vrot.lane.b32.xlu0 %v1415, 8
      %v1481 = vpop.permute.xlu0 %1480
      %1482 = vrot.lane.b32.xlu0 %v1417, 8
      %v1483 = vpop.permute.xlu0 %1482
      %1484 = vrot.lane.b32.xlu0 %v1419, 8
      %v1485 = vpop.permute.xlu0 %1484
      %1486 = vrot.lane.b32.xlu0 %v1421, 8
      %v1487 = vpop.permute.xlu0 %1486
      %1488 = vrot.lane.b32.xlu0 %v1424, 8
      %v1489 = vpop.permute.xlu0 %1488
      %1490 = vrot.lane.b32.xlu0 %v1426, 8
      %v1491 = vpop.permute.xlu0 %1490
      %1492 = vrot.lane.b32.xlu0 %v1428, 8
      %v1493 = vpop.permute.xlu0 %1492
      %1494 = vrot.lane.b32.xlu0 %v1430, 8
      %v1495 = vpop.permute.xlu0 %1494
      %1496 = vrot.lane.b32.xlu0 %v1433, 8
      %v1497 = vpop.permute.xlu0 %1496
      %1498 = vrot.lane.b32.xlu0 %v1435, 8
      %v1499 = vpop.permute.xlu0 %1498
      %1500 = vrot.lane.b32.xlu0 %v1437, 8
      %v1501 = vpop.permute.xlu0 %1500
      %1502 = vrot.lane.b32.xlu0 %v1439, 8
      %v1503 = vpop.permute.xlu0 %1502
      %1540 = vrot.lane.b32.xlu0 %v1113, 12
      %v1541 = vpop.permute.xlu0 %1540
      %1542 = vrot.lane.b32.xlu0 %v1114, 12
      %v1543 = vpop.permute.xlu0 %1542
      %1544 = vrot.lane.b32.xlu0 %v1115, 12
      %v1545 = vpop.permute.xlu0 %1544
      %1546 = vrot.lane.b32.xlu0 %v1116, 12
      %v1547 = vpop.permute.xlu0 %1546
      %1548 = vrot.lane.b32.xlu0 %v1118, 12
      %v1549 = vpop.permute.xlu0 %1548
      %1550 = vrot.lane.b32.xlu0 %v1119, 12
      %v1551 = vpop.permute.xlu0 %1550
      %1552 = vrot.lane.b32.xlu0 %v1120, 12
      %v1553 = vpop.permute.xlu0 %1552
      %1554 = vrot.lane.b32.xlu0 %v1121, 12
      %v1555 = vpop.permute.xlu0 %1554
      %1556 = vrot.lane.b32.xlu0 %v1123, 12
      %v1557 = vpop.permute.xlu0 %1556
      %1558 = vrot.lane.b32.xlu0 %v1124, 12
      %v1559 = vpop.permute.xlu0 %1558
      %1560 = vrot.lane.b32.xlu0 %v1125, 12
      %v1561 = vpop.permute.xlu0 %1560
      %1562 = vrot.lane.b32.xlu0 %v1126, 12
      %v1563 = vpop.permute.xlu0 %1562
      %1564 = vrot.lane.b32.xlu0 %v1128, 12
      %v1565 = vpop.permute.xlu0 %1564
      %1566 = vrot.lane.b32.xlu0 %v1129, 12
      %v1567 = vpop.permute.xlu0 %1566
      %1568 = vrot.lane.b32.xlu0 %v1130, 12
      %v1569 = vpop.permute.xlu0 %1568
      %1570 = vrot.lane.b32.xlu0 %v1131, 12
      %v1571 = vpop.permute.xlu0 %1570
      %1572 = vrot.lane.b32.xlu0 %v1133, 12
      %v1573 = vpop.permute.xlu0 %1572
      %1574 = vrot.lane.b32.xlu0 %v1134, 12
      %v1575 = vpop.permute.xlu0 %1574
      %1576 = vrot.lane.b32.xlu0 %v1135, 12
      %v1577 = vpop.permute.xlu0 %1576
      %1578 = vrot.lane.b32.xlu0 %v1136, 12
      %v1579 = vpop.permute.xlu0 %1578
      %1580 = vrot.lane.b32.xlu0 %v1138, 12
      %v1581 = vpop.permute.xlu0 %1580
      %1582 = vrot.lane.b32.xlu0 %v1139, 12
      %v1583 = vpop.permute.xlu0 %1582
      %1584 = vrot.lane.b32.xlu0 %v1140, 12
      %v1585 = vpop.permute.xlu0 %1584
      %1586 = vrot.lane.b32.xlu0 %v1141, 12
      %v1587 = vpop.permute.xlu0 %1586
      %1588 = vrot.lane.b32.xlu0 %v1143, 12
      %v1589 = vpop.permute.xlu0 %1588
      %1590 = vrot.lane.b32.xlu0 %v1144, 12
      %v1591 = vpop.permute.xlu0 %1590
      %1592 = vrot.lane.b32.xlu0 %v1145, 12
      %v1593 = vpop.permute.xlu0 %1592
      %1594 = vrot.lane.b32.xlu0 %v1146, 12
      %v1595 = vpop.permute.xlu0 %1594
      %1596 = vrot.lane.b32.xlu0 %v1148, 12
      %v1597 = vpop.permute.xlu0 %1596
      %1598 = vrot.lane.b32.xlu0 %v1149, 12
      %v1599 = vpop.permute.xlu0 %1598
      %1600 = vrot.lane.b32.xlu0 %v1150, 12
      %v1601 = vpop.permute.xlu0 %1600
      %1602 = vrot.lane.b32.xlu0 %v1151, 12
      %v1603 = vpop.permute.xlu0 %1602
      %v1637 = vrot.slane %v1148, 1
      %v1638 = vrot.slane %v1149, 1
      %v1639 = vsel %vm1198, %v1637, %v1638
      %v1640 = vrot.slane %v1150, 1
      %v1641 = vsel %vm1198, %v1638, %v1640
      %v1642 = vrot.slane %v1151, 1
      %v1643 = vsel %vm1198, %v1640, %v1642
      %v1644 = vrot.slane %v1152, 1
      %v1645 = vsel %vm1198, %v1642, %v1644
      %1646 = vrot.lane.b32.xlu0 %v1210, 16
      %v1647 = vpop.permute.xlu0 %1646
      %1648 = vrot.lane.b32.xlu0 %v1212, 16
      %v1649 = vpop.permute.xlu0 %1648
      %1650 = vrot.lane.b32.xlu0 %v1214, 16
      %v1651 = vpop.permute.xlu0 %1650
      %1652 = vrot.lane.b32.xlu0 %v1216, 16
      %v1653 = vpop.permute.xlu0 %1652
      %1654 = vrot.lane.b32.xlu0 %v1219, 16
      %v1655 = vpop.permute.xlu0 %1654
      %1656 = vrot.lane.b32.xlu0 %v1221, 16
      %v1657 = vpop.permute.xlu0 %1656
      %1658 = vrot.lane.b32.xlu0 %v1223, 16
      %v1659 = vpop.permute.xlu0 %1658
      %1660 = vrot.lane.b32.xlu0 %v1225, 16
      %v1661 = vpop.permute.xlu0 %1660
      %1662 = vrot.lane.b32.xlu0 %v1228, 16
      %v1663 = vpop.permute.xlu0 %1662
      %1664 = vrot.lane.b32.xlu0 %v1230, 16
      %v1665 = vpop.permute.xlu0 %1664
      %1666 = vrot.lane.b32.xlu0 %v1232, 16
      %v1667 = vpop.permute.xlu0 %1666
      %1668 = vrot.lane.b32.xlu0 %v1234, 16
      %v1669 = vpop.permute.xlu0 %1668
      %1670 = vrot.lane.b32.xlu0 %v1237, 16
      %v1671 = vpop.permute.xlu0 %1670
      %1672 = vrot.lane.b32.xlu0 %v1239, 16
      %v1673 = vpop.permute.xlu0 %1672
      %1674 = vrot.lane.b32.xlu0 %v1241, 16
      %v1675 = vpop.permute.xlu0 %1674
      %1676 = vrot.lane.b32.xlu0 %v1243, 16
      %v1677 = vpop.permute.xlu0 %1676
      %1678 = vrot.lane.b32.xlu0 %v1246, 16
      %v1679 = vpop.permute.xlu0 %1678
      %1680 = vrot.lane.b32.xlu0 %v1248, 16
      %v1681 = vpop.permute.xlu0 %1680
      %1682 = vrot.lane.b32.xlu0 %v1250, 16
      %v1683 = vpop.permute.xlu0 %1682
      %1684 = vrot.lane.b32.xlu0 %v1252, 16
      %v1685 = vpop.permute.xlu0 %1684
      %1686 = vrot.lane.b32.xlu0 %v1255, 16
      %v1687 = vpop.permute.xlu0 %1686
      %1688 = vrot.lane.b32.xlu0 %v1257, 16
      %v1689 = vpop.permute.xlu0 %1688
      %1690 = vrot.lane.b32.xlu0 %v1259, 16
      %v1691 = vpop.permute.xlu0 %1690
      %1692 = vrot.lane.b32.xlu0 %v1261, 16
      %v1693 = vpop.permute.xlu0 %1692
      %1694 = vrot.lane.b32.xlu0 %v1264, 16
      %v1695 = vpop.permute.xlu0 %1694
      %1696 = vrot.lane.b32.xlu0 %v1266, 16
      %v1697 = vpop.permute.xlu0 %1696
      %1698 = vrot.lane.b32.xlu0 %v1268, 16
      %v1699 = vpop.permute.xlu0 %1698
      %1700 = vrot.lane.b32.xlu0 %v1270, 16
      %v1701 = vpop.permute.xlu0 %1700
      %1702 = vrot.lane.b32.xlu0 %v1639, 16
      %v1703 = vpop.permute.xlu0 %1702
      %1704 = vrot.lane.b32.xlu0 %v1641, 16
      %v1705 = vpop.permute.xlu0 %1704
      %1706 = vrot.lane.b32.xlu0 %v1643, 16
      %v1707 = vpop.permute.xlu0 %1706
      %1708 = vrot.lane.b32.xlu0 %v1645, 16
      %v1709 = vpop.permute.xlu0 %1708
      %v1742 = vrot.slane %v1148, 2
      %v1743 = vrot.slane %v1149, 2
      %v1744 = vsel %vm1367, %v1742, %v1743
      %v1745 = vrot.slane %v1150, 2
      %v1746 = vsel %vm1367, %v1743, %v1745
      %v1747 = vrot.slane %v1151, 2
      %v1748 = vsel %vm1367, %v1745, %v1747
      %v1749 = vrot.slane %v1152, 2
      %v1750 = vsel %vm1367, %v1747, %v1749
      %1751 = vrot.lane.b32.xlu0 %v1379, 20
      %v1752 = vpop.permute.xlu0 %1751
      %1753 = vrot.lane.b32.xlu0 %v1381, 20
      %v1754 = vpop.permute.xlu0 %1753
      %1755 = vrot.lane.b32.xlu0 %v1383, 20
      %v1756 = vpop.permute.xlu0 %1755
      %1757 = vrot.lane.b32.xlu0 %v1385, 20
      %v1758 = vpop.permute.xlu0 %1757
      %1759 = vrot.lane.b32.xlu0 %v1388, 20
      %v1760 = vpop.permute.xlu0 %1759
      %1761 = vrot.lane.b32.xlu0 %v1390, 20
      %v1762 = vpop.permute.xlu0 %1761
      %1763 = vrot.lane.b32.xlu0 %v1392, 20
      %v1764 = vpop.permute.xlu0 %1763
      %1765 = vrot.lane.b32.xlu0 %v1394, 20
      %v1766 = vpop.permute.xlu0 %1765
      %1767 = vrot.lane.b32.xlu0 %v1397, 20
      %v1768 = vpop.permute.xlu0 %1767
      %1769 = vrot.lane.b32.xlu0 %v1399, 20
      %v1770 = vpop.permute.xlu0 %1769
      %1771 = vrot.lane.b32.xlu0 %v1401, 20
      %v1772 = vpop.permute.xlu0 %1771
      %1773 = vrot.lane.b32.xlu0 %v1403, 20
      %v1774 = vpop.permute.xlu0 %1773
      %1775 = vrot.lane.b32.xlu0 %v1406, 20
      %v1776 = vpop.permute.xlu0 %1775
      %1777 = vrot.lane.b32.xlu0 %v1408, 20
      %v1778 = vpop.permute.xlu0 %1777
      %1779 = vrot.lane.b32.xlu0 %v1410, 20
      %v1780 = vpop.permute.xlu0 %1779
      %1781 = vrot.lane.b32.xlu0 %v1412, 20
      %v1782 = vpop.permute.xlu0 %1781
      %1783 = vrot.lane.b32.xlu0 %v1415, 20
      %v1784 = vpop.permute.xlu0 %1783
      %1785 = vrot.lane.b32.xlu0 %v1417, 20
      %v1786 = vpop.permute.xlu0 %1785
      %1787 = vrot.lane.b32.xlu0 %v1419, 20
      %v1788 = vpop.permute.xlu0 %1787
      %1789 = vrot.lane.b32.xlu0 %v1421, 20
      %v1790 = vpop.permute.xlu0 %1789
      %1791 = vrot.lane.b32.xlu0 %v1424, 20
      %v1792 = vpop.permute.xlu0 %1791
      %1793 = vrot.lane.b32.xlu0 %v1426, 20
      %v1794 = vpop.permute.xlu0 %1793
      %1795 = vrot.lane.b32.xlu0 %v1428, 20
      %v1796 = vpop.permute.xlu0 %1795
      %1797 = vrot.lane.b32.xlu0 %v1430, 20
      %v1798 = vpop.permute.xlu0 %1797
      %1799 = vrot.lane.b32.xlu0 %v1433, 20
      %v1800 = vpop.permute.xlu0 %1799
      %1801 = vrot.lane.b32.xlu0 %v1435, 20
      %v1802 = vpop.permute.xlu0 %1801
      %1803 = vrot.lane.b32.xlu0 %v1437, 20
      %v1804 = vpop.permute.xlu0 %1803
      %1805 = vrot.lane.b32.xlu0 %v1439, 20
      %v1806 = vpop.permute.xlu0 %1805
      %1807 = vrot.lane.b32.xlu0 %v1744, 20
      %v1808 = vpop.permute.xlu0 %1807
      %1809 = vrot.lane.b32.xlu0 %v1746, 20
      %v1810 = vpop.permute.xlu0 %1809
      %1811 = vrot.lane.b32.xlu0 %v1748, 20
      %v1812 = vpop.permute.xlu0 %1811
      %1813 = vrot.lane.b32.xlu0 %v1750, 20
      %v1814 = vpop.permute.xlu0 %1813
      %1851 = vrot.lane.b32.xlu0 %v1118, 24
      %v1852 = vpop.permute.xlu0 %1851
      %1853 = vrot.lane.b32.xlu0 %v1119, 24
      %v1854 = vpop.permute.xlu0 %1853
      %1855 = vrot.lane.b32.xlu0 %v1120, 24
      %v1856 = vpop.permute.xlu0 %1855
      %1857 = vrot.lane.b32.xlu0 %v1121, 24
      %v1858 = vpop.permute.xlu0 %1857
      %1859 = vrot.lane.b32.xlu0 %v1123, 24
      %v1860 = vpop.permute.xlu0 %1859
      %1861 = vrot.lane.b32.xlu0 %v1124, 24
      %v1862 = vpop.permute.xlu0 %1861
      %1863 = vrot.lane.b32.xlu0 %v1125, 24
      %v1864 = vpop.permute.xlu0 %1863
      %1865 = vrot.lane.b32.xlu0 %v1126, 24
      %v1866 = vpop.permute.xlu0 %1865
      %1867 = vrot.lane.b32.xlu0 %v1128, 24
      %v1868 = vpop.permute.xlu0 %1867
      %1869 = vrot.lane.b32.xlu0 %v1129, 24
      %v1870 = vpop.permute.xlu0 %1869
      %1871 = vrot.lane.b32.xlu0 %v1130, 24
      %v1872 = vpop.permute.xlu0 %1871
      %1873 = vrot.lane.b32.xlu0 %v1131, 24
      %v1874 = vpop.permute.xlu0 %1873
      %1875 = vrot.lane.b32.xlu0 %v1133, 24
      %v1876 = vpop.permute.xlu0 %1875
      %1877 = vrot.lane.b32.xlu0 %v1134, 24
      %v1878 = vpop.permute.xlu0 %1877
      %1879 = vrot.lane.b32.xlu0 %v1135, 24
      %v1880 = vpop.permute.xlu0 %1879
      %1881 = vrot.lane.b32.xlu0 %v1136, 24
      %v1882 = vpop.permute.xlu0 %1881
      %1883 = vrot.lane.b32.xlu0 %v1138, 24
      %v1884 = vpop.permute.xlu0 %1883
      %1885 = vrot.lane.b32.xlu0 %v1139, 24
      %v1886 = vpop.permute.xlu0 %1885
      %1887 = vrot.lane.b32.xlu0 %v1140, 24
      %v1888 = vpop.permute.xlu0 %1887
      %1889 = vrot.lane.b32.xlu0 %v1141, 24
      %v1890 = vpop.permute.xlu0 %1889
      %1891 = vrot.lane.b32.xlu0 %v1143, 24
      %v1892 = vpop.permute.xlu0 %1891
      %1893 = vrot.lane.b32.xlu0 %v1144, 24
      %v1894 = vpop.permute.xlu0 %1893
      %1895 = vrot.lane.b32.xlu0 %v1145, 24
      %v1896 = vpop.permute.xlu0 %1895
      %1897 = vrot.lane.b32.xlu0 %v1146, 24
      %v1898 = vpop.permute.xlu0 %1897
      %1899 = vrot.lane.b32.xlu0 %v1148, 24
      %v1900 = vpop.permute.xlu0 %1899
      %1901 = vrot.lane.b32.xlu0 %v1149, 24
      %v1902 = vpop.permute.xlu0 %1901
      %1903 = vrot.lane.b32.xlu0 %v1150, 24
      %v1904 = vpop.permute.xlu0 %1903
      %1905 = vrot.lane.b32.xlu0 %v1151, 24
      %v1906 = vpop.permute.xlu0 %1905
      %1907 = vrot.lane.b32.xlu0 %v1153, 24
      %v1908 = vpop.permute.xlu0 %1907
      %1909 = vrot.lane.b32.xlu0 %v1154, 24
      %v1910 = vpop.permute.xlu0 %1909
      %1911 = vrot.lane.b32.xlu0 %v1155, 24
      %v1912 = vpop.permute.xlu0 %1911
      %1913 = vrot.lane.b32.xlu0 %v1156, 24
      %v1914 = vpop.permute.xlu0 %1913
      %v1948 = vrot.slane %v1153, 1
      %v1949 = vrot.slane %v1154, 1
      %v1950 = vsel %vm1198, %v1948, %v1949
      %v1951 = vrot.slane %v1155, 1
      %v1952 = vsel %vm1198, %v1949, %v1951
      %v1953 = vrot.slane %v1156, 1
      %v1954 = vsel %vm1198, %v1951, %v1953
      %v1955 = vrot.slane %v1157, 1
      %v1956 = vsel %vm1198, %v1953, %v1955
      %1957 = vrot.lane.b32.xlu0 %v1219, 28
      %v1958 = vpop.permute.xlu0 %1957
      %1959 = vrot.lane.b32.xlu0 %v1221, 28
      %v1960 = vpop.permute.xlu0 %1959
      %1961 = vrot.lane.b32.xlu0 %v1223, 28
      %v1962 = vpop.permute.xlu0 %1961
      %1963 = vrot.lane.b32.xlu0 %v1225, 28
      %v1964 = vpop.permute.xlu0 %1963
      %1965 = vrot.lane.b32.xlu0 %v1228, 28
      %v1966 = vpop.permute.xlu0 %1965
      %1967 = vrot.lane.b32.xlu0 %v1230, 28
      %v1968 = vpop.permute.xlu0 %1967
      %1969 = vrot.lane.b32.xlu0 %v1232, 28
      %v1970 = vpop.permute.xlu0 %1969
      %1971 = vrot.lane.b32.xlu0 %v1234, 28
      %v1972 = vpop.permute.xlu0 %1971
      %1973 = vrot.lane.b32.xlu0 %v1237, 28
      %v1974 = vpop.permute.xlu0 %1973
      %1975 = vrot.lane.b32.xlu0 %v1239, 28
      %v1976 = vpop.permute.xlu0 %1975
      %1977 = vrot.lane.b32.xlu0 %v1241, 28
      %v1978 = vpop.permute.xlu0 %1977
      %1979 = vrot.lane.b32.xlu0 %v1243, 28
      %v1980 = vpop.permute.xlu0 %1979
      %1981 = vrot.lane.b32.xlu0 %v1246, 28
      %v1982 = vpop.permute.xlu0 %1981
      %1983 = vrot.lane.b32.xlu0 %v1248, 28
      %v1984 = vpop.permute.xlu0 %1983
      %1985 = vrot.lane.b32.xlu0 %v1250, 28
      %v1986 = vpop.permute.xlu0 %1985
      %1987 = vrot.lane.b32.xlu0 %v1252, 28
      %v1988 = vpop.permute.xlu0 %1987
      %1989 = vrot.lane.b32.xlu0 %v1255, 28
      %v1990 = vpop.permute.xlu0 %1989
      %1991 = vrot.lane.b32.xlu0 %v1257, 28
      %v1992 = vpop.permute.xlu0 %1991
      %1993 = vrot.lane.b32.xlu0 %v1259, 28
      %v1994 = vpop.permute.xlu0 %1993
      %1995 = vrot.lane.b32.xlu0 %v1261, 28
      %v1996 = vpop.permute.xlu0 %1995
      %1997 = vrot.lane.b32.xlu0 %v1264, 28
      %v1998 = vpop.permute.xlu0 %1997
      %1999 = vrot.lane.b32.xlu0 %v1266, 28
      %v2000 = vpop.permute.xlu0 %1999
      %2001 = vrot.lane.b32.xlu0 %v1268, 28
      %v2002 = vpop.permute.xlu0 %2001
      %2003 = vrot.lane.b32.xlu0 %v1270, 28
      %v2004 = vpop.permute.xlu0 %2003
      %2005 = vrot.lane.b32.xlu0 %v1639, 28
      %v2006 = vpop.permute.xlu0 %2005
      %2007 = vrot.lane.b32.xlu0 %v1641, 28
      %v2008 = vpop.permute.xlu0 %2007
      %2009 = vrot.lane.b32.xlu0 %v1643, 28
      %v2010 = vpop.permute.xlu0 %2009
      %2011 = vrot.lane.b32.xlu0 %v1645, 28
      %v2012 = vpop.permute.xlu0 %2011
      %2013 = vrot.lane.b32.xlu0 %v1950, 28
      %v2014 = vpop.permute.xlu0 %2013
      %2015 = vrot.lane.b32.xlu0 %v1952, 28
      %v2016 = vpop.permute.xlu0 %2015
      %2017 = vrot.lane.b32.xlu0 %v1954, 28
      %v2018 = vpop.permute.xlu0 %2017
      %2019 = vrot.lane.b32.xlu0 %v1956, 28
      %v2020 = vpop.permute.xlu0 %2019
      %v2053 = vrot.slane %v1153, 2
      %v2054 = vrot.slane %v1154, 2
      %v2055 = vsel %vm1367, %v2053, %v2054
      %v2056 = vrot.slane %v1155, 2
      %v2057 = vsel %vm1367, %v2054, %v2056
      %v2058 = vrot.slane %v1156, 2
      %v2059 = vsel %vm1367, %v2056, %v2058
      %v2060 = vrot.slane %v1157, 2
      %v2061 = vsel %vm1367, %v2058, %v2060
      %2062 = vrot.lane.b32.xlu0 %v1388, 32
      %v2063 = vpop.permute.xlu0 %2062
      %2064 = vrot.lane.b32.xlu0 %v1390, 32
      %v2065 = vpop.permute.xlu0 %2064
      %2066 = vrot.lane.b32.xlu0 %v1392, 32
      %v2067 = vpop.permute.xlu0 %2066
      %2068 = vrot.lane.b32.xlu0 %v1394, 32
      %v2069 = vpop.permute.xlu0 %2068
      %2070 = vrot.lane.b32.xlu0 %v1397, 32
      %v2071 = vpop.permute.xlu0 %2070
      %2072 = vrot.lane.b32.xlu0 %v1399, 32
      %v2073 = vpop.permute.xlu0 %2072
      %2074 = vrot.lane.b32.xlu0 %v1401, 32
      %v2075 = vpop.permute.xlu0 %2074
      %2076 = vrot.lane.b32.xlu0 %v1403, 32
      %v2077 = vpop.permute.xlu0 %2076
      %2078 = vrot.lane.b32.xlu0 %v1406, 32
      %v2079 = vpop.permute.xlu0 %2078
      %2080 = vrot.lane.b32.xlu0 %v1408, 32
      %v2081 = vpop.permute.xlu0 %2080
      %2082 = vrot.lane.b32.xlu0 %v1410, 32
      %v2083 = vpop.permute.xlu0 %2082
      %2084 = vrot.lane.b32.xlu0 %v1412, 32
      %v2085 = vpop.permute.xlu0 %2084
      %2086 = vrot.lane.b32.xlu0 %v1415, 32
      %v2087 = vpop.permute.xlu0 %2086
      %2088 = vrot.lane.b32.xlu0 %v1417, 32
      %v2089 = vpop.permute.xlu0 %2088
      %2090 = vrot.lane.b32.xlu0 %v1419, 32
      %v2091 = vpop.permute.xlu0 %2090
      %2092 = vrot.lane.b32.xlu0 %v1421, 32
      %v2093 = vpop.permute.xlu0 %2092
      %2094 = vrot.lane.b32.xlu0 %v1424, 32
      %v2095 = vpop.permute.xlu0 %2094
      %2096 = vrot.lane.b32.xlu0 %v1426, 32
      %v2097 = vpop.permute.xlu0 %2096
      %2098 = vrot.lane.b32.xlu0 %v1428, 32
      %v2099 = vpop.permute.xlu0 %2098
      %2100 = vrot.lane.b32.xlu0 %v1430, 32
      %v2101 = vpop.permute.xlu0 %2100
      %2102 = vrot.lane.b32.xlu0 %v1433, 32
      %v2103 = vpop.permute.xlu0 %2102
      %2104 = vrot.lane.b32.xlu0 %v1435, 32
      %v2105 = vpop.permute.xlu0 %2104
      %2106 = vrot.lane.b32.xlu0 %v1437, 32
      %v2107 = vpop.permute.xlu0 %2106
      %2108 = vrot.lane.b32.xlu0 %v1439, 32
      %v2109 = vpop.permute.xlu0 %2108
      %2110 = vrot.lane.b32.xlu0 %v1744, 32
      %v2111 = vpop.permute.xlu0 %2110
      %2112 = vrot.lane.b32.xlu0 %v1746, 32
      %v2113 = vpop.permute.xlu0 %2112
      %2114 = vrot.lane.b32.xlu0 %v1748, 32
      %v2115 = vpop.permute.xlu0 %2114
      %2116 = vrot.lane.b32.xlu0 %v1750, 32
      %v2117 = vpop.permute.xlu0 %2116
      %2118 = vrot.lane.b32.xlu0 %v2055, 32
      %v2119 = vpop.permute.xlu0 %2118
      %2120 = vrot.lane.b32.xlu0 %v2057, 32
      %v2121 = vpop.permute.xlu0 %2120
      %2122 = vrot.lane.b32.xlu0 %v2059, 32
      %v2123 = vpop.permute.xlu0 %2122
      %2124 = vrot.lane.b32.xlu0 %v2061, 32
      %v2125 = vpop.permute.xlu0 %2124
      %v2158 = vsel %vm441, %v1108, %v1272
      %v2159 = vsel %vm441, %v1109, %v1274
      %v2160 = vsel %vm441, %v1110, %v1276
      %v2161 = vsel %vm441, %v1111, %v1278
      %v2162 = vsel %vm441, %v1113, %v1280
      %v2163 = vsel %vm441, %v1114, %v1282
      %v2164 = vsel %vm441, %v1115, %v1284
      %v2165 = vsel %vm441, %v1116, %v1286
      %v2166 = vsel %vm441, %v1118, %v1288
      %v2167 = vsel %vm441, %v1119, %v1290
      %v2168 = vsel %vm441, %v1120, %v1292
      %v2169 = vsel %vm441, %v1121, %v1294
      %v2170 = vsel %vm441, %v1123, %v1296
      %v2171 = vsel %vm441, %v1124, %v1298
      %v2172 = vsel %vm441, %v1125, %v1300
      %v2173 = vsel %vm441, %v1126, %v1302
      %v2174 = vsel %vm441, %v1128, %v1304
      %v2175 = vsel %vm441, %v1129, %v1306
      %v2176 = vsel %vm441, %v1130, %v1308
      %v2177 = vsel %vm441, %v1131, %v1310
      %v2178 = vsel %vm441, %v1133, %v1312
      %v2179 = vsel %vm441, %v1134, %v1314
      %v2180 = vsel %vm441, %v1135, %v1316
      %v2181 = vsel %vm441, %v1136, %v1318
      %v2182 = vsel %vm441, %v1138, %v1320
      %v2183 = vsel %vm441, %v1139, %v1322
      %v2184 = vsel %vm441, %v1140, %v1324
      %v2185 = vsel %vm441, %v1141, %v1326
      %v2186 = vsel %vm441, %v1143, %v1328
      %v2187 = vsel %vm441, %v1144, %v1330
      %v2188 = vsel %vm441, %v1145, %v1332
      %v2189 = vsel %vm441, %v1146, %v1334
      %vm2190 = vcmask 64512
      %v2191 = vsel %vm2190, %v2158, %v1441
      %v2192 = vsel %vm2190, %v2159, %v1443
      %v2193 = vsel %vm2190, %v2160, %v1445
      %v2194 = vsel %vm2190, %v2161, %v1447
      %v2195 = vsel %vm2190, %v2162, %v1449
      %v2196 = vsel %vm2190, %v2163, %v1451
      %v2197 = vsel %vm2190, %v2164, %v1453
      %v2198 = vsel %vm2190, %v2165, %v1455
      %v2199 = vsel %vm2190, %v2166, %v1457
      %v2200 = vsel %vm2190, %v2167, %v1459
      %v2201 = vsel %vm2190, %v2168, %v1461
      %v2202 = vsel %vm2190, %v2169, %v1463
      %v2203 = vsel %vm2190, %v2170, %v1465
      %v2204 = vsel %vm2190, %v2171, %v1467
      %v2205 = vsel %vm2190, %v2172, %v1469
      %v2206 = vsel %vm2190, %v2173, %v1471
      %v2207 = vsel %vm2190, %v2174, %v1473
      %v2208 = vsel %vm2190, %v2175, %v1475
      %v2209 = vsel %vm2190, %v2176, %v1477
      %v2210 = vsel %vm2190, %v2177, %v1479
      %v2211 = vsel %vm2190, %v2178, %v1481
      %v2212 = vsel %vm2190, %v2179, %v1483
      %v2213 = vsel %vm2190, %v2180, %v1485
      %v2214 = vsel %vm2190, %v2181, %v1487
      %v2215 = vsel %vm2190, %v2182, %v1489
      %v2216 = vsel %vm2190, %v2183, %v1491
      %v2217 = vsel %vm2190, %v2184, %v1493
      %v2218 = vsel %vm2190, %v2185, %v1495
      %v2219 = vsel %vm2190, %v2186, %v1497
      %v2220 = vsel %vm2190, %v2187, %v1499
      %v2221 = vsel %vm2190, %v2188, %v1501
      %v2222 = vsel %vm2190, %v2189, %v1503
      %vm2223 = vcmask 97280
      %v2224 = vsel %vm2223, %v2191, %v1541
      %v2225 = vsel %vm2223, %v2192, %v1543
      %v2226 = vsel %vm2223, %v2193, %v1545
      %v2227 = vsel %vm2223, %v2194, %v1547
      %v2228 = vsel %vm2223, %v2195, %v1549
      %v2229 = vsel %vm2223, %v2196, %v1551
      %v2230 = vsel %vm2223, %v2197, %v1553
      %v2231 = vsel %vm2223, %v2198, %v1555
      %v2232 = vsel %vm2223, %v2199, %v1557
      %v2233 = vsel %vm2223, %v2200, %v1559
      %v2234 = vsel %vm2223, %v2201, %v1561
      %v2235 = vsel %vm2223, %v2202, %v1563
      %v2236 = vsel %vm2223, %v2203, %v1565
      %v2237 = vsel %vm2223, %v2204, %v1567
      %v2238 = vsel %vm2223, %v2205, %v1569
      %v2239 = vsel %vm2223, %v2206, %v1571
      %v2240 = vsel %vm2223, %v2207, %v1573
      %v2241 = vsel %vm2223, %v2208, %v1575
      %v2242 = vsel %vm2223, %v2209, %v1577
      %v2243 = vsel %vm2223, %v2210, %v1579
      %v2244 = vsel %vm2223, %v2211, %v1581
      %v2245 = vsel %vm2223, %v2212, %v1583
      %v2246 = vsel %vm2223, %v2213, %v1585
      %v2247 = vsel %vm2223, %v2214, %v1587
      %v2248 = vsel %vm2223, %v2215, %v1589
      %v2249 = vsel %vm2223, %v2216, %v1591
      %v2250 = vsel %vm2223, %v2217, %v1593
      %v2251 = vsel %vm2223, %v2218, %v1595
      %v2252 = vsel %vm2223, %v2219, %v1597
      %v2253 = vsel %vm2223, %v2220, %v1599
      %v2254 = vsel %vm2223, %v2221, %v1601
      %v2255 = vsel %vm2223, %v2222, %v1603
      %vm2256 = vcmask 130048
      %v2257 = vsel %vm2256, %v2224, %v1647
      %v2258 = vsel %vm2256, %v2225, %v1649
      %v2259 = vsel %vm2256, %v2226, %v1651
      %v2260 = vsel %vm2256, %v2227, %v1653
      %v2261 = vsel %vm2256, %v2228, %v1655
      %v2262 = vsel %vm2256, %v2229, %v1657
      %v2263 = vsel %vm2256, %v2230, %v1659
      %v2264 = vsel %vm2256, %v2231, %v1661
      %v2265 = vsel %vm2256, %v2232, %v1663
      %v2266 = vsel %vm2256, %v2233, %v1665
      %v2267 = vsel %vm2256, %v2234, %v1667
      %v2268 = vsel %vm2256, %v2235, %v1669
      %v2269 = vsel %vm2256, %v2236, %v1671
      %v2270 = vsel %vm2256, %v2237, %v1673
      %v2271 = vsel %vm2256, %v2238, %v1675
      %v2272 = vsel %vm2256, %v2239, %v1677
      %v2273 = vsel %vm2256, %v2240, %v1679
      %v2274 = vsel %vm2256, %v2241, %v1681
      %v2275 = vsel %vm2256, %v2242, %v1683
      %v2276 = vsel %vm2256, %v2243, %v1685
      %v2277 = vsel %vm2256, %v2244, %v1687
      %v2278 = vsel %vm2256, %v2245, %v1689
      %v2279 = vsel %vm2256, %v2246, %v1691
      %v2280 = vsel %vm2256, %v2247, %v1693
      %v2281 = vsel %vm2256, %v2248, %v1695
      %v2282 = vsel %vm2256, %v2249, %v1697
      %v2283 = vsel %vm2256, %v2250, %v1699
      %v2284 = vsel %vm2256, %v2251, %v1701
      %v2285 = vsel %vm2256, %v2252, %v1703
      %v2286 = vsel %vm2256, %v2253, %v1705
      %v2287 = vsel %vm2256, %v2254, %v1707
      %v2288 = vsel %vm2256, %v2255, %v1709
      %vm2289 = vcmask 162816
      %v2290 = vsel %vm2289, %v2257, %v1752
      %v2291 = vsel %vm2289, %v2258, %v1754
      %v2292 = vsel %vm2289, %v2259, %v1756
      %v2293 = vsel %vm2289, %v2260, %v1758
      %v2294 = vsel %vm2289, %v2261, %v1760
      %v2295 = vsel %vm2289, %v2262, %v1762
      %v2296 = vsel %vm2289, %v2263, %v1764
      %v2297 = vsel %vm2289, %v2264, %v1766
      %v2298 = vsel %vm2289, %v2265, %v1768
      %v2299 = vsel %vm2289, %v2266, %v1770
      %v2300 = vsel %vm2289, %v2267, %v1772
      %v2301 = vsel %vm2289, %v2268, %v1774
      %v2302 = vsel %vm2289, %v2269, %v1776
      %v2303 = vsel %vm2289, %v2270, %v1778
      %v2304 = vsel %vm2289, %v2271, %v1780
      %v2305 = vsel %vm2289, %v2272, %v1782
      %v2306 = vsel %vm2289, %v2273, %v1784
      %v2307 = vsel %vm2289, %v2274, %v1786
      %v2308 = vsel %vm2289, %v2275, %v1788
      %v2309 = vsel %vm2289, %v2276, %v1790
      %v2310 = vsel %vm2289, %v2277, %v1792
      %v2311 = vsel %vm2289, %v2278, %v1794
      %v2312 = vsel %vm2289, %v2279, %v1796
      %v2313 = vsel %vm2289, %v2280, %v1798
      %v2314 = vsel %vm2289, %v2281, %v1800
      %v2315 = vsel %vm2289, %v2282, %v1802
      %v2316 = vsel %vm2289, %v2283, %v1804
      %v2317 = vsel %vm2289, %v2284, %v1806
      %v2318 = vsel %vm2289, %v2285, %v1808
      %v2319 = vsel %vm2289, %v2286, %v1810
      %v2320 = vsel %vm2289, %v2287, %v1812
      %v2321 = vsel %vm2289, %v2288, %v1814
      %vm2322 = vcmask 195584
      %v2323 = vsel %vm2322, %v2290, %v1852
      %v2324 = vsel %vm2322, %v2291, %v1854
      %v2325 = vsel %vm2322, %v2292, %v1856
      %v2326 = vsel %vm2322, %v2293, %v1858
      %v2327 = vsel %vm2322, %v2294, %v1860
      %v2328 = vsel %vm2322, %v2295, %v1862
      %v2329 = vsel %vm2322, %v2296, %v1864
      %v2330 = vsel %vm2322, %v2297, %v1866
      %v2331 = vsel %vm2322, %v2298, %v1868
      %v2332 = vsel %vm2322, %v2299, %v1870
      %v2333 = vsel %vm2322, %v2300, %v1872
      %v2334 = vsel %vm2322, %v2301, %v1874
      %v2335 = vsel %vm2322, %v2302, %v1876
      %v2336 = vsel %vm2322, %v2303, %v1878
      %v2337 = vsel %vm2322, %v2304, %v1880
      %v2338 = vsel %vm2322, %v2305, %v1882
      %v2339 = vsel %vm2322, %v2306, %v1884
      %v2340 = vsel %vm2322, %v2307, %v1886
      %v2341 = vsel %vm2322, %v2308, %v1888
      %v2342 = vsel %vm2322, %v2309, %v1890
      %v2343 = vsel %vm2322, %v2310, %v1892
      %v2344 = vsel %vm2322, %v2311, %v1894
      %v2345 = vsel %vm2322, %v2312, %v1896
      %v2346 = vsel %vm2322, %v2313, %v1898
      %v2347 = vsel %vm2322, %v2314, %v1900
      %v2348 = vsel %vm2322, %v2315, %v1902
      %v2349 = vsel %vm2322, %v2316, %v1904
      %v2350 = vsel %vm2322, %v2317, %v1906
      %v2351 = vsel %vm2322, %v2318, %v1908
      %v2352 = vsel %vm2322, %v2319, %v1910
      %v2353 = vsel %vm2322, %v2320, %v1912
      %v2354 = vsel %vm2322, %v2321, %v1914
      %vm2355 = vcmask 228352
      %v2356 = vsel %vm2355, %v2323, %v1958
      %v2357 = vsel %vm2355, %v2324, %v1960
      %v2358 = vsel %vm2355, %v2325, %v1962
      %v2359 = vsel %vm2355, %v2326, %v1964
      %v2360 = vsel %vm2355, %v2327, %v1966
      %v2361 = vsel %vm2355, %v2328, %v1968
      %v2362 = vsel %vm2355, %v2329, %v1970
      %v2363 = vsel %vm2355, %v2330, %v1972
      %v2364 = vsel %vm2355, %v2331, %v1974
      %v2365 = vsel %vm2355, %v2332, %v1976
      %v2366 = vsel %vm2355, %v2333, %v1978
      %v2367 = vsel %vm2355, %v2334, %v1980
      %v2368 = vsel %vm2355, %v2335, %v1982
      %v2369 = vsel %vm2355, %v2336, %v1984
      %v2370 = vsel %vm2355, %v2337, %v1986
      %v2371 = vsel %vm2355, %v2338, %v1988
      %v2372 = vsel %vm2355, %v2339, %v1990
      %v2373 = vsel %vm2355, %v2340, %v1992
      %v2374 = vsel %vm2355, %v2341, %v1994
      %v2375 = vsel %vm2355, %v2342, %v1996
      %v2376 = vsel %vm2355, %v2343, %v1998
      %v2377 = vsel %vm2355, %v2344, %v2000
      %v2378 = vsel %vm2355, %v2345, %v2002
      %v2379 = vsel %vm2355, %v2346, %v2004
      %v2380 = vsel %vm2355, %v2347, %v2006
      %v2381 = vsel %vm2355, %v2348, %v2008
      %v2382 = vsel %vm2355, %v2349, %v2010
      %v2383 = vsel %vm2355, %v2350, %v2012
      %v2384 = vsel %vm2355, %v2351, %v2014
      %v2385 = vsel %vm2355, %v2352, %v2016
      %v2386 = vsel %vm2355, %v2353, %v2018
      %v2387 = vsel %vm2355, %v2354, %v2020
      %vm2388 = vcmask 261120
      %v2389 = vsel %vm2388, %v2356, %v2063
      %v2390 = vsel %vm2388, %v2357, %v2065
      %v2391 = vsel %vm2388, %v2358, %v2067
      %v2392 = vsel %vm2388, %v2359, %v2069
      %v2393 = vsel %vm2388, %v2360, %v2071
      %v2394 = vsel %vm2388, %v2361, %v2073
      %v2395 = vsel %vm2388, %v2362, %v2075
      %v2396 = vsel %vm2388, %v2363, %v2077
      %v2397 = vsel %vm2388, %v2364, %v2079
      %v2398 = vsel %vm2388, %v2365, %v2081
      %v2399 = vsel %vm2388, %v2366, %v2083
      %v2400 = vsel %vm2388, %v2367, %v2085
      %v2401 = vsel %vm2388, %v2368, %v2087
      %v2402 = vsel %vm2388, %v2369, %v2089
      %v2403 = vsel %vm2388, %v2370, %v2091
      %v2404 = vsel %vm2388, %v2371, %v2093
      %v2405 = vsel %vm2388, %v2372, %v2095
      %v2406 = vsel %vm2388, %v2373, %v2097
      %v2407 = vsel %vm2388, %v2374, %v2099
      %v2408 = vsel %vm2388, %v2375, %v2101
      %v2409 = vsel %vm2388, %v2376, %v2103
      %v2410 = vsel %vm2388, %v2377, %v2105
      %v2411 = vsel %vm2388, %v2378, %v2107
      %v2412 = vsel %vm2388, %v2379, %v2109
      %v2413 = vsel %vm2388, %v2380, %v2111
      %v2414 = vsel %vm2388, %v2381, %v2113
      %v2415 = vsel %vm2388, %v2382, %v2115
      %v2416 = vsel %vm2388, %v2383, %v2117
      %v2417 = vsel %vm2388, %v2384, %v2119
      %v2418 = vsel %vm2388, %v2385, %v2121
      %v2419 = vsel %vm2388, %v2386, %v2123
      %v2420 = vsel %vm2388, %v2387, %v2125
      %v2421 = vpack.c.bf16 %v2390, %v2389
      %v2422 = vpack.c.bf16 %v2392, %v2391
      %v2423 = vpack.c.bf16 %v2394, %v2393
      %v2424 = vpack.c.bf16 %v2396, %v2395
      %v2425 = vpack.c.bf16 %v2398, %v2397
      %v2426 = vpack.c.bf16 %v2400, %v2399
      %v2427 = vpack.c.bf16 %v2402, %v2401
      %v2428 = vpack.c.bf16 %v2404, %v2403
      %v2429 = vpack.c.bf16 %v2406, %v2405
      %v2430 = vpack.c.bf16 %v2408, %v2407
      %v2431 = vpack.c.bf16 %v2410, %v2409
      %v2432 = vpack.c.bf16 %v2412, %v2411
      %v2433 = vpack.c.bf16 %v2414, %v2413
      %v2434 = vpack.c.bf16 %v2416, %v2415
      %v2435 = vpack.c.bf16 %v2418, %v2417
      %v2436 = vpack.c.bf16 %v2420, %v2419
      %v2437 = vld [vmem:[%s6] sm:$0xf]
      %v2438 = vld [vmem:[%s6 + $0x4] sm:$0xf]
      %v2439 = vld [vmem:[%s6 + $0x8] sm:$0xf]
      %v2440 = vld [vmem:[%s6 + $0xc] sm:$0xf]
      %v2441 = vld [vmem:[%s6 + $0x10] sm:$0x3]
      %v2447 = vunpack.c.l.b16 %v2437
      %v2448 = vunpack.c.l.b16 %v2438
      %v2449 = vunpack.c.l.b16 %v2439
      %v2450 = vunpack.c.l.b16 %v2440
      %v2451 = vunpack.c.l.b16 %v2441
      %v2452 = vpack.c.b16 %v2448, %v2447
      %v2453 = vpack.c.b16 %v2450, %v2449
      %v2454 = vpack.c.b16 %v2451, %v2451
      %vm2457 = vcmask 293888
      %v2459 = vsel %vm2457, %v2421, 0
      %v2462 = vsel %vm2457, %v2422, 0
      %v2465 = vsel %vm2457, %v2423, 0
      %v2468 = vsel %vm2457, %v2424, 0
      %v2471 = vsel %vm2457, %v2425, 0
      %v2474 = vsel %vm2457, %v2426, 0
      %v2477 = vsel %vm2457, %v2427, 0
      %v2480 = vsel %vm2457, %v2428, 0
      %v2483 = vsel %vm2457, %v2429, 0
      %v2486 = vsel %vm2457, %v2430, 0
      %v2489 = vsel %vm2457, %v2431, 0
      %v2492 = vsel %vm2457, %v2432, 0
      %v2495 = vsel %vm2457, %v2433, 0
      %v2498 = vsel %vm2457, %v2434, 0
      %v2501 = vsel %vm2457, %v2435, 0
      %v2504 = vsel %vm2457, %v2436, 0
      %v2507 = vsel %vm592, %v2454, 0
      %2509 = vmatprep.subr.bf16.mxu0 0
      %2510 = vmatpush1.bf16.msra.mxu0 0
      %2511 = vmatprep.subr.bf16.mxu0 0
      %2512 = vmatpush1.bf16.msra.mxu0 0
      %2513 = vmatprep.subr.bf16.mxu0 0
      %2514 = vmatpush1.bf16.msra.mxu0 0
      %2515 = vmatprep.subr.bf16.mxu0 0
      %2516 = vmatpush1.bf16.msra.mxu0 0
      %2517 = vmatprep.subr.bf16.mxu0 0
      %2518 = vmatpush1.bf16.msra.mxu0 0
      %2519 = vmatprep.subr.bf16.mxu0 0
      %2520 = vmatpush1.bf16.msra.mxu0 %v2507
      %2521 = vmatprep.subr.bf16.mxu0 0
      %2522 = vmatpush1.bf16.msra.mxu0 %v2453
      %2523 = vmatprep.subr.bf16.mxu0 0
      %2524 = vmatpush1.bf16.msra.mxu0 %v2452
      %2525 = vmatprep.subr.bf16.mxu0 0
      %2526 = vmatpush2.bf16.msra.mxu0 0
      %2527 = vmatprep.subr.bf16.mxu0 0
      %2528 = vmatpush2.bf16.msra.mxu0 0
      %2529 = vmatprep.subr.bf16.mxu0 0
      %2530 = vmatpush2.bf16.msra.mxu0 0
      %2531 = vmatprep.subr.bf16.mxu0 0
      %2532 = vmatpush2.bf16.msra.mxu0 0
      %2533 = vmatprep.subr.bf16.mxu0 0
      %2534 = vmatpush2.bf16.msra.mxu0 0
      %2535 = vmatprep.subr.bf16.mxu0 0
      %2536 = vmatpush2.bf16.msra.mxu0 0
      %2537 = vmatprep.subr.bf16.mxu0 0
      %2538 = vmatpush2.bf16.msra.mxu0 0
      %2539 = vmatprep.subr.bf16.mxu0 0
      %2540 = vmatpush2.bf16.msra.mxu0 0
      %2541 = vmatprep.mubr.bf16.mxu0 0
      %2542 = vmatmul.mubr.bf16.gmra.mxu0 %v2459
      %v2543 = vpop.f32.mrf.mxu0
      %v2544 = vadd.f32 0.0, %v2543
      %v2545 = vpop.f32.mrf.mxu0
      %v2546 = vpop.f32.mrf.mxu0
      %v2547 = vadd.f32 0.0, %v2546
      %v2548 = vpop.f32.mrf.mxu0
      %2549 = vmatprep.mubr.bf16.mxu0 0
      %2550 = vmatmul.mubr.bf16.gmra.mxu0 %v2462
      %v2551 = vpop.f32.mrf.mxu0
      %v2552 = vadd.f32 0.0, %v2551
      %v2553 = vpop.f32.mrf.mxu0
      %v2554 = vpop.f32.mrf.mxu0
      %v2555 = vadd.f32 0.0, %v2554
      %v2556 = vpop.f32.mrf.mxu0
      %2557 = vmatprep.mubr.bf16.mxu0 0
      %2558 = vmatmul.mubr.bf16.gmra.mxu0 %v2465
      %v2559 = vpop.f32.mrf.mxu0
      %v2560 = vadd.f32 0.0, %v2559
      %v2561 = vpop.f32.mrf.mxu0
      %v2562 = vpop.f32.mrf.mxu0
      %v2563 = vadd.f32 0.0, %v2562
      %v2564 = vpop.f32.mrf.mxu0
      %2565 = vmatprep.mubr.bf16.mxu0 0
      %2566 = vmatmul.mubr.bf16.gmra.mxu0 %v2468
      %v2567 = vpop.f32.mrf.mxu0
      %v2568 = vadd.f32 0.0, %v2567
      %v2569 = vpop.f32.mrf.mxu0
      %v2570 = vpop.f32.mrf.mxu0
      %v2571 = vadd.f32 0.0, %v2570
      %v2572 = vpop.f32.mrf.mxu0
      %2573 = vmatprep.mubr.bf16.mxu0 0
      %2574 = vmatmul.mubr.bf16.gmra.mxu0 %v2471
      %v2575 = vpop.f32.mrf.mxu0
      %v2576 = vadd.f32 0.0, %v2575
      %v2577 = vpop.f32.mrf.mxu0
      %v2578 = vpop.f32.mrf.mxu0
      %v2579 = vadd.f32 0.0, %v2578
      %v2580 = vpop.f32.mrf.mxu0
      %2581 = vmatprep.mubr.bf16.mxu0 0
      %2582 = vmatmul.mubr.bf16.gmra.mxu0 %v2474
      %v2583 = vpop.f32.mrf.mxu0
      %v2584 = vadd.f32 0.0, %v2583
      %v2585 = vpop.f32.mrf.mxu0
      %v2586 = vpop.f32.mrf.mxu0
      %v2587 = vadd.f32 0.0, %v2586
      %v2588 = vpop.f32.mrf.mxu0
      %2589 = vmatprep.mubr.bf16.mxu0 0
      %2590 = vmatmul.mubr.bf16.gmra.mxu0 %v2477
      %v2591 = vpop.f32.mrf.mxu0
      %v2592 = vadd.f32 0.0, %v2591
      %v2593 = vpop.f32.mrf.mxu0
      %v2594 = vpop.f32.mrf.mxu0
      %v2595 = vadd.f32 0.0, %v2594
      %v2596 = vpop.f32.mrf.mxu0
      %2597 = vmatprep.mubr.bf16.mxu0 0
      %2598 = vmatmul.mubr.bf16.gmra.mxu0 %v2480
      %v2599 = vpop.f32.mrf.mxu0
      %v2600 = vadd.f32 0.0, %v2599
      %v2601 = vpop.f32.mrf.mxu0
      %v2602 = vpop.f32.mrf.mxu0
      %v2603 = vadd.f32 0.0, %v2602
      %v2604 = vpop.f32.mrf.mxu0
      %2605 = vmatprep.mubr.bf16.mxu0 0
      %2606 = vmatmul.mubr.bf16.gmra.mxu0 %v2483
      %v2607 = vpop.f32.mrf.mxu0
      %v2608 = vadd.f32 0.0, %v2607
      %v2609 = vpop.f32.mrf.mxu0
      %v2610 = vpop.f32.mrf.mxu0
      %v2611 = vadd.f32 0.0, %v2610
      %v2612 = vpop.f32.mrf.mxu0
      %2613 = vmatprep.mubr.bf16.mxu0 0
      %2614 = vmatmul.mubr.bf16.gmra.mxu0 %v2486
      %v2615 = vpop.f32.mrf.mxu0
      %v2616 = vadd.f32 0.0, %v2615
      %v2617 = vpop.f32.mrf.mxu0
      %v2618 = vpop.f32.mrf.mxu0
      %v2619 = vadd.f32 0.0, %v2618
      %v2620 = vpop.f32.mrf.mxu0
      %2621 = vmatprep.mubr.bf16.mxu0 0
      %2622 = vmatmul.mubr.bf16.gmra.mxu0 %v2489
      %v2623 = vpop.f32.mrf.mxu0
      %v2624 = vadd.f32 0.0, %v2623
      %v2625 = vpop.f32.mrf.mxu0
      %v2626 = vpop.f32.mrf.mxu0
      %v2627 = vadd.f32 0.0, %v2626
      %v2628 = vpop.f32.mrf.mxu0
      %2629 = vmatprep.mubr.bf16.mxu0 0
      %2630 = vmatmul.mubr.bf16.gmra.mxu0 %v2492
      %v2631 = vpop.f32.mrf.mxu0
      %v2632 = vadd.f32 0.0, %v2631
      %v2633 = vpop.f32.mrf.mxu0
      %v2634 = vpop.f32.mrf.mxu0
      %v2635 = vadd.f32 0.0, %v2634
      %v2636 = vpop.f32.mrf.mxu0
      %2637 = vmatprep.mubr.bf16.mxu0 0
      %2638 = vmatmul.mubr.bf16.gmra.mxu0 %v2495
      %v2639 = vpop.f32.mrf.mxu0
      %v2640 = vadd.f32 0.0, %v2639
      %v2641 = vpop.f32.mrf.mxu0
      %v2642 = vpop.f32.mrf.mxu0
      %v2643 = vadd.f32 0.0, %v2642
      %v2644 = vpop.f32.mrf.mxu0
      %2645 = vmatprep.mubr.bf16.mxu0 0
      %2646 = vmatmul.mubr.bf16.gmra.mxu0 %v2498
      %v2647 = vpop.f32.mrf.mxu0
      %v2648 = vadd.f32 0.0, %v2647
      %v2649 = vpop.f32.mrf.mxu0
      %v2650 = vpop.f32.mrf.mxu0
      %v2651 = vadd.f32 0.0, %v2650
      %v2652 = vpop.f32.mrf.mxu0
      %2653 = vmatprep.mubr.bf16.mxu0 0
      %2654 = vmatmul.mubr.bf16.gmra.mxu0 %v2501
      %v2655 = vpop.f32.mrf.mxu0
      %v2656 = vadd.f32 0.0, %v2655
      %v2657 = vpop.f32.mrf.mxu0
      %v2658 = vpop.f32.mrf.mxu0
      %v2659 = vadd.f32 0.0, %v2658
      %v2660 = vpop.f32.mrf.mxu0
      %2661 = vmatprep.mubr.bf16.mxu0 0
      %2662 = vmatmul.mubr.bf16.gmra.mxu0 %v2504
      %v2663 = vpop.f32.mrf.mxu0
      %v2664 = vadd.f32 0.0, %v2663
      %v2665 = vpop.f32.mrf.mxu0
      %v2666 = vpop.f32.mrf.mxu0
      %v2667 = vadd.f32 0.0, %v2666
      %v2668 = vpop.f32.mrf.mxu0
      %2669 = vdwg.mxu0
      %v2670 = vld [vmem:[%s7] sm:$0x1]
      %v2672 = vlaneseq
      %v2673 = vshrl.u32 %v2672, 7
      %v2674 = vsub.s32 0, %v2673
      %v2675 = vrot.slane %v2670, %v2674
      %v2677 = vmul.f32 %v2544, %v2675
      %v2678 = vmul.f32 %v2547, %v2675
      %v2679 = vmul.f32 %v2552, %v2675
      %v2680 = vmul.f32 %v2555, %v2675
      %v2681 = vmul.f32 %v2560, %v2675
      %v2682 = vmul.f32 %v2563, %v2675
      %v2683 = vmul.f32 %v2568, %v2675
      %v2684 = vmul.f32 %v2571, %v2675
      %v2685 = vmul.f32 %v2576, %v2675
      %v2686 = vmul.f32 %v2579, %v2675
      %v2687 = vmul.f32 %v2584, %v2675
      %v2688 = vmul.f32 %v2587, %v2675
      %v2689 = vmul.f32 %v2592, %v2675
      %v2690 = vmul.f32 %v2595, %v2675
      %v2691 = vmul.f32 %v2600, %v2675
      %v2692 = vmul.f32 %v2603, %v2675
      %v2693 = vmul.f32 %v2608, %v2675
      %v2694 = vmul.f32 %v2611, %v2675
      %v2695 = vmul.f32 %v2616, %v2675
      %v2696 = vmul.f32 %v2619, %v2675
      %v2697 = vmul.f32 %v2624, %v2675
      %v2698 = vmul.f32 %v2627, %v2675
      %v2699 = vmul.f32 %v2632, %v2675
      %v2700 = vmul.f32 %v2635, %v2675
      %v2701 = vmul.f32 %v2640, %v2675
      %v2702 = vmul.f32 %v2643, %v2675
      %v2703 = vmul.f32 %v2648, %v2675
      %v2704 = vmul.f32 %v2651, %v2675
      %v2705 = vmul.f32 %v2656, %v2675
      %v2706 = vmul.f32 %v2659, %v2675
      %v2707 = vmul.f32 %v2664, %v2675
      %v2708 = vmul.f32 %v2667, %v2675
      %v2709 = vld [vmem:[%s8] sm:$0x1]
      %v2711 = vlaneseq
      %v2712 = vshrl.u32 %v2711, 7
      %v2713 = vsub.s32 0, %v2712
      %v2714 = vrot.slane %v2709, %v2713
      %v2716 = vadd.f32 %v2677, %v2714
      %v2717 = vadd.f32 %v2678, %v2714
      %v2718 = vadd.f32 %v2679, %v2714
      %v2719 = vadd.f32 %v2680, %v2714
      %v2720 = vadd.f32 %v2681, %v2714
      %v2721 = vadd.f32 %v2682, %v2714
      %v2722 = vadd.f32 %v2683, %v2714
      %v2723 = vadd.f32 %v2684, %v2714
      %v2724 = vadd.f32 %v2685, %v2714
      %v2725 = vadd.f32 %v2686, %v2714
      %v2726 = vadd.f32 %v2687, %v2714
      %v2727 = vadd.f32 %v2688, %v2714
      %v2728 = vadd.f32 %v2689, %v2714
      %v2729 = vadd.f32 %v2690, %v2714
      %v2730 = vadd.f32 %v2691, %v2714
      %v2731 = vadd.f32 %v2692, %v2714
      %v2732 = vadd.f32 %v2693, %v2714
      %v2733 = vadd.f32 %v2694, %v2714
      %v2734 = vadd.f32 %v2695, %v2714
      %v2735 = vadd.f32 %v2696, %v2714
      %v2736 = vadd.f32 %v2697, %v2714
      %v2737 = vadd.f32 %v2698, %v2714
      %v2738 = vadd.f32 %v2699, %v2714
      %v2739 = vadd.f32 %v2700, %v2714
      %v2740 = vadd.f32 %v2701, %v2714
      %v2741 = vadd.f32 %v2702, %v2714
      %v2742 = vadd.f32 %v2703, %v2714
      %v2743 = vadd.f32 %v2704, %v2714
      %v2744 = vadd.f32 %v2705, %v2714
      %v2745 = vadd.f32 %v2706, %v2714
      %v2746 = vadd.f32 %v2707, %v2714
      %v2747 = vadd.f32 %v2708, %v2714
      %v2748 = vmax.f32 %v2716, 0.0
      %v2749 = vmax.f32 %v2717, 0.0
      %v2750 = vmax.f32 %v2718, 0.0
      %v2751 = vmax.f32 %v2719, 0.0
      %v2752 = vmax.f32 %v2720, 0.0
      %v2753 = vmax.f32 %v2721, 0.0
      %v2754 = vmax.f32 %v2722, 0.0
      %v2755 = vmax.f32 %v2723, 0.0
      %v2756 = vmax.f32 %v2724, 0.0
      %v2757 = vmax.f32 %v2725, 0.0
      %v2758 = vmax.f32 %v2726, 0.0
      %v2759 = vmax.f32 %v2727, 0.0
      %v2760 = vmax.f32 %v2728, 0.0
      %v2761 = vmax.f32 %v2729, 0.0
      %v2762 = vmax.f32 %v2730, 0.0
      %v2763 = vmax.f32 %v2731, 0.0
      %v2764 = vmax.f32 %v2732, 0.0
      %v2765 = vmax.f32 %v2733, 0.0
      %v2766 = vmax.f32 %v2734, 0.0
      %v2767 = vmax.f32 %v2735, 0.0
      %v2768 = vmax.f32 %v2736, 0.0
      %v2769 = vmax.f32 %v2737, 0.0
      %v2770 = vmax.f32 %v2738, 0.0
      %v2771 = vmax.f32 %v2739, 0.0
      %v2772 = vmax.f32 %v2740, 0.0
      %v2773 = vmax.f32 %v2741, 0.0
      %v2774 = vmax.f32 %v2742, 0.0
      %v2775 = vmax.f32 %v2743, 0.0
      %v2776 = vmax.f32 %v2744, 0.0
      %v2777 = vmax.f32 %v2745, 0.0
      %v2778 = vmax.f32 %v2746, 0.0
      %v2779 = vmax.f32 %v2747, 0.0
      %v2780 = vpack.c.bf16 %v2749, %v2748
      %v2781 = vpack.c.bf16 %v2751, %v2750
      %v2782 = vpack.c.bf16 %v2753, %v2752
      %v2783 = vpack.c.bf16 %v2755, %v2754
      %v2784 = vpack.c.bf16 %v2757, %v2756
      %v2785 = vpack.c.bf16 %v2759, %v2758
      %v2786 = vpack.c.bf16 %v2761, %v2760
      %v2787 = vpack.c.bf16 %v2763, %v2762
      %v2788 = vpack.c.bf16 %v2765, %v2764
      %v2789 = vpack.c.bf16 %v2767, %v2766
      %v2790 = vpack.c.bf16 %v2769, %v2768
      %v2791 = vpack.c.bf16 %v2771, %v2770
      %v2792 = vpack.c.bf16 %v2773, %v2772
      %v2793 = vpack.c.bf16 %v2775, %v2774
      %v2794 = vpack.c.bf16 %v2777, %v2776
      %v2795 = vpack.c.bf16 %v2779, %v2778
      %v2796 = vld [vmem:[%s9] sm:$0x3]
      %v2798 = vsel %vm441, %v2780, 0
      %v2801 = vsel %vm441, %v2781, 0
      %v2804 = vsel %vm441, %v2782, 0
      %v2807 = vsel %vm441, %v2783, 0
      %v2810 = vsel %vm441, %v2784, 0
      %v2813 = vsel %vm441, %v2785, 0
      %v2816 = vsel %vm441, %v2786, 0
      %v2819 = vsel %vm441, %v2787, 0
      %v2822 = vsel %vm441, %v2788, 0
      %v2825 = vsel %vm441, %v2789, 0
      %v2828 = vsel %vm441, %v2790, 0
      %v2831 = vsel %vm441, %v2791, 0
      %v2834 = vsel %vm441, %v2792, 0
      %v2837 = vsel %vm441, %v2793, 0
      %v2840 = vsel %vm441, %v2794, 0
      %v2843 = vsel %vm441, %v2795, 0
      %v2846 = vsel %vm592, %v2796, 0
      %2848 = vmatprep.subr.bf16.mxu0 0
      %2849 = vmatpush1.bf16.msra.mxu0 0
      %2850 = vmatprep.subr.bf16.mxu0 0
      %2851 = vmatpush1.bf16.msra.mxu0 0
      %2852 = vmatprep.subr.bf16.mxu0 0
      %2853 = vmatpush1.bf16.msra.mxu0 0
      %2854 = vmatprep.subr.bf16.mxu0 0
      %2855 = vmatpush1.bf16.msra.mxu0 0
      %2856 = vmatprep.subr.bf16.mxu0 0
      %2857 = vmatpush1.bf16.msra.mxu0 0
      %2858 = vmatprep.subr.bf16.mxu0 0
      %2859 = vmatpush1.bf16.msra.mxu0 0
      %2860 = vmatprep.subr.bf16.mxu0 0
      %2861 = vmatpush1.bf16.msra.mxu0 0
      %2862 = vmatprep.subr.bf16.mxu0 0
      %2863 = vmatpush1.bf16.msra.mxu0 %v2846
      %2864 = vmatprep.subr.bf16.mxu0 0
      %2865 = vmatpush2.bf16.msra.mxu0 0
      %2866 = vmatprep.subr.bf16.mxu0 0
      %2867 = vmatpush2.bf16.msra.mxu0 0
      %2868 = vmatprep.subr.bf16.mxu0 0
      %2869 = vmatpush2.bf16.msra.mxu0 0
      %2870 = vmatprep.subr.bf16.mxu0 0
      %2871 = vmatpush2.bf16.msra.mxu0 0
      %2872 = vmatprep.subr.bf16.mxu0 0
      %2873 = vmatpush2.bf16.msra.mxu0 0
      %2874 = vmatprep.subr.bf16.mxu0 0
      %2875 = vmatpush2.bf16.msra.mxu0 0
      %2876 = vmatprep.subr.bf16.mxu0 0
      %2877 = vmatpush2.bf16.msra.mxu0 0
      %2878 = vmatprep.subr.bf16.mxu0 0
      %2879 = vmatpush2.bf16.msra.mxu0 0
      %2880 = vmatprep.mubr.bf16.mxu0 0
      %2881 = vmatmul.mubr.bf16.gmra.mxu0 %v2798
      %v2882 = vpop.f32.mrf.mxu0
      %v2883 = vadd.f32 0.0, %v2882
      %v2884 = vpop.f32.mrf.mxu0
      %v2885 = vpop.f32.mrf.mxu0
      %v2886 = vadd.f32 0.0, %v2885
      %v2887 = vpop.f32.mrf.mxu0
      %2888 = vmatprep.mubr.bf16.mxu0 0
      %2889 = vmatmul.mubr.bf16.gmra.mxu0 %v2801
      %v2890 = vpop.f32.mrf.mxu0
      %v2891 = vadd.f32 0.0, %v2890
      %v2892 = vpop.f32.mrf.mxu0
      %v2893 = vpop.f32.mrf.mxu0
      %v2894 = vadd.f32 0.0, %v2893
      %v2895 = vpop.f32.mrf.mxu0
      %2896 = vmatprep.mubr.bf16.mxu0 0
      %2897 = vmatmul.mubr.bf16.gmra.mxu0 %v2804
      %v2898 = vpop.f32.mrf.mxu0
      %v2899 = vadd.f32 0.0, %v2898
      %v2900 = vpop.f32.mrf.mxu0
      %v2901 = vpop.f32.mrf.mxu0
      %v2902 = vadd.f32 0.0, %v2901
      %v2903 = vpop.f32.mrf.mxu0
      %2904 = vmatprep.mubr.bf16.mxu0 0
      %2905 = vmatmul.mubr.bf16.gmra.mxu0 %v2807
      %v2906 = vpop.f32.mrf.mxu0
      %v2907 = vadd.f32 0.0, %v2906
      %v2908 = vpop.f32.mrf.mxu0
      %v2909 = vpop.f32.mrf.mxu0
      %v2910 = vadd.f32 0.0, %v2909
      %v2911 = vpop.f32.mrf.mxu0
      %2912 = vmatprep.mubr.bf16.mxu0 0
      %2913 = vmatmul.mubr.bf16.gmra.mxu0 %v2810
      %v2914 = vpop.f32.mrf.mxu0
      %v2915 = vadd.f32 0.0, %v2914
      %v2916 = vpop.f32.mrf.mxu0
      %v2917 = vpop.f32.mrf.mxu0
      %v2918 = vadd.f32 0.0, %v2917
      %v2919 = vpop.f32.mrf.mxu0
      %2920 = vmatprep.mubr.bf16.mxu0 0
      %2921 = vmatmul.mubr.bf16.gmra.mxu0 %v2813
      %v2922 = vpop.f32.mrf.mxu0
      %v2923 = vadd.f32 0.0, %v2922
      %v2924 = vpop.f32.mrf.mxu0
      %v2925 = vpop.f32.mrf.mxu0
      %v2926 = vadd.f32 0.0, %v2925
      %v2927 = vpop.f32.mrf.mxu0
      %2928 = vmatprep.mubr.bf16.mxu0 0
      %2929 = vmatmul.mubr.bf16.gmra.mxu0 %v2816
      %v2930 = vpop.f32.mrf.mxu0
      %v2931 = vadd.f32 0.0, %v2930
      %v2932 = vpop.f32.mrf.mxu0
      %v2933 = vpop.f32.mrf.mxu0
      %v2934 = vadd.f32 0.0, %v2933
      %v2935 = vpop.f32.mrf.mxu0
      %2936 = vmatprep.mubr.bf16.mxu0 0
      %2937 = vmatmul.mubr.bf16.gmra.mxu0 %v2819
      %v2938 = vpop.f32.mrf.mxu0
      %v2939 = vadd.f32 0.0, %v2938
      %v2940 = vpop.f32.mrf.mxu0
      %v2941 = vpop.f32.mrf.mxu0
      %v2942 = vadd.f32 0.0, %v2941
      %v2943 = vpop.f32.mrf.mxu0
      %2944 = vmatprep.mubr.bf16.mxu0 0
      %2945 = vmatmul.mubr.bf16.gmra.mxu0 %v2822
      %v2946 = vpop.f32.mrf.mxu0
      %v2947 = vadd.f32 0.0, %v2946
      %v2948 = vpop.f32.mrf.mxu0
      %v2949 = vpop.f32.mrf.mxu0
      %v2950 = vadd.f32 0.0, %v2949
      %v2951 = vpop.f32.mrf.mxu0
      %2952 = vmatprep.mubr.bf16.mxu0 0
      %2953 = vmatmul.mubr.bf16.gmra.mxu0 %v2825
      %v2954 = vpop.f32.mrf.mxu0
      %v2955 = vadd.f32 0.0, %v2954
      %v2956 = vpop.f32.mrf.mxu0
      %v2957 = vpop.f32.mrf.mxu0
      %v2958 = vadd.f32 0.0, %v2957
      %v2959 = vpop.f32.mrf.mxu0
      %2960 = vmatprep.mubr.bf16.mxu0 0
      %2961 = vmatmul.mubr.bf16.gmra.mxu0 %v2828
      %v2962 = vpop.f32.mrf.mxu0
      %v2963 = vadd.f32 0.0, %v2962
      %v2964 = vpop.f32.mrf.mxu0
      %v2965 = vpop.f32.mrf.mxu0
      %v2966 = vadd.f32 0.0, %v2965
      %v2967 = vpop.f32.mrf.mxu0
      %2968 = vmatprep.mubr.bf16.mxu0 0
      %2969 = vmatmul.mubr.bf16.gmra.mxu0 %v2831
      %v2970 = vpop.f32.mrf.mxu0
      %v2971 = vadd.f32 0.0, %v2970
      %v2972 = vpop.f32.mrf.mxu0
      %v2973 = vpop.f32.mrf.mxu0
      %v2974 = vadd.f32 0.0, %v2973
      %v2975 = vpop.f32.mrf.mxu0
      %2976 = vmatprep.mubr.bf16.mxu0 0
      %2977 = vmatmul.mubr.bf16.gmra.mxu0 %v2834
      %v2978 = vpop.f32.mrf.mxu0
      %v2979 = vadd.f32 0.0, %v2978
      %v2980 = vpop.f32.mrf.mxu0
      %v2981 = vpop.f32.mrf.mxu0
      %v2982 = vadd.f32 0.0, %v2981
      %v2983 = vpop.f32.mrf.mxu0
      %2984 = vmatprep.mubr.bf16.mxu0 0
      %2985 = vmatmul.mubr.bf16.gmra.mxu0 %v2837
      %v2986 = vpop.f32.mrf.mxu0
      %v2987 = vadd.f32 0.0, %v2986
      %v2988 = vpop.f32.mrf.mxu0
      %v2989 = vpop.f32.mrf.mxu0
      %v2990 = vadd.f32 0.0, %v2989
      %v2991 = vpop.f32.mrf.mxu0
      %2992 = vmatprep.mubr.bf16.mxu0 0
      %2993 = vmatmul.mubr.bf16.gmra.mxu0 %v2840
      %v2994 = vpop.f32.mrf.mxu0
      %v2995 = vadd.f32 0.0, %v2994
      %v2996 = vpop.f32.mrf.mxu0
      %v2997 = vpop.f32.mrf.mxu0
      %v2998 = vadd.f32 0.0, %v2997
      %v2999 = vpop.f32.mrf.mxu0
      %3000 = vmatprep.mubr.bf16.mxu0 0
      %3001 = vmatmul.mubr.bf16.gmra.mxu0 %v2843
      %v3002 = vpop.f32.mrf.mxu0
      %v3003 = vadd.f32 0.0, %v3002
      %v3004 = vpop.f32.mrf.mxu0
      %v3005 = vpop.f32.mrf.mxu0
      %v3006 = vadd.f32 0.0, %v3005
      %v3007 = vpop.f32.mrf.mxu0
      %3008 = vdwg.mxu0
      %v3009 = vld [vmem:[%s10] sm:$0x1]
      %v3011 = vlaneseq
      %v3012 = vshrl.u32 %v3011, 7
      %v3013 = vsub.s32 0, %v3012
      %v3014 = vrot.slane %v3009, %v3013
      %v3016 = vmul.f32 %v2883, %v3014
      %v3017 = vmul.f32 %v2886, %v3014
      %v3018 = vmul.f32 %v2891, %v3014
      %v3019 = vmul.f32 %v2894, %v3014
      %v3020 = vmul.f32 %v2899, %v3014
      %v3021 = vmul.f32 %v2902, %v3014
      %v3022 = vmul.f32 %v2907, %v3014
      %v3023 = vmul.f32 %v2910, %v3014
      %v3024 = vmul.f32 %v2915, %v3014
      %v3025 = vmul.f32 %v2918, %v3014
      %v3026 = vmul.f32 %v2923, %v3014
      %v3027 = vmul.f32 %v2926, %v3014
      %v3028 = vmul.f32 %v2931, %v3014
      %v3029 = vmul.f32 %v2934, %v3014
      %v3030 = vmul.f32 %v2939, %v3014
      %v3031 = vmul.f32 %v2942, %v3014
      %v3032 = vmul.f32 %v2947, %v3014
      %v3033 = vmul.f32 %v2950, %v3014
      %v3034 = vmul.f32 %v2955, %v3014
      %v3035 = vmul.f32 %v2958, %v3014
      %v3036 = vmul.f32 %v2963, %v3014
      %v3037 = vmul.f32 %v2966, %v3014
      %v3038 = vmul.f32 %v2971, %v3014
      %v3039 = vmul.f32 %v2974, %v3014
      %v3040 = vmul.f32 %v2979, %v3014
      %v3041 = vmul.f32 %v2982, %v3014
      %v3042 = vmul.f32 %v2987, %v3014
      %v3043 = vmul.f32 %v2990, %v3014
      %v3044 = vmul.f32 %v2995, %v3014
      %v3045 = vmul.f32 %v2998, %v3014
      %v3046 = vmul.f32 %v3003, %v3014
      %v3047 = vmul.f32 %v3006, %v3014
      %v3048 = vld [vmem:[%s11] sm:$0x1]
      %v3050 = vlaneseq
      %v3051 = vshrl.u32 %v3050, 7
      %v3052 = vsub.s32 0, %v3051
      %v3053 = vrot.slane %v3048, %v3052
      %v3055 = vadd.f32 %v3016, %v3053
      %v3056 = vadd.f32 %v3017, %v3053
      %v3057 = vadd.f32 %v3018, %v3053
      %v3058 = vadd.f32 %v3019, %v3053
      %v3059 = vadd.f32 %v3020, %v3053
      %v3060 = vadd.f32 %v3021, %v3053
      %v3061 = vadd.f32 %v3022, %v3053
      %v3062 = vadd.f32 %v3023, %v3053
      %v3063 = vadd.f32 %v3024, %v3053
      %v3064 = vadd.f32 %v3025, %v3053
      %v3065 = vadd.f32 %v3026, %v3053
      %v3066 = vadd.f32 %v3027, %v3053
      %v3067 = vadd.f32 %v3028, %v3053
      %v3068 = vadd.f32 %v3029, %v3053
      %v3069 = vadd.f32 %v3030, %v3053
      %v3070 = vadd.f32 %v3031, %v3053
      %v3071 = vadd.f32 %v3032, %v3053
      %v3072 = vadd.f32 %v3033, %v3053
      %v3073 = vadd.f32 %v3034, %v3053
      %v3074 = vadd.f32 %v3035, %v3053
      %v3075 = vadd.f32 %v3036, %v3053
      %v3076 = vadd.f32 %v3037, %v3053
      %v3077 = vadd.f32 %v3038, %v3053
      %v3078 = vadd.f32 %v3039, %v3053
      %v3079 = vadd.f32 %v3040, %v3053
      %v3080 = vadd.f32 %v3041, %v3053
      %v3081 = vadd.f32 %v3042, %v3053
      %v3082 = vadd.f32 %v3043, %v3053
      %v3083 = vadd.f32 %v3044, %v3053
      %v3084 = vadd.f32 %v3045, %v3053
      %v3085 = vadd.f32 %v3046, %v3053
      %v3086 = vadd.f32 %v3047, %v3053
      %v3087 = vld [vmem:[%s1] sm:$0x7]
      %v3088 = vld [vmem:[%s2] sm:$0x1]
      %v3090 = vlaneseq
      %v3091 = vshrl.u32 %v3090, 7
      %v3092 = vsub.s32 0, %v3091
      %v3093 = vrot.slane %v3088, %v3092
      %v3096 = vand.u32 %v3087, %v595
      %3098 = vmatprep.subr.bf16.mxu0 0
      %3099 = vmatpush1.bf16.msra.mxu0 0
      %3100 = vmatprep.subr.bf16.mxu0 0
      %3101 = vmatpush1.bf16.msra.mxu0 0
      %3102 = vmatprep.subr.bf16.mxu0 0
      %3103 = vmatpush1.bf16.msra.mxu0 0
      %3104 = vmatprep.subr.bf16.mxu0 0
      %3105 = vmatpush1.bf16.msra.mxu0 0
      %3106 = vmatprep.subr.bf16.mxu0 0
      %3107 = vmatpush1.bf16.msra.mxu0 0
      %3108 = vmatprep.subr.bf16.mxu0 0
      %3109 = vmatpush1.bf16.msra.mxu0 0
      %3110 = vmatprep.subr.bf16.mxu0 0
      %3111 = vmatpush1.bf16.msra.mxu0 0
      %3112 = vmatprep.subr.bf16.mxu0 0
      %3113 = vmatpush1.bf16.msra.mxu0 %v3096
      %3114 = vmatprep.subr.bf16.mxu0 0
      %3115 = vmatpush2.bf16.msra.mxu0 0
      %3116 = vmatprep.subr.bf16.mxu0 0
      %3117 = vmatpush2.bf16.msra.mxu0 0
      %3118 = vmatprep.subr.bf16.mxu0 0
      %3119 = vmatpush2.bf16.msra.mxu0 0
      %3120 = vmatprep.subr.bf16.mxu0 0
      %3121 = vmatpush2.bf16.msra.mxu0 0
      %3122 = vmatprep.subr.bf16.mxu0 0
      %3123 = vmatpush2.bf16.msra.mxu0 0
      %3124 = vmatprep.subr.bf16.mxu0 0
      %3125 = vmatpush2.bf16.msra.mxu0 0
      %3126 = vmatprep.subr.bf16.mxu0 0
      %3127 = vmatpush2.bf16.msra.mxu0 0
      %3128 = vmatprep.subr.bf16.mxu0 0
      %3129 = vmatpush2.bf16.msra.mxu0 0
      %3130 = vmatprep.mubr.bf16.mxu0 0
      %3131 = vmatmul.mubr.bf16.gmra.mxu0 %v545
      %v3132 = vpop.f32.mrf.mxu0
      %v3133 = vadd.f32 %v3093, %v3132
      %v3134 = vpop.f32.mrf.mxu0
      %v3135 = vpop.f32.mrf.mxu0
      %v3136 = vadd.f32 %v3093, %v3135
      %v3137 = vpop.f32.mrf.mxu0
      %3138 = vmatprep.mubr.bf16.mxu0 0
      %3139 = vmatmul.mubr.bf16.gmra.mxu0 %v548
      %v3140 = vpop.f32.mrf.mxu0
      %v3141 = vadd.f32 %v3093, %v3140
      %v3142 = vpop.f32.mrf.mxu0
      %v3143 = vpop.f32.mrf.mxu0
      %v3144 = vadd.f32 %v3093, %v3143
      %v3145 = vpop.f32.mrf.mxu0
      %3146 = vmatprep.mubr.bf16.mxu0 0
      %3147 = vmatmul.mubr.bf16.gmra.mxu0 %v551
      %v3148 = vpop.f32.mrf.mxu0
      %v3149 = vadd.f32 %v3093, %v3148
      %v3150 = vpop.f32.mrf.mxu0
      %v3151 = vpop.f32.mrf.mxu0
      %v3152 = vadd.f32 %v3093, %v3151
      %v3153 = vpop.f32.mrf.mxu0
      %3154 = vmatprep.mubr.bf16.mxu0 0
      %3155 = vmatmul.mubr.bf16.gmra.mxu0 %v554
      %v3156 = vpop.f32.mrf.mxu0
      %v3157 = vadd.f32 %v3093, %v3156
      %v3158 = vpop.f32.mrf.mxu0
      %v3159 = vpop.f32.mrf.mxu0
      %v3160 = vadd.f32 %v3093, %v3159
      %v3161 = vpop.f32.mrf.mxu0
      %3162 = vmatprep.mubr.bf16.mxu0 0
      %3163 = vmatmul.mubr.bf16.gmra.mxu0 %v557
      %v3164 = vpop.f32.mrf.mxu0
      %v3165 = vadd.f32 %v3093, %v3164
      %v3166 = vpop.f32.mrf.mxu0
      %v3167 = vpop.f32.mrf.mxu0
      %v3168 = vadd.f32 %v3093, %v3167
      %v3169 = vpop.f32.mrf.mxu0
      %3170 = vmatprep.mubr.bf16.mxu0 0
      %3171 = vmatmul.mubr.bf16.gmra.mxu0 %v560
      %v3172 = vpop.f32.mrf.mxu0
      %v3173 = vadd.f32 %v3093, %v3172
      %v3174 = vpop.f32.mrf.mxu0
      %v3175 = vpop.f32.mrf.mxu0
      %v3176 = vadd.f32 %v3093, %v3175
      %v3177 = vpop.f32.mrf.mxu0
      %3178 = vmatprep.mubr.bf16.mxu0 0
      %3179 = vmatmul.mubr.bf16.gmra.mxu0 %v563
      %v3180 = vpop.f32.mrf.mxu0
      %v3181 = vadd.f32 %v3093, %v3180
      %v3182 = vpop.f32.mrf.mxu0
      %v3183 = vpop.f32.mrf.mxu0
      %v3184 = vadd.f32 %v3093, %v3183
      %v3185 = vpop.f32.mrf.mxu0
      %3186 = vmatprep.mubr.bf16.mxu0 0
      %3187 = vmatmul.mubr.bf16.gmra.mxu0 %v566
      %v3188 = vpop.f32.mrf.mxu0
      %v3189 = vadd.f32 %v3093, %v3188
      %v3190 = vpop.f32.mrf.mxu0
      %v3191 = vpop.f32.mrf.mxu0
      %v3192 = vadd.f32 %v3093, %v3191
      %v3193 = vpop.f32.mrf.mxu0
      %3194 = vmatprep.mubr.bf16.mxu0 0
      %3195 = vmatmul.mubr.bf16.gmra.mxu0 %v569
      %v3196 = vpop.f32.mrf.mxu0
      %v3197 = vadd.f32 %v3093, %v3196
      %v3198 = vpop.f32.mrf.mxu0
      %v3199 = vpop.f32.mrf.mxu0
      %v3200 = vadd.f32 %v3093, %v3199
      %v3201 = vpop.f32.mrf.mxu0
      %3202 = vmatprep.mubr.bf16.mxu0 0
      %3203 = vmatmul.mubr.bf16.gmra.mxu0 %v572
      %v3204 = vpop.f32.mrf.mxu0
      %v3205 = vadd.f32 %v3093, %v3204
      %v3206 = vpop.f32.mrf.mxu0
      %v3207 = vpop.f32.mrf.mxu0
      %v3208 = vadd.f32 %v3093, %v3207
      %v3209 = vpop.f32.mrf.mxu0
      %3210 = vmatprep.mubr.bf16.mxu0 0
      %3211 = vmatmul.mubr.bf16.gmra.mxu0 %v575
      %v3212 = vpop.f32.mrf.mxu0
      %v3213 = vadd.f32 %v3093, %v3212
      %v3214 = vpop.f32.mrf.mxu0
      %v3215 = vpop.f32.mrf.mxu0
      %v3216 = vadd.f32 %v3093, %v3215
      %v3217 = vpop.f32.mrf.mxu0
      %3218 = vmatprep.mubr.bf16.mxu0 0
      %3219 = vmatmul.mubr.bf16.gmra.mxu0 %v578
      %v3220 = vpop.f32.mrf.mxu0
      %v3221 = vadd.f32 %v3093, %v3220
      %v3222 = vpop.f32.mrf.mxu0
      %v3223 = vpop.f32.mrf.mxu0
      %v3224 = vadd.f32 %v3093, %v3223
      %v3225 = vpop.f32.mrf.mxu0
      %3226 = vmatprep.mubr.bf16.mxu0 0
      %3227 = vmatmul.mubr.bf16.gmra.mxu0 %v581
      %v3228 = vpop.f32.mrf.mxu0
      %v3229 = vadd.f32 %v3093, %v3228
      %v3230 = vpop.f32.mrf.mxu0
      %v3231 = vpop.f32.mrf.mxu0
      %v3232 = vadd.f32 %v3093, %v3231
      %v3233 = vpop.f32.mrf.mxu0
      %3234 = vmatprep.mubr.bf16.mxu0 0
      %3235 = vmatmul.mubr.bf16.gmra.mxu0 %v584
      %v3236 = vpop.f32.mrf.mxu0
      %v3237 = vadd.f32 %v3093, %v3236
      %v3238 = vpop.f32.mrf.mxu0
      %v3239 = vpop.f32.mrf.mxu0
      %v3240 = vadd.f32 %v3093, %v3239
      %v3241 = vpop.f32.mrf.mxu0
      %3242 = vmatprep.mubr.bf16.mxu0 0
      %3243 = vmatmul.mubr.bf16.gmra.mxu0 %v587
      %v3244 = vpop.f32.mrf.mxu0
      %v3245 = vadd.f32 %v3093, %v3244
      %v3246 = vpop.f32.mrf.mxu0
      %v3247 = vpop.f32.mrf.mxu0
      %v3248 = vadd.f32 %v3093, %v3247
      %v3249 = vpop.f32.mrf.mxu0
      %3250 = vmatprep.mubr.bf16.mxu0 0
      %3251 = vmatmul.mubr.bf16.gmra.mxu0 %v590
      %v3252 = vpop.f32.mrf.mxu0
      %v3253 = vadd.f32 %v3093, %v3252
      %v3254 = vpop.f32.mrf.mxu0
      %v3255 = vpop.f32.mrf.mxu0
      %v3256 = vadd.f32 %v3093, %v3255
      %v3257 = vpop.f32.mrf.mxu0
      %3258 = vdwg.mxu0
      %v3259 = vadd.f32 %v3055, %v3133
      %v3260 = vadd.f32 %v3056, %v3136
      %v3261 = vadd.f32 %v3057, %v3141
      %v3262 = vadd.f32 %v3058, %v3144
      %v3263 = vadd.f32 %v3059, %v3149
      %v3264 = vadd.f32 %v3060, %v3152
      %v3265 = vadd.f32 %v3061, %v3157
      %v3266 = vadd.f32 %v3062, %v3160
      %v3267 = vadd.f32 %v3063, %v3165
      %v3268 = vadd.f32 %v3064, %v3168
      %v3269 = vadd.f32 %v3065, %v3173
      %v3270 = vadd.f32 %v3066, %v3176
      %v3271 = vadd.f32 %v3067, %v3181
      %v3272 = vadd.f32 %v3068, %v3184
      %v3273 = vadd.f32 %v3069, %v3189
      %v3274 = vadd.f32 %v3070, %v3192
      %v3275 = vadd.f32 %v3071, %v3197
      %v3276 = vadd.f32 %v3072, %v3200
      %v3277 = vadd.f32 %v3073, %v3205
      %v3278 = vadd.f32 %v3074, %v3208
      %v3279 = vadd.f32 %v3075, %v3213
      %v3280 = vadd.f32 %v3076, %v3216
      %v3281 = vadd.f32 %v3077, %v3221
      %v3282 = vadd.f32 %v3078, %v3224
      %v3283 = vadd.f32 %v3079, %v3229
      %v3284 = vadd.f32 %v3080, %v3232
      %v3285 = vadd.f32 %v3081, %v3237
      %v3286 = vadd.f32 %v3082, %v3240
      %v3287 = vadd.f32 %v3083, %v3245
      %v3288 = vadd.f32 %v3084, %v3248
      %v3289 = vadd.f32 %v3085, %v3253
      %v3290 = vadd.f32 %v3086, %v3256
      %v3291 = vmax.f32 %v3259, 0.0
      %v3292 = vmax.f32 %v3260, 0.0
      %v3293 = vmax.f32 %v3261, 0.0
      %v3294 = vmax.f32 %v3262, 0.0
      %v3295 = vmax.f32 %v3263, 0.0
      %v3296 = vmax.f32 %v3264, 0.0
      %v3297 = vmax.f32 %v3265, 0.0
      %v3298 = vmax.f32 %v3266, 0.0
      %v3299 = vmax.f32 %v3267, 0.0
      %v3300 = vmax.f32 %v3268, 0.0
      %v3301 = vmax.f32 %v3269, 0.0
      %v3302 = vmax.f32 %v3270, 0.0
      %v3303 = vmax.f32 %v3271, 0.0
      %v3304 = vmax.f32 %v3272, 0.0
      %v3305 = vmax.f32 %v3273, 0.0
      %v3306 = vmax.f32 %v3274, 0.0
      %v3307 = vmax.f32 %v3275, 0.0
      %v3308 = vmax.f32 %v3276, 0.0
      %v3309 = vmax.f32 %v3277, 0.0
      %v3310 = vmax.f32 %v3278, 0.0
      %v3311 = vmax.f32 %v3279, 0.0
      %v3312 = vmax.f32 %v3280, 0.0
      %v3313 = vmax.f32 %v3281, 0.0
      %v3314 = vmax.f32 %v3282, 0.0
      %v3315 = vmax.f32 %v3283, 0.0
      %v3316 = vmax.f32 %v3284, 0.0
      %v3317 = vmax.f32 %v3285, 0.0
      %v3318 = vmax.f32 %v3286, 0.0
      %v3319 = vmax.f32 %v3287, 0.0
      %v3320 = vmax.f32 %v3288, 0.0
      %v3321 = vmax.f32 %v3289, 0.0
      %v3322 = vmax.f32 %v3290, 0.0
      %3323 = vst.msk [vmem:[%s437] sm:$0xff] %vm2190, %v3291
      %3324 = vst.msk [vmem:[%s437 + $0x8] sm:$0xff] %vm2190, %v3292
      %3325 = vst.msk [vmem:[%s437 + $0x10] sm:$0xff] %vm2190, %v3293
      %3326 = vst.msk [vmem:[%s437 + $0x18] sm:$0xff] %vm2190, %v3294
      %3327 = vst.msk [vmem:[%s437 + $0x20] sm:$0xff] %vm2190, %v3295
      %3328 = vst.msk [vmem:[%s437 + $0x28] sm:$0xff] %vm2190, %v3296
      %3329 = vst.msk [vmem:[%s437 + $0x30] sm:$0xff] %vm2190, %v3297
      %3330 = vst.msk [vmem:[%s437 + $0x38] sm:$0xff] %vm2190, %v3298
      %3331 = vst.msk [vmem:[%s437 + $0x40] sm:$0xff] %vm2190, %v3299
      %3332 = vst.msk [vmem:[%s437 + $0x48] sm:$0xff] %vm2190, %v3300
      %3333 = vst.msk [vmem:[%s437 + $0x50] sm:$0xff] %vm2190, %v3301
      %3334 = vst.msk [vmem:[%s437 + $0x58] sm:$0xff] %vm2190, %v3302
      %3335 = vst.msk [vmem:[%s437 + $0x60] sm:$0xff] %vm2190, %v3303
      %3336 = vst.msk [vmem:[%s437 + $0x68] sm:$0xff] %vm2190, %v3304
      %3337 = vst.msk [vmem:[%s437 + $0x70] sm:$0xff] %vm2190, %v3305
      %3338 = vst.msk [vmem:[%s437 + $0x78] sm:$0xff] %vm2190, %v3306
      %3339 = vst.msk [vmem:[%s437 + $0x80] sm:$0xff] %vm2190, %v3307
      %3340 = vst.msk [vmem:[%s437 + $0x88] sm:$0xff] %vm2190, %v3308
      %3341 = vst.msk [vmem:[%s437 + $0x90] sm:$0xff] %vm2190, %v3309
      %3342 = vst.msk [vmem:[%s437 + $0x98] sm:$0xff] %vm2190, %v3310
      %3343 = vst.msk [vmem:[%s437 + $0xa0] sm:$0xff] %vm2190, %v3311
      %3344 = vst.msk [vmem:[%s437 + $0xa8] sm:$0xff] %vm2190, %v3312
      %3345 = vst.msk [vmem:[%s437 + $0xb0] sm:$0xff] %vm2190, %v3313
      %3346 = vst.msk [vmem:[%s437 + $0xb8] sm:$0xff] %vm2190, %v3314
      %3347 = vst.msk [vmem:[%s437 + $0xc0] sm:$0xff] %vm2190, %v3315
      %3348 = vst.msk [vmem:[%s437 + $0xc8] sm:$0xff] %vm2190, %v3316
      %3349 = vst.msk [vmem:[%s437 + $0xd0] sm:$0xff] %vm2190, %v3317
      %3350 = vst.msk [vmem:[%s437 + $0xd8] sm:$0xff] %vm2190, %v3318
      %3351 = vst.msk [vmem:[%s437 + $0xe0] sm:$0xff] %vm2190, %v3319
      %3352 = vst.msk [vmem:[%s437 + $0xe8] sm:$0xff] %vm2190, %v3320
      %3353 = vst.msk [vmem:[%s437 + $0xf0] sm:$0xff] %vm2190, %v3321
      %3354 = vst.msk [vmem:[%s437 + $0xf8] sm:$0xff] %vm2190, %v3322
      %s3355 = smul.u32 8, %s28
      %p3356 = scmp.lt.s32.totalorder %s27, 1
      %s3357 = scalar_select %p3356, %s27, 1
      %p3358 = scmp.lt.s32.totalorder %s3355, 31
      %s3359 = scalar_select %p3358, %s3355, 31
      %s3360 = smul.addr %s3359, 4
      %s3361 = smul.addr %s3357, 128
      %s3362 = sadd.s32 %s3360, %s3361
      %s3363 = smul.addr %s3362, 8
      %s3364 = scalar_lea.vmem %s12, %s3363
      // Predicated region
      $region77: #{tpu_custom_call.1} parent=67 // pred_check
        %p3365 = pneg %p312
      $region78: #{tpu_custom_call.1} parent=67 // pred_check_branch
        %3367 = sbr.rel (%p3365) target = $region80
      $region79: #{tpu_custom_call.1} parent=67 // pred_region
        %s3368 = smul.u32 8, %s28
      $region80: #{tpu_custom_call.1} parent=67 // pred_fallthru
        _
    $region68: #{tpu_custom_call.1} parent=5 // pred_fallthru
      _
    %p3369 = scmp.le.s32.totalorder 2, %s18
    // Predicated region
    $region81: #{tpu_custom_call.1} parent=5 // pred_check
      %p3370 = pneg %p3369
    $region82: #{tpu_custom_call.1} parent=5 // pred_check_branch
      %3372 = sbr.rel (%p3370) target = $region84
    $region83: #{tpu_custom_call.1} parent=5 // pred_region
      %s3373 = ssub.s32 %s18, 2
      // Predicated region
      $region85: #{tpu_custom_call.1} parent=83 // pred_check
        %p3374 = pneg %p318
      $region86: #{tpu_custom_call.1} parent=83 // pred_check_branch
        %3376 = sbr.rel (%p3374) target = $region88
      $region87: #{tpu_custom_call.1} parent=83 // pred_region
        %s3377 = smul.u32 8, %s30
        %p3378 = scmp.lt.s32.totalorder %s29, 1
        %s3379 = scalar_select %p3378, %s29, 1
        %p3380 = scmp.lt.s32.totalorder %s3377, 31
        %s3381 = scalar_select %p3380, %s3377, 31
        %s3382 = smul.addr %s3381, 4
        %s3383 = smul.addr %s3379, 128
        %s3384 = sadd.s32 %s3382, %s3383
        %s3385 = smul.addr %s3384, 8
        %s3386 = scalar_lea.vmem %s12, %s3385
      $region88: #{tpu_custom_call.1} parent=83 // pred_fallthru
        _
    $region84: #{tpu_custom_call.1} parent=5 // pred_fallthru
      _
  $region6: #{tpu_custom_call.1} parent=0 // loop_footer
    %s22 = sadd.s32 1, %s18
  $region7: #{tpu_custom_call.1} parent=0 // loop_footer_branch
    %17 = sbr.rel target = $region3
  $region8: #{tpu_custom_call.1} parent=0 // loop_exit
    _

</llo_original>
